<compile_context>
chip_gen: v7x
topology: tpu7x:2x2x1
jax: 0.10.0
libtpu: 0.0.40
codegen_flags: <defaults>
</compile_context>

<pallas_src>
import jax
import jax.numpy as jnp
from jax.experimental import pallas as pl
from jax.experimental.pallas import tpu as pltpu

CPAD = 128                  # lane-dense channel padding for conv outputs
ACT_DTYPE = jnp.bfloat16    # matmul operand dtype (f32 accumulation)


# ---------------------------------------------------------------------------
# Pallas kernels
# ---------------------------------------------------------------------------
def _conv_pool_relu_kernel(p00_ref, p01_ref, p10_ref, p11_ref,
                           w_ref, b_ref, o_ref):
    """Fused conv (im2col matmul) + 2x2 max-pool + bias + relu.

    Each p??_ref holds the im2col patches of one 2x2-window parity, so the
    elementwise max of the four matmul results IS the max-pool.  Since the
    bias is identical across the window, it is added after the max.
    """
    w = w_ref[...]

    def mm(p_ref):
        return jnp.dot(p_ref[...], w, preferred_element_type=jnp.float32)

    m = jnp.maximum(jnp.maximum(mm(p00_ref), mm(p01_ref)),
                    jnp.maximum(mm(p10_ref), mm(p11_ref)))
    o_ref[...] = jnp.maximum(m + b_ref[...], 0.0).astype(o_ref.dtype)


def _tail_kernel(x_ref, w1_ref, b1_ref, w2_ref, b2_ref, w3_ref, b3_ref, o_ref):
    """Fused conv3(+relu, folded into w1) -> L1 -> fc -> log_softmax."""
    h = jnp.dot(x_ref[...], w1_ref[...], preferred_element_type=jnp.float32)
    h = jnp.maximum(h + b1_ref[...], 0.0)                         # conv3 + relu
    h = jnp.dot(h.astype(w2_ref.dtype), w2_ref[...],
                preferred_element_type=jnp.float32) + b2_ref[...]  # L1
    # Dropout2d(p=0.5) is an eval-mode identity.
    h = jnp.dot(h.astype(w3_ref.dtype), w3_ref[...],
                preferred_element_type=jnp.float32) + b3_ref[...]  # fc
    m = jnp.max(h, axis=-1, keepdims=True)                         # log_softmax
    s = h - m
    lse = jnp.log(jnp.sum(jnp.exp(s), axis=-1, keepdims=True))
    o_ref[...] = (s - lse).astype(o_ref.dtype)


# ---------------------------------------------------------------------------
# Tiling helper + Pallas wrappers
# ---------------------------------------------------------------------------
def _pick_batch_tile(n_images, rows_per_image, target_rows):
    """Largest image-count tb dividing n with tb*rows_per_image <= target and
    a legal row-tile (multiple of 8, or the full extent)."""
    cap = max(1, target_rows // rows_per_image)
    for tb in range(min(n_images, cap), 0, -1):
        if n_images % tb == 0 and ((tb * rows_per_image) % 8 == 0
                                   or tb == n_images):
            return tb
    return n_images


def conv_pool_relu(patches, w_mat, b_row, rows_per_image, n_images,
                   *, target_rows):
    """patches: 4 parity im2col matrices (rows, Kp) bf16 -> (rows, CPAD) bf16."""
    rows, kp = patches[0].shape
    cpad = w_mat.shape[1]
    tb = _pick_batch_tile(n_images, rows_per_image, target_rows)
    tm = tb * rows_per_image
    patch_spec = pl.BlockSpec((tm, kp), lambda i: (i, 0))
    return pl.pallas_call(
        _conv_pool_relu_kernel,
        out_shape=jax.ShapeDtypeStruct((rows, cpad), ACT_DTYPE),
        grid=(rows // tm,),
        in_specs=[patch_spec] * 4 + [
            pl.BlockSpec((kp, cpad), lambda i: (0, 0)),
            pl.BlockSpec((1, cpad), lambda i: (0, 0)),
        ],
        out_specs=pl.BlockSpec((tm, cpad), lambda i: (i, 0)),
        compiler_params=pltpu.CompilerParams(
            dimension_semantics=("parallel",)),
    )(*patches, w_mat, b_row)


def fused_tail(x2d, w1, b1, w2, b2, w3, b3, *, target_rows=1024):
    n, kin = x2d.shape
    nout = w3.shape[1]
    tm = _pick_batch_tile(n, 1, target_rows)
    return pl.pallas_call(
        _tail_kernel,
        out_shape=jax.ShapeDtypeStruct((n, nout), jnp.float32),
        grid=(n // tm,),
        in_specs=[
            pl.BlockSpec((tm, kin), lambda i: (i, 0)),
            pl.BlockSpec(w1.shape, lambda i: (0, 0)),
            pl.BlockSpec(b1.shape, lambda i: (0, 0)),
            pl.BlockSpec(w2.shape, lambda i: (0, 0)),
            pl.BlockSpec(b2.shape, lambda i: (0, 0)),
            pl.BlockSpec(w3.shape, lambda i: (0, 0)),
            pl.BlockSpec(b3.shape, lambda i: (0, 0)),
        ],
        out_specs=pl.BlockSpec((tm, nout), lambda i: (i, 0)),
        compiler_params=pltpu.CompilerParams(
            dimension_semantics=("parallel",)),
    )(x2d, w1, b1, w2, b2, w3, b3)


# ---------------------------------------------------------------------------
# JAX glue: parity-split im2col (bf16, K padded) and one-time weight prep
# ---------------------------------------------------------------------------
def pooled_im2col(x_nhwc, k, k_pad):
    """im2col patches for conv(k, valid) followed by 2x2 max-pool, split by
    2x2-window parity.  Returns 4 matrices (N*Hp*Wp, k_pad) in bf16 with row
    order (n, pooled_h, pooled_w) and channel order (di, dj, cin)."""
    n, h, w, c = x_nhwc.shape
    hp, wp = (h - k + 1) // 2, (w - k + 1) // 2
    mats = []
    for p in (0, 1):
        for q in (0, 1):
            cols = [x_nhwc[:, p + di: p + di + 2 * hp: 2,
                            q + dj: q + dj + 2 * wp: 2, :]
                    for di in range(k) for dj in range(k)]
            m = jnp.concatenate(cols, axis=-1).reshape(n * hp * wp, k * k * c)
            m = jnp.pad(m, ((0, 0), (0, k_pad - k * k * c)))
            mats.append(m.astype(ACT_DTYPE))
    return mats, (hp, wp)


def prepare_params(params):
    """One-time conversion into kernel-ready form: padded (K_pad, 128) conv
    matmul weights, conv3 + NCHW-flatten folded into a (2048, 360) matrix,
    bf16 matmul operands, f32 biases."""
    def conv_mat(w_oihw, k_pad):
        cout, cin, kh, kw = w_oihw.shape
        m = jnp.transpose(w_oihw, (2, 3, 1, 0)).reshape(kh * kw * cin, cout)
        m = jnp.pad(m, ((0, k_pad - kh * kw * cin), (0, CPAD - cout)))
        return m.astype(ACT_DTYPE)

    def pad_bias(b):
        return jnp.pad(b, (0, CPAD - b.shape[0])).reshape(1, CPAD).astype(jnp.float32)

    # conv3 + NHWC->NCHW flatten folded into one matrix:
    #   input index  = h2*4*CPAD + w2*CPAD + ci   (pooled2 stored NHWC, 128 lanes)
    #   output index = co*9 + ho*3 + wo           (PyTorch x.view(N, -1) order)
    wc3 = params["conv3_w"]                                   # (40, 20, 2, 2)
    w_eff = jnp.zeros((4, 4, CPAD, 40, 3, 3), jnp.float32)
    for di in range(2):
        for dj in range(2):
            for ho in range(3):
                for wo in range(3):
                    w_eff = w_eff.at[ho + di, wo + dj, :20, :, ho, wo].set(
                        jnp.transpose(wc3[:, :, di, dj]))      # (cin, cout)
    w_c3 = w_eff.reshape(4 * 4 * CPAD, 40 * 9).astype(ACT_DTYPE)   # (2048, 360)
    b_c3 = jnp.repeat(params["conv3_b"], 9).reshape(1, 360).astype(jnp.float32)

    return {
        "w1": conv_mat(params["conv1_w"], 32),    # (32, 128)
        "b1": pad_bias(params["conv1_b"]),
        "w2": conv_mat(params["conv2_w"], 256),   # (256, 128)
        "b2": pad_bias(params["conv2_b"]),
        "w3": w_c3,                               # (2048, 360)
        "b3": b_c3,
        "wL1": params["L1_w"].astype(ACT_DTYPE),                  # (360, 180)
        "bL1": params["L1_b"].reshape(1, -1).astype(jnp.float32),
        "wfc": params["fc_w"].astype(ACT_DTYPE),                  # (180, 10)
        "bfc": params["fc_b"].reshape(1, -1).astype(jnp.float32),
    }


# ---------------------------------------------------------------------------
# Full forward pass (matches PyTorch Net.forward, eval mode)
# ---------------------------------------------------------------------------
def net_forward(x_nchw, prep):
    n = x_nchw.shape[0]
    assert tuple(x_nchw.shape[1:]) == (1, 28, 28), x_nchw.shape
    x = x_nchw.reshape(n, 28, 28, 1).astype(ACT_DTYPE)  # Cin==1: NCHW == NHWC

    # conv1 + maxpool2x2 + relu (one fused kernel)
    p1, (h1, w1) = pooled_im2col(x, 5, 32)                       # 4 x (N*144, 32)
    a1 = conv_pool_relu(p1, prep["w1"], prep["b1"], h1 * w1, n,
                        target_rows=4096)                        # (N*144, 128)

    # conv2 + maxpool2x2 + relu (one fused kernel)
    a1 = a1.reshape(n, h1, w1, CPAD)[..., :10]                   # real channels
    p2, (h2, w2) = pooled_im2col(a1, 5, 256)                     # 4 x (N*16, 256)
    a2 = conv_pool_relu(p2, prep["w2"], prep["b2"], h2 * w2, n,
                        target_rows=2048)                        # (N*16, 128)

    # conv3 + relu + NCHW flatten + L1 + dropout(eval id) + fc + log_softmax
    # (conv3 and the flatten permutation live in prep["w3"]; the zero-padded
    #  channels of a2 hit zero rows of that matrix.)
    x2d = a2.reshape(n, h2 * w2 * CPAD)                          # (N, 2048)
    return fused_tail(x2d, prep["w3"], prep["b3"],
                      prep["wL1"], prep["bL1"], prep["wfc"], prep["bfc"])


def init_params(key):
    ks = jax.random.split(key, 10)

    def w(k, shape, fan_in):
        return jax.random.normal(k, shape, jnp.float32) / jnp.sqrt(fan_in)

    return {
        "conv1_w": w(ks[0], (10, 1, 5, 5), 1 * 5 * 5),
        "conv1_b": w(ks[1], (10,), 25),
        "conv2_w": w(ks[2], (20, 10, 5, 5), 10 * 5 * 5),
        "conv2_b": w(ks[3], (20,), 250),
        "conv3_w": w(ks[4], (40, 20, 2, 2), 20 * 2 * 2),
        "conv3_b": w(ks[5], (40,), 80),
        # stored transposed relative to nn.Linear: (in, out)
        "L1_w": w(ks[6], (360, 180), 360),
        "L1_b": w(ks[7], (180,), 360),
        "fc_w": w(ks[8], (180, 10), 180),
        "fc_b": w(ks[9], (10,), 180),
    }


if __name__ == "__main__":
    key = jax.random.PRNGKey(0)
    pkey, xkey = jax.random.split(key)
    params = init_params(pkey)
    prep = prepare_params(params)

    # forward requires 28x28 input so that the flattened size is 360
    x = jax.random.normal(xkey, (2, 1, 28, 28), jnp.float32)

    fwd = jax.jit(net_forward)
    out = jax.block_until_ready(fwd(x, prep))
    assert out.shape == (2, 10), out.shape
    # sanity: log_softmax rows sum to 1 in prob space
    assert jnp.allclose(jnp.sum(jnp.exp(out), axis=-1), 1.0, atol=1e-3)
    print("KERNEL_OK")
</pallas_src>

<mosaic_0001>
module attributes {stable_mosaic.version = 11 : i64} {
  func.func @_conv_pool_relu_kernel(%arg0: i32, %arg1: memref<288x32xbf16, #tpu.memory_space<vmem>>, %arg2: memref<288x32xbf16, #tpu.memory_space<vmem>>, %arg3: memref<288x32xbf16, #tpu.memory_space<vmem>>, %arg4: memref<288x32xbf16, #tpu.memory_space<vmem>>, %arg5: memref<32x128xbf16, #tpu.memory_space<vmem>>, %arg6: memref<1x128xf32, #tpu.memory_space<vmem>>, %arg7: memref<288x128xbf16, #tpu.memory_space<vmem>>) attributes {dimension_semantics = [#tpu.dimension_semantics<parallel>], iteration_bounds = array<i64: 1>, scalar_prefetch = 0 : i64, scratch_operands = 0 : i64, tpu.core_type = #tpu.core_type<tc>, window_params = [{transform_indices = @transform_0, window_bounds = array<i64: 288, 32>}, {transform_indices = @transform_1, window_bounds = array<i64: 288, 32>}, {transform_indices = @transform_2, window_bounds = array<i64: 288, 32>}, {transform_indices = @transform_3, window_bounds = array<i64: 288, 32>}, {pipeline_mode = #tpu.pipeline_mode<synchronous>, transform_indices = @transform_4, window_bounds = array<i64: 32, 128>}, {pipeline_mode = #tpu.pipeline_mode<synchronous>, transform_indices = @transform_5, window_bounds = array<i64: 1, 128>}, {transform_indices = @transform_6, window_bounds = array<i64: 288, 128>}]} {
    %c0 = arith.constant 0 : index
    %c0_0 = arith.constant 0 : index
    %0 = vector.load %arg5[%c0, %c0_0] : memref<32x128xbf16, #tpu.memory_space<vmem>>, vector<32x128xbf16>
    %c0_1 = arith.constant 0 : index
    %c0_2 = arith.constant 0 : index
    %1 = vector.load %arg1[%c0_1, %c0_2] : memref<288x32xbf16, #tpu.memory_space<vmem>>, vector<288x32xbf16>
    %cst = arith.constant dense<0.000000e+00> : vector<288x128xf32>
    %2 = tpu.matmul %1, %0, %cst {dimension_numbers = #tpu.dot_dimension_numbers<[1], [0], [0], [1], [0, 0, 1, 1], [], []>} : vector<288x32xbf16>, vector<32x128xbf16>, vector<288x128xf32> -> vector<288x128xf32>
    %c0_3 = arith.constant 0 : index
    %c0_4 = arith.constant 0 : index
    %3 = vector.load %arg2[%c0_3, %c0_4] : memref<288x32xbf16, #tpu.memory_space<vmem>>, vector<288x32xbf16>
    %cst_5 = arith.constant dense<0.000000e+00> : vector<288x128xf32>
    %4 = tpu.matmul %3, %0, %cst_5 {dimension_numbers = #tpu.dot_dimension_numbers<[1], [0], [0], [1], [0, 0, 1, 1], [], []>} : vector<288x32xbf16>, vector<32x128xbf16>, vector<288x128xf32> -> vector<288x128xf32>
    %5 = arith.maximumf %2, %4 : vector<288x128xf32>
    %c0_6 = arith.constant 0 : index
    %c0_7 = arith.constant 0 : index
    %6 = vector.load %arg3[%c0_6, %c0_7] : memref<288x32xbf16, #tpu.memory_space<vmem>>, vector<288x32xbf16>
    %cst_8 = arith.constant dense<0.000000e+00> : vector<288x128xf32>
    %7 = tpu.matmul %6, %0, %cst_8 {dimension_numbers = #tpu.dot_dimension_numbers<[1], [0], [0], [1], [0, 0, 1, 1], [], []>} : vector<288x32xbf16>, vector<32x128xbf16>, vector<288x128xf32> -> vector<288x128xf32>
    %c0_9 = arith.constant 0 : index
    %c0_10 = arith.constant 0 : index
    %8 = vector.load %arg4[%c0_9, %c0_10] : memref<288x32xbf16, #tpu.memory_space<vmem>>, vector<288x32xbf16>
    %cst_11 = arith.constant dense<0.000000e+00> : vector<288x128xf32>
    %9 = tpu.matmul %8, %0, %cst_11 {dimension_numbers = #tpu.dot_dimension_numbers<[1], [0], [0], [1], [0, 0, 1, 1], [], []>} : vector<288x32xbf16>, vector<32x128xbf16>, vector<288x128xf32> -> vector<288x128xf32>
    %10 = arith.maximumf %7, %9 : vector<288x128xf32>
    %11 = arith.maximumf %5, %10 : vector<288x128xf32>
    %c0_12 = arith.constant 0 : index
    %c0_13 = arith.constant 0 : index
    %12 = vector.load %arg6[%c0_12, %c0_13] : memref<1x128xf32, #tpu.memory_space<vmem>>, vector<1x128xf32>
    %13 = vector.broadcast %12 : vector<1x128xf32> to vector<288x128xf32>
    %14 = arith.addf %11, %13 : vector<288x128xf32>
    %cst_14 = arith.constant 0.000000e+00 : f32
    %15 = vector.broadcast %cst_14 : f32 to vector<288x128xf32>
    %16 = arith.maximumf %14, %15 : vector<288x128xf32>
    %17 = arith.truncf %16 : vector<288x128xf32> to vector<288x128xbf16>
    %c0_15 = arith.constant 0 : index
    %c0_16 = arith.constant 0 : index
    %18 = vector.load %arg7[%c0_15, %c0_16] : memref<288x128xbf16, #tpu.memory_space<vmem>>, vector<288x128xbf16>
    tpu.vector_store %arg7[%c0_15, %c0_16], %17 {strides = array<i32>} : memref<288x128xbf16, #tpu.memory_space<vmem>>, vector<288x128xbf16>,
    return
  }
  func.func @transform_0(%arg0: i32) -> (i32, i32) {
    %c0_i32 = arith.constant 0 : i32
    %c0_i32_0 = arith.constant 0 : i32
    return %arg0, %c0_i32 : i32, i32
  }
  func.func @transform_1(%arg0: i32) -> (i32, i32) {
    %c0_i32 = arith.constant 0 : i32
    %c0_i32_0 = arith.constant 0 : i32
    return %arg0, %c0_i32 : i32, i32
  }
  func.func @transform_2(%arg0: i32) -> (i32, i32) {
    %c0_i32 = arith.constant 0 : i32
    %c0_i32_0 = arith.constant 0 : i32
    return %arg0, %c0_i32 : i32, i32
  }
  func.func @transform_3(%arg0: i32) -> (i32, i32) {
    %c0_i32 = arith.constant 0 : i32
    %c0_i32_0 = arith.constant 0 : i32
    return %arg0, %c0_i32 : i32, i32
  }
  func.func @transform_4(%arg0: i32) -> (i32, i32) {
    %c0_i32 = arith.constant 0 : i32
    %c0_i32_0 = arith.constant 0 : i32
    %c0_i32_1 = arith.constant 0 : i32
    return %c0_i32, %c0_i32_0 : i32, i32
  }
  func.func @transform_5(%arg0: i32) -> (i32, i32) {
    %c0_i32 = arith.constant 0 : i32
    %c0_i32_0 = arith.constant 0 : i32
    %c0_i32_1 = arith.constant 0 : i32
    return %c0_i32, %c0_i32_0 : i32, i32
  }
  func.func @transform_6(%arg0: i32) -> (i32, i32) {
    %c0_i32 = arith.constant 0 : i32
    %c0_i32_0 = arith.constant 0 : i32
    return %arg0, %c0_i32 : i32, i32
  }
}

module attributes {stable_mosaic.version = 11 : i64} {
  func.func @_conv_pool_relu_kernel(%arg0: i32, %arg1: memref<32x256xbf16, #tpu.memory_space<vmem>>, %arg2: memref<32x256xbf16, #tpu.memory_space<vmem>>, %arg3: memref<32x256xbf16, #tpu.memory_space<vmem>>, %arg4: memref<32x256xbf16, #tpu.memory_space<vmem>>, %arg5: memref<256x128xbf16, #tpu.memory_space<vmem>>, %arg6: memref<1x128xf32, #tpu.memory_space<vmem>>, %arg7: memref<32x128xbf16, #tpu.memory_space<vmem>>) attributes {dimension_semantics = [#tpu.dimension_semantics<parallel>], iteration_bounds = array<i64: 1>, scalar_prefetch = 0 : i64, scratch_operands = 0 : i64, tpu.core_type = #tpu.core_type<tc>, window_params = [{transform_indices = @transform_0, window_bounds = array<i64: 32, 256>}, {transform_indices = @transform_1, window_bounds = array<i64: 32, 256>}, {transform_indices = @transform_2, window_bounds = array<i64: 32, 256>}, {transform_indices = @transform_3, window_bounds = array<i64: 32, 256>}, {pipeline_mode = #tpu.pipeline_mode<synchronous>, transform_indices = @transform_4, window_bounds = array<i64: 256, 128>}, {pipeline_mode = #tpu.pipeline_mode<synchronous>, transform_indices = @transform_5, window_bounds = array<i64: 1, 128>}, {transform_indices = @transform_6, window_bounds = array<i64: 32, 128>}]} {
    %c0 = arith.constant 0 : index
    %c0_0 = arith.constant 0 : index
    %0 = vector.load %arg5[%c0, %c0_0] : memref<256x128xbf16, #tpu.memory_space<vmem>>, vector<256x128xbf16>
    %c0_1 = arith.constant 0 : index
    %c0_2 = arith.constant 0 : index
    %1 = vector.load %arg1[%c0_1, %c0_2] : memref<32x256xbf16, #tpu.memory_space<vmem>>, vector<32x256xbf16>
    %cst = arith.constant dense<0.000000e+00> : vector<32x128xf32>
    %2 = tpu.matmul %1, %0, %cst {dimension_numbers = #tpu.dot_dimension_numbers<[1], [0], [0], [1], [0, 0, 1, 1], [], []>} : vector<32x256xbf16>, vector<256x128xbf16>, vector<32x128xf32> -> vector<32x128xf32>
    %c0_3 = arith.constant 0 : index
    %c0_4 = arith.constant 0 : index
    %3 = vector.load %arg2[%c0_3, %c0_4] : memref<32x256xbf16, #tpu.memory_space<vmem>>, vector<32x256xbf16>
    %cst_5 = arith.constant dense<0.000000e+00> : vector<32x128xf32>
    %4 = tpu.matmul %3, %0, %cst_5 {dimension_numbers = #tpu.dot_dimension_numbers<[1], [0], [0], [1], [0, 0, 1, 1], [], []>} : vector<32x256xbf16>, vector<256x128xbf16>, vector<32x128xf32> -> vector<32x128xf32>
    %5 = arith.maximumf %2, %4 : vector<32x128xf32>
    %c0_6 = arith.constant 0 : index
    %c0_7 = arith.constant 0 : index
    %6 = vector.load %arg3[%c0_6, %c0_7] : memref<32x256xbf16, #tpu.memory_space<vmem>>, vector<32x256xbf16>
    %cst_8 = arith.constant dense<0.000000e+00> : vector<32x128xf32>
    %7 = tpu.matmul %6, %0, %cst_8 {dimension_numbers = #tpu.dot_dimension_numbers<[1], [0], [0], [1], [0, 0, 1, 1], [], []>} : vector<32x256xbf16>, vector<256x128xbf16>, vector<32x128xf32> -> vector<32x128xf32>
    %c0_9 = arith.constant 0 : index
    %c0_10 = arith.constant 0 : index
    %8 = vector.load %arg4[%c0_9, %c0_10] : memref<32x256xbf16, #tpu.memory_space<vmem>>, vector<32x256xbf16>
    %cst_11 = arith.constant dense<0.000000e+00> : vector<32x128xf32>
    %9 = tpu.matmul %8, %0, %cst_11 {dimension_numbers = #tpu.dot_dimension_numbers<[1], [0], [0], [1], [0, 0, 1, 1], [], []>} : vector<32x256xbf16>, vector<256x128xbf16>, vector<32x128xf32> -> vector<32x128xf32>
    %10 = arith.maximumf %7, %9 : vector<32x128xf32>
    %11 = arith.maximumf %5, %10 : vector<32x128xf32>
    %c0_12 = arith.constant 0 : index
    %c0_13 = arith.constant 0 : index
    %12 = vector.load %arg6[%c0_12, %c0_13] : memref<1x128xf32, #tpu.memory_space<vmem>>, vector<1x128xf32>
    %13 = vector.broadcast %12 : vector<1x128xf32> to vector<32x128xf32>
    %14 = arith.addf %11, %13 : vector<32x128xf32>
    %cst_14 = arith.constant 0.000000e+00 : f32
    %15 = vector.broadcast %cst_14 : f32 to vector<32x128xf32>
    %16 = arith.maximumf %14, %15 : vector<32x128xf32>
    %17 = arith.truncf %16 : vector<32x128xf32> to vector<32x128xbf16>
    %c0_15 = arith.constant 0 : index
    %c0_16 = arith.constant 0 : index
    %18 = vector.load %arg7[%c0_15, %c0_16] : memref<32x128xbf16, #tpu.memory_space<vmem>>, vector<32x128xbf16>
    tpu.vector_store %arg7[%c0_15, %c0_16], %17 {strides = array<i32>} : memref<32x128xbf16, #tpu.memory_space<vmem>>, vector<32x128xbf16>,
    return
  }
  func.func @transform_0(%arg0: i32) -> (i32, i32) {
    %c0_i32 = arith.constant 0 : i32
    %c0_i32_0 = arith.constant 0 : i32
    return %arg0, %c0_i32 : i32, i32
  }
  func.func @transform_1(%arg0: i32) -> (i32, i32) {
    %c0_i32 = arith.constant 0 : i32
    %c0_i32_0 = arith.constant 0 : i32
    return %arg0, %c0_i32 : i32, i32
  }
  func.func @transform_2(%arg0: i32) -> (i32, i32) {
    %c0_i32 = arith.constant 0 : i32
    %c0_i32_0 = arith.constant 0 : i32
    return %arg0, %c0_i32 : i32, i32
  }
  func.func @transform_3(%arg0: i32) -> (i32, i32) {
    %c0_i32 = arith.constant 0 : i32
    %c0_i32_0 = arith.constant 0 : i32
    return %arg0, %c0_i32 : i32, i32
  }
  func.func @transform_4(%arg0: i32) -> (i32, i32) {
    %c0_i32 = arith.constant 0 : i32
    %c0_i32_0 = arith.constant 0 : i32
    %c0_i32_1 = arith.constant 0 : i32
    return %c0_i32, %c0_i32_0 : i32, i32
  }
  func.func @transform_5(%arg0: i32) -> (i32, i32) {
    %c0_i32 = arith.constant 0 : i32
    %c0_i32_0 = arith.constant 0 : i32
    %c0_i32_1 = arith.constant 0 : i32
    return %c0_i32, %c0_i32_0 : i32, i32
  }
  func.func @transform_6(%arg0: i32) -> (i32, i32) {
    %c0_i32 = arith.constant 0 : i32
    %c0_i32_0 = arith.constant 0 : i32
    return %arg0, %c0_i32 : i32, i32
  }
}

module attributes {stable_mosaic.version = 11 : i64} {
  func.func @_tail_kernel(%arg0: i32, %arg1: memref<2x2048xbf16, #tpu.memory_space<vmem>>, %arg2: memref<2048x360xbf16, #tpu.memory_space<vmem>>, %arg3: memref<1x360xf32, #tpu.memory_space<vmem>>, %arg4: memref<360x180xbf16, #tpu.memory_space<vmem>>, %arg5: memref<1x180xf32, #tpu.memory_space<vmem>>, %arg6: memref<180x10xbf16, #tpu.memory_space<vmem>>, %arg7: memref<1x10xf32, #tpu.memory_space<vmem>>, %arg8: memref<2x10xf32, #tpu.memory_space<vmem>>) attributes {dimension_semantics = [#tpu.dimension_semantics<parallel>], iteration_bounds = array<i64: 1>, scalar_prefetch = 0 : i64, scratch_operands = 0 : i64, tpu.core_type = #tpu.core_type<tc>, window_params = [{transform_indices = @transform_0, window_bounds = array<i64: 2, 2048>}, {pipeline_mode = #tpu.pipeline_mode<synchronous>, transform_indices = @transform_1, window_bounds = array<i64: 2048, 360>}, {pipeline_mode = #tpu.pipeline_mode<synchronous>, transform_indices = @transform_2, window_bounds = array<i64: 1, 360>}, {pipeline_mode = #tpu.pipeline_mode<synchronous>, transform_indices = @transform_3, window_bounds = array<i64: 360, 180>}, {pipeline_mode = #tpu.pipeline_mode<synchronous>, transform_indices = @transform_4, window_bounds = array<i64: 1, 180>}, {pipeline_mode = #tpu.pipeline_mode<synchronous>, transform_indices = @transform_5, window_bounds = array<i64: 180, 10>}, {pipeline_mode = #tpu.pipeline_mode<synchronous>, transform_indices = @transform_6, window_bounds = array<i64: 1, 10>}, {transform_indices = @transform_7, window_bounds = array<i64: 2, 10>}]} {
    %c0 = arith.constant 0 : index
    %c0_0 = arith.constant 0 : index
    %0 = vector.load %arg1[%c0, %c0_0] : memref<2x2048xbf16, #tpu.memory_space<vmem>>, vector<2x2048xbf16>
    %c0_1 = arith.constant 0 : index
    %c0_2 = arith.constant 0 : index
    %1 = vector.load %arg2[%c0_1, %c0_2] : memref<2048x360xbf16, #tpu.memory_space<vmem>>, vector<2048x360xbf16>
    %cst = arith.constant dense<0.000000e+00> : vector<2x360xf32>
    %2 = tpu.matmul %0, %1, %cst {dimension_numbers = #tpu.dot_dimension_numbers<[1], [0], [0], [1], [0, 0, 1, 1], [], []>} : vector<2x2048xbf16>, vector<2048x360xbf16>, vector<2x360xf32> -> vector<2x360xf32>
    %c0_3 = arith.constant 0 : index
    %c0_4 = arith.constant 0 : index
    %3 = vector.load %arg3[%c0_3, %c0_4] : memref<1x360xf32, #tpu.memory_space<vmem>>, vector<1x360xf32>
    %4 = vector.broadcast %3 : vector<1x360xf32> to vector<2x360xf32>
    %5 = arith.addf %2, %4 : vector<2x360xf32>
    %cst_5 = arith.constant 0.000000e+00 : f32
    %6 = vector.broadcast %cst_5 : f32 to vector<2x360xf32>
    %7 = arith.maximumf %5, %6 : vector<2x360xf32>
    %8 = arith.truncf %7 : vector<2x360xf32> to vector<2x360xbf16>
    %c0_6 = arith.constant 0 : index
    %c0_7 = arith.constant 0 : index
    %9 = vector.load %arg4[%c0_6, %c0_7] : memref<360x180xbf16, #tpu.memory_space<vmem>>, vector<360x180xbf16>
    %cst_8 = arith.constant dense<0.000000e+00> : vector<2x180xf32>
    %10 = tpu.matmul %8, %9, %cst_8 {dimension_numbers = #tpu.dot_dimension_numbers<[1], [0], [0], [1], [0, 0, 1, 1], [], []>} : vector<2x360xbf16>, vector<360x180xbf16>, vector<2x180xf32> -> vector<2x180xf32>
    %c0_9 = arith.constant 0 : index
    %c0_10 = arith.constant 0 : index
    %11 = vector.load %arg5[%c0_9, %c0_10] : memref<1x180xf32, #tpu.memory_space<vmem>>, vector<1x180xf32>
    %12 = vector.broadcast %11 : vector<1x180xf32> to vector<2x180xf32>
    %13 = arith.addf %10, %12 : vector<2x180xf32>
    %14 = arith.truncf %13 : vector<2x180xf32> to vector<2x180xbf16>
    %c0_11 = arith.constant 0 : index
    %c0_12 = arith.constant 0 : index
    %15 = vector.load %arg6[%c0_11, %c0_12] : memref<180x10xbf16, #tpu.memory_space<vmem>>, vector<180x10xbf16>
    %cst_13 = arith.constant dense<0.000000e+00> : vector<2x10xf32>
    %16 = tpu.matmul %14, %15, %cst_13 {dimension_numbers = #tpu.dot_dimension_numbers<[1], [0], [0], [1], [0, 0, 1, 1], [], []>} : vector<2x180xbf16>, vector<180x10xbf16>, vector<2x10xf32> -> vector<2x10xf32>
    %c0_14 = arith.constant 0 : index
    %c0_15 = arith.constant 0 : index
    %17 = vector.load %arg7[%c0_14, %c0_15] : memref<1x10xf32, #tpu.memory_space<vmem>>, vector<1x10xf32>
    %18 = vector.broadcast %17 : vector<1x10xf32> to vector<2x10xf32>
    %19 = arith.addf %16, %18 : vector<2x10xf32>
    %cst_16 = arith.constant dense<0xFF800000> : vector<2xf32>
    %20 = vector.multi_reduction <maximumf>, %19, %cst_16 [1] : vector<2x10xf32> to vector<2xf32>
    %21 = vector.shape_cast %20 : vector<2xf32> to vector<2x1xf32>
    %22 = vector.broadcast %21 : vector<2x1xf32> to vector<2x10xf32>
    %23 = arith.subf %19, %22 : vector<2x10xf32>
    %24 = math.exp %23 : vector<2x10xf32>
    %cst_17 = arith.constant dense<0.000000e+00> : vector<2xf32>
    %25 = vector.multi_reduction <add>, %24, %cst_17 [1] : vector<2x10xf32> to vector<2xf32>
    %26 = vector.shape_cast %25 : vector<2xf32> to vector<2x1xf32>
    %27 = math.log %26 : vector<2x1xf32>
    %28 = vector.broadcast %27 : vector<2x1xf32> to vector<2x10xf32>
    %29 = arith.subf %23, %28 : vector<2x10xf32>
    %c0_18 = arith.constant 0 : index
    %c0_19 = arith.constant 0 : index
    %30 = vector.load %arg8[%c0_18, %c0_19] : memref<2x10xf32, #tpu.memory_space<vmem>>, vector<2x10xf32>
    tpu.vector_store %arg8[%c0_18, %c0_19], %29 {strides = array<i32>} : memref<2x10xf32, #tpu.memory_space<vmem>>, vector<2x10xf32>,
    return
  }
  func.func @transform_0(%arg0: i32) -> (i32, i32) {
    %c0_i32 = arith.constant 0 : i32
    %c0_i32_0 = arith.constant 0 : i32
    return %arg0, %c0_i32 : i32, i32
  }
  func.func @transform_1(%arg0: i32) -> (i32, i32) {
    %c0_i32 = arith.constant 0 : i32
    %c0_i32_0 = arith.constant 0 : i32
    %c0_i32_1 = arith.constant 0 : i32
    return %c0_i32, %c0_i32_0 : i32, i32
  }
  func.func @transform_2(%arg0: i32) -> (i32, i32) {
    %c0_i32 = arith.constant 0 : i32
    %c0_i32_0 = arith.constant 0 : i32
    %c0_i32_1 = arith.constant 0 : i32
    return %c0_i32, %c0_i32_0 : i32, i32
  }
  func.func @transform_3(%arg0: i32) -> (i32, i32) {
    %c0_i32 = arith.constant 0 : i32
    %c0_i32_0 = arith.constant 0 : i32
    %c0_i32_1 = arith.constant 0 : i32
    return %c0_i32, %c0_i32_0 : i32, i32
  }
  func.func @transform_4(%arg0: i32) -> (i32, i32) {
    %c0_i32 = arith.constant 0 : i32
    %c0_i32_0 = arith.constant 0 : i32
    %c0_i32_1 = arith.constant 0 : i32
    return %c0_i32, %c0_i32_0 : i32, i32
  }
  func.func @transform_5(%arg0: i32) -> (i32, i32) {
    %c0_i32 = arith.constant 0 : i32
    %c0_i32_0 = arith.constant 0 : i32
    %c0_i32_1 = arith.constant 0 : i32
    return %c0_i32, %c0_i32_0 : i32, i32
  }
  func.func @transform_6(%arg0: i32) -> (i32, i32) {
    %c0_i32 = arith.constant 0 : i32
    %c0_i32_0 = arith.constant 0 : i32
    %c0_i32_1 = arith.constant 0 : i32
    return %c0_i32, %c0_i32_0 : i32, i32
  }
  func.func @transform_7(%arg0: i32) -> (i32, i32) {
    %c0_i32 = arith.constant 0 : i32
    %c0_i32_0 = arith.constant 0 : i32
    return %arg0, %c0_i32 : i32, i32
  }
}

</mosaic_0001>

<llo_original>
// kernel: net_forward.3
$region0: #{net_forward.3}
  #allocation0 [shape = 'u32[]', space=smem, size = 0x4, offset = 0x4, fixed_abs, tag = 'smem constant byte address 0x4 - core index']
  #allocation1 [shape = 'u32[144,128]{1,0:T(1,128)}', space=vmem, size = 0x12000, scoped, tag = 'internal scratch']
  %s0 = inlined_call_operand.vmem [shape: bf16[288,32], index: 0, kind: input, shape index: {}]
  %s1 = inlined_call_operand.vmem [shape: bf16[288,32], index: 1, kind: input, shape index: {}]
  %s2 = inlined_call_operand.vmem [shape: bf16[288,32], index: 2, kind: input, shape index: {}]
  %s3 = inlined_call_operand.vmem [shape: bf16[288,32], index: 3, kind: input, shape index: {}]
  %s4 = inlined_call_operand.vmem [shape: bf16[32,128], index: 4, kind: input, shape index: {}]
  %s5 = inlined_call_operand.vmem [shape: f32[1,128], index: 5, kind: input, shape index: {}]
  %s6 = inlined_call_operand.vmem [shape: bf16[288,128], index: 6, kind: output, shape index: {}]
  %s7 = sld [smem:[#allocation0]]
  $region34: #{net_forward.3} parent=0
    _
  %s9 = ssub.s32 1, %s7
  %s10 = scalar_select 0, %s9, %s7
  // Predicated region
  $region2: #{net_forward.3} parent=0 // pred_check
    _
  $region3: #{net_forward.3} parent=0 // pred_check_branch
    %12 = sbr.rel (0) target = $region5
  $region4: #{net_forward.3} parent=0 // pred_region
    _
  $region5: #{net_forward.3} parent=0 // pred_fallthru
    _
  // Predicated region
  $region6: #{net_forward.3} parent=0 // pred_check
    _
  $region7: #{net_forward.3} parent=0 // pred_check_branch
    %14 = sbr.rel (0) target = $region9
  $region8: #{net_forward.3} parent=0 // pred_region
    _
  $region9: #{net_forward.3} parent=0 // pred_fallthru
    _
  // Predicated region
  $region10: #{net_forward.3} parent=0 // pred_check
    _
  $region11: #{net_forward.3} parent=0 // pred_check_branch
    %16 = sbr.rel (0) target = $region13
  $region12: #{net_forward.3} parent=0 // pred_region
    _
  $region13: #{net_forward.3} parent=0 // pred_fallthru
    _
  // Predicated region
  $region14: #{net_forward.3} parent=0 // pred_check
    _
  $region15: #{net_forward.3} parent=0 // pred_check_branch
    %18 = sbr.rel (0) target = $region17
  $region16: #{net_forward.3} parent=0 // pred_region
    _
  $region17: #{net_forward.3} parent=0 // pred_fallthru
    _
  // Predicated region
  $region18: #{net_forward.3} parent=0 // pred_check
    _
  $region19: #{net_forward.3} parent=0 // pred_check_branch
    %20 = sbr.rel (0) target = $region21
  $region20: #{net_forward.3} parent=0 // pred_region
    _
  $region21: #{net_forward.3} parent=0 // pred_fallthru
    _
  // Predicated region
  $region22: #{net_forward.3} parent=0 // pred_check
    _
  $region23: #{net_forward.3} parent=0 // pred_check_branch
    %22 = sbr.rel (0) target = $region25
  $region24: #{net_forward.3} parent=0 // pred_region
    _
  $region25: #{net_forward.3} parent=0 // pred_fallthru
    _
  %v24 = vld [vmem:[%s4] sm:$0xf]
  %v25 = vld [vmem:[%s4 + $0x4] sm:$0xf]
  %v26 = vld [vmem:[%s4 + $0x8] sm:$0xf]
  %v27 = vld [vmem:[%s4 + $0xc] sm:$0xf]
  %v28 = vld [vmem:[%s0] sm:$0xf]
  %v29 = vld [vmem:[%s0 + $0x4] sm:$0xf]
  %v30 = vld [vmem:[%s0 + $0x8] sm:$0xf]
  %v31 = vld [vmem:[%s0 + $0xc] sm:$0xf]
  %v32 = vld [vmem:[%s0 + $0x10] sm:$0xf]
  %v33 = vld [vmem:[%s0 + $0x14] sm:$0xf]
  %v34 = vld [vmem:[%s0 + $0x18] sm:$0xf]
  %v35 = vld [vmem:[%s0 + $0x1c] sm:$0xf]
  %v36 = vld [vmem:[%s0 + $0x20] sm:$0xf]
  %v37 = vld [vmem:[%s0 + $0x24] sm:$0xf]
  %v38 = vld [vmem:[%s0 + $0x28] sm:$0xf]
  %v39 = vld [vmem:[%s0 + $0x2c] sm:$0xf]
  %v40 = vld [vmem:[%s0 + $0x30] sm:$0xf]
  %v41 = vld [vmem:[%s0 + $0x34] sm:$0xf]
  %v42 = vld [vmem:[%s0 + $0x38] sm:$0xf]
  %v43 = vld [vmem:[%s0 + $0x3c] sm:$0xf]
  %v44 = vld [vmem:[%s0 + $0x40] sm:$0xf]
  %v45 = vld [vmem:[%s0 + $0x44] sm:$0xf]
  %v46 = vld [vmem:[%s0 + $0x48] sm:$0xf]
  %v47 = vld [vmem:[%s0 + $0x4c] sm:$0xf]
  %v48 = vld [vmem:[%s0 + $0x50] sm:$0xf]
  %v49 = vld [vmem:[%s0 + $0x54] sm:$0xf]
  %v50 = vld [vmem:[%s0 + $0x58] sm:$0xf]
  %v51 = vld [vmem:[%s0 + $0x5c] sm:$0xf]
  %v52 = vld [vmem:[%s0 + $0x60] sm:$0xf]
  %v53 = vld [vmem:[%s0 + $0x64] sm:$0xf]
  %v54 = vld [vmem:[%s0 + $0x68] sm:$0xf]
  %v55 = vld [vmem:[%s0 + $0x6c] sm:$0xf]
  %v56 = vld [vmem:[%s0 + $0x70] sm:$0xf]
  %v57 = vld [vmem:[%s0 + $0x74] sm:$0xf]
  %v58 = vld [vmem:[%s0 + $0x78] sm:$0xf]
  %v59 = vld [vmem:[%s0 + $0x7c] sm:$0xf]
  %v60 = vld [vmem:[%s0 + $0x80] sm:$0xf]
  %v61 = vld [vmem:[%s0 + $0x84] sm:$0xf]
  %v62 = vld [vmem:[%s0 + $0x88] sm:$0xf]
  %v63 = vld [vmem:[%s0 + $0x8c] sm:$0xf]
  %v100 = vunpack.c.l.b16 %v28
  %v101 = vunpack.c.l.b16 %v29
  %v102 = vunpack.c.l.b16 %v30
  %v103 = vunpack.c.l.b16 %v31
  %v104 = vunpack.c.l.b16 %v32
  %v105 = vunpack.c.l.b16 %v33
  %v106 = vunpack.c.l.b16 %v34
  %v107 = vunpack.c.l.b16 %v35
  %v108 = vunpack.c.l.b16 %v36
  %v109 = vunpack.c.l.b16 %v37
  %v110 = vunpack.c.l.b16 %v38
  %v111 = vunpack.c.l.b16 %v39
  %v112 = vunpack.c.l.b16 %v40
  %v113 = vunpack.c.l.b16 %v41
  %v114 = vunpack.c.l.b16 %v42
  %v115 = vunpack.c.l.b16 %v43
  %v116 = vunpack.c.l.b16 %v44
  %v117 = vunpack.c.l.b16 %v45
  %v118 = vunpack.c.l.b16 %v46
  %v119 = vunpack.c.l.b16 %v47
  %v120 = vunpack.c.l.b16 %v48
  %v121 = vunpack.c.l.b16 %v49
  %v122 = vunpack.c.l.b16 %v50
  %v123 = vunpack.c.l.b16 %v51
  %v124 = vunpack.c.l.b16 %v52
  %v125 = vunpack.c.l.b16 %v53
  %v126 = vunpack.c.l.b16 %v54
  %v127 = vunpack.c.l.b16 %v55
  %v128 = vunpack.c.l.b16 %v56
  %v129 = vunpack.c.l.b16 %v57
  %v130 = vunpack.c.l.b16 %v58
  %v131 = vunpack.c.l.b16 %v59
  %v132 = vunpack.c.l.b16 %v60
  %v133 = vunpack.c.l.b16 %v61
  %v134 = vunpack.c.l.b16 %v62
  %v135 = vunpack.c.l.b16 %v63
  %v136 = vpack.c.b16 %v101, %v100
  %v137 = vpack.c.b16 %v103, %v102
  %v138 = vpack.c.b16 %v105, %v104
  %v139 = vpack.c.b16 %v107, %v106
  %v140 = vpack.c.b16 %v109, %v108
  %v141 = vpack.c.b16 %v111, %v110
  %v142 = vpack.c.b16 %v113, %v112
  %v143 = vpack.c.b16 %v115, %v114
  %v144 = vpack.c.b16 %v117, %v116
  %v145 = vpack.c.b16 %v119, %v118
  %v146 = vpack.c.b16 %v121, %v120
  %v147 = vpack.c.b16 %v123, %v122
  %v148 = vpack.c.b16 %v125, %v124
  %v149 = vpack.c.b16 %v127, %v126
  %v150 = vpack.c.b16 %v129, %v128
  %v151 = vpack.c.b16 %v131, %v130
  %v152 = vpack.c.b16 %v133, %v132
  %v153 = vpack.c.b16 %v135, %v134
  %v158 = vunpack.c.l.b16 %v24
  %v159 = vunpack.c.l.b16 %v25
  %v160 = vunpack.c.l.b16 %v26
  %v161 = vunpack.c.l.b16 %v27
  %v162 = vpack.c.b16 %v159, %v158
  %v163 = vpack.c.b16 %v161, %v160
  %vm166 = vcmask 261120
  %v168 = vsel %vm166, %v136, 0
  %v171 = vsel %vm166, %v137, 0
  %v174 = vsel %vm166, %v138, 0
  %v177 = vsel %vm166, %v139, 0
  %v180 = vsel %vm166, %v140, 0
  %v183 = vsel %vm166, %v141, 0
  %v186 = vsel %vm166, %v142, 0
  %v189 = vsel %vm166, %v143, 0
  %v192 = vsel %vm166, %v144, 0
  %v195 = vsel %vm166, %v145, 0
  %v198 = vsel %vm166, %v146, 0
  %v201 = vsel %vm166, %v147, 0
  %v204 = vsel %vm166, %v148, 0
  %v207 = vsel %vm166, %v149, 0
  %v210 = vsel %vm166, %v150, 0
  %v213 = vsel %vm166, %v151, 0
  %v216 = vsel %vm166, %v152, 0
  %v219 = vsel %vm166, %v153, 0
  %221 = vmatprep.subr.bf16.mxu0 0
  %222 = vmatpush1.bf16.msra.mxu0 %v162
  %223 = vmatprep.subr.bf16.mxu0 0
  %224 = vmatpush1.bf16.msra.mxu0 %v163
  %225 = vmatprep.subr.bf16.mxu0 0
  %226 = vmatpush1.bf16.msra.mxu0 0
  %227 = vmatprep.subr.bf16.mxu0 0
  %228 = vmatpush1.bf16.msra.mxu0 0
  %229 = vmatprep.subr.bf16.mxu0 0
  %230 = vmatpush1.bf16.msra.mxu0 0
  %231 = vmatprep.subr.bf16.mxu0 0
  %232 = vmatpush1.bf16.msra.mxu0 0
  %233 = vmatprep.subr.bf16.mxu0 0
  %234 = vmatpush1.bf16.msra.mxu0 0
  %235 = vmatprep.subr.bf16.mxu0 0
  %236 = vmatpush1.bf16.msra.mxu0 0
  %237 = vmatprep.subr.bf16.mxu0 0
  %238 = vmatpush1.bf16.msra.mxu0 0
  %239 = vmatprep.subr.bf16.mxu0 0
  %240 = vmatpush1.bf16.msra.mxu0 0
  %241 = vmatprep.subr.bf16.mxu0 0
  %242 = vmatpush1.bf16.msra.mxu0 0
  %243 = vmatprep.subr.bf16.mxu0 0
  %244 = vmatpush1.bf16.msra.mxu0 0
  %245 = vmatprep.subr.bf16.mxu0 0
  %246 = vmatpush1.bf16.msra.mxu0 0
  %247 = vmatprep.subr.bf16.mxu0 0
  %248 = vmatpush1.bf16.msra.mxu0 0
  %249 = vmatprep.subr.bf16.mxu0 0
  %250 = vmatpush1.bf16.msra.mxu0 0
  %251 = vmatprep.subr.bf16.mxu0 0
  %252 = vmatpush1.bf16.msra.mxu0 0
  %253 = vmatprep.mubr.bf16.mxu0 0
  %254 = vmatmul.mubr.bf16.gmra.mrb[0].mxu0 %v168
  %v255 = vpop.f32.mrb[0].mxu0
  %v256 = vadd.f32 0.0, %v255
  %v257 = vpop.f32.mrb[0].mxu0
  %v258 = vpop.f32.mrb[0].mxu0
  %v259 = vadd.f32 0.0, %v258
  %v260 = vpop.f32.mrb[0].mxu0
  %261 = vmatprep.mubr.bf16.mxu0 0
  %262 = vmatmul.mubr.bf16.gmra.mrb[0].mxu0 %v171
  %v263 = vpop.f32.mrb[0].mxu0
  %v264 = vadd.f32 0.0, %v263
  %v265 = vpop.f32.mrb[0].mxu0
  %v266 = vpop.f32.mrb[0].mxu0
  %v267 = vadd.f32 0.0, %v266
  %v268 = vpop.f32.mrb[0].mxu0
  %269 = vmatprep.mubr.bf16.mxu0 0
  %270 = vmatmul.mubr.bf16.gmra.mrb[0].mxu0 %v174
  %v271 = vpop.f32.mrb[0].mxu0
  %v272 = vadd.f32 0.0, %v271
  %v273 = vpop.f32.mrb[0].mxu0
  %v274 = vpop.f32.mrb[0].mxu0
  %v275 = vadd.f32 0.0, %v274
  %v276 = vpop.f32.mrb[0].mxu0
  %277 = vmatprep.mubr.bf16.mxu0 0
  %278 = vmatmul.mubr.bf16.gmra.mrb[0].mxu0 %v177
  %v279 = vpop.f32.mrb[0].mxu0
  %v280 = vadd.f32 0.0, %v279
  %v281 = vpop.f32.mrb[0].mxu0
  %v282 = vpop.f32.mrb[0].mxu0
  %v283 = vadd.f32 0.0, %v282
  %v284 = vpop.f32.mrb[0].mxu0
  %285 = vmatprep.mubr.bf16.mxu0 0
  %286 = vmatmul.mubr.bf16.gmra.mrb[0].mxu0 %v180
  %v287 = vpop.f32.mrb[0].mxu0
  %v288 = vadd.f32 0.0, %v287
  %v289 = vpop.f32.mrb[0].mxu0
  %v290 = vpop.f32.mrb[0].mxu0
  %v291 = vadd.f32 0.0, %v290
  %v292 = vpop.f32.mrb[0].mxu0
  %293 = vmatprep.mubr.bf16.mxu0 0
  %294 = vmatmul.mubr.bf16.gmra.mrb[0].mxu0 %v183
  %v295 = vpop.f32.mrb[0].mxu0
  %v296 = vadd.f32 0.0, %v295
  %v297 = vpop.f32.mrb[0].mxu0
  %v298 = vpop.f32.mrb[0].mxu0
  %v299 = vadd.f32 0.0, %v298
  %v300 = vpop.f32.mrb[0].mxu0
  %301 = vmatprep.mubr.bf16.mxu0 0
  %302 = vmatmul.mubr.bf16.gmra.mrb[0].mxu0 %v186
  %v303 = vpop.f32.mrb[0].mxu0
  %v304 = vadd.f32 0.0, %v303
  %v305 = vpop.f32.mrb[0].mxu0
  %v306 = vpop.f32.mrb[0].mxu0
  %v307 = vadd.f32 0.0, %v306
  %v308 = vpop.f32.mrb[0].mxu0
  %309 = vmatprep.mubr.bf16.mxu0 0
  %310 = vmatmul.mubr.bf16.gmra.mrb[0].mxu0 %v189
  %v311 = vpop.f32.mrb[0].mxu0
  %v312 = vadd.f32 0.0, %v311
  %v313 = vpop.f32.mrb[0].mxu0
  %v314 = vpop.f32.mrb[0].mxu0
  %v315 = vadd.f32 0.0, %v314
  %v316 = vpop.f32.mrb[0].mxu0
  %317 = vmatprep.mubr.bf16.mxu0 0
  %318 = vmatmul.mubr.bf16.gmra.mrb[0].mxu0 %v192
  %v319 = vpop.f32.mrb[0].mxu0
  %v320 = vadd.f32 0.0, %v319
  %v321 = vpop.f32.mrb[0].mxu0
  %v322 = vpop.f32.mrb[0].mxu0
  %v323 = vadd.f32 0.0, %v322
  %v324 = vpop.f32.mrb[0].mxu0
  %325 = vmatprep.mubr.bf16.mxu0 0
  %326 = vmatmul.mubr.bf16.gmra.mrb[0].mxu0 %v195
  %v327 = vpop.f32.mrb[0].mxu0
  %v328 = vadd.f32 0.0, %v327
  %v329 = vpop.f32.mrb[0].mxu0
  %v330 = vpop.f32.mrb[0].mxu0
  %v331 = vadd.f32 0.0, %v330
  %v332 = vpop.f32.mrb[0].mxu0
  %333 = vmatprep.mubr.bf16.mxu0 0
  %334 = vmatmul.mubr.bf16.gmra.mrb[0].mxu0 %v198
  %v335 = vpop.f32.mrb[0].mxu0
  %v336 = vadd.f32 0.0, %v335
  %v337 = vpop.f32.mrb[0].mxu0
  %v338 = vpop.f32.mrb[0].mxu0
  %v339 = vadd.f32 0.0, %v338
  %v340 = vpop.f32.mrb[0].mxu0
  %341 = vmatprep.mubr.bf16.mxu0 0
  %342 = vmatmul.mubr.bf16.gmra.mrb[0].mxu0 %v201
  %v343 = vpop.f32.mrb[0].mxu0
  %v344 = vadd.f32 0.0, %v343
  %v345 = vpop.f32.mrb[0].mxu0
  %v346 = vpop.f32.mrb[0].mxu0
  %v347 = vadd.f32 0.0, %v346
  %v348 = vpop.f32.mrb[0].mxu0
  %349 = vmatprep.mubr.bf16.mxu0 0
  %350 = vmatmul.mubr.bf16.gmra.mrb[0].mxu0 %v204
  %v351 = vpop.f32.mrb[0].mxu0
  %v352 = vadd.f32 0.0, %v351
  %v353 = vpop.f32.mrb[0].mxu0
  %v354 = vpop.f32.mrb[0].mxu0
  %v355 = vadd.f32 0.0, %v354
  %v356 = vpop.f32.mrb[0].mxu0
  %357 = vmatprep.mubr.bf16.mxu0 0
  %358 = vmatmul.mubr.bf16.gmra.mrb[0].mxu0 %v207
  %v359 = vpop.f32.mrb[0].mxu0
  %v360 = vadd.f32 0.0, %v359
  %v361 = vpop.f32.mrb[0].mxu0
  %v362 = vpop.f32.mrb[0].mxu0
  %v363 = vadd.f32 0.0, %v362
  %v364 = vpop.f32.mrb[0].mxu0
  %365 = vmatprep.mubr.bf16.mxu0 0
  %366 = vmatmul.mubr.bf16.gmra.mrb[0].mxu0 %v210
  %v367 = vpop.f32.mrb[0].mxu0
  %v368 = vadd.f32 0.0, %v367
  %v369 = vpop.f32.mrb[0].mxu0
  %v370 = vpop.f32.mrb[0].mxu0
  %v371 = vadd.f32 0.0, %v370
  %v372 = vpop.f32.mrb[0].mxu0
  %373 = vmatprep.mubr.bf16.mxu0 0
  %374 = vmatmul.mubr.bf16.gmra.mrb[0].mxu0 %v213
  %v375 = vpop.f32.mrb[0].mxu0
  %v376 = vadd.f32 0.0, %v375
  %v377 = vpop.f32.mrb[0].mxu0
  %v378 = vpop.f32.mrb[0].mxu0
  %v379 = vadd.f32 0.0, %v378
  %v380 = vpop.f32.mrb[0].mxu0
  %381 = vmatprep.mubr.bf16.mxu0 0
  %382 = vmatmul.mubr.bf16.gmra.mrb[0].mxu0 %v216
  %v383 = vpop.f32.mrb[0].mxu0
  %v384 = vadd.f32 0.0, %v383
  %v385 = vpop.f32.mrb[0].mxu0
  %v386 = vpop.f32.mrb[0].mxu0
  %v387 = vadd.f32 0.0, %v386
  %v388 = vpop.f32.mrb[0].mxu0
  %389 = vmatprep.mubr.bf16.mxu0 0
  %390 = vmatmul.mubr.bf16.gmra.mrb[0].mxu0 %v219
  %v391 = vpop.f32.mrb[0].mxu0
  %v392 = vadd.f32 0.0, %v391
  %v393 = vpop.f32.mrb[0].mxu0
  %v394 = vpop.f32.mrb[0].mxu0
  %v395 = vadd.f32 0.0, %v394
  %v396 = vpop.f32.mrb[0].mxu0
  %397 = vdwg.mxu0
  %v398 = vld [vmem:[%s1] sm:$0xf]
  %v399 = vld [vmem:[%s1 + $0x4] sm:$0xf]
  %v400 = vld [vmem:[%s1 + $0x8] sm:$0xf]
  %v401 = vld [vmem:[%s1 + $0xc] sm:$0xf]
  %v402 = vld [vmem:[%s1 + $0x10] sm:$0xf]
  %v403 = vld [vmem:[%s1 + $0x14] sm:$0xf]
  %v404 = vld [vmem:[%s1 + $0x18] sm:$0xf]
  %v405 = vld [vmem:[%s1 + $0x1c] sm:$0xf]
  %v406 = vld [vmem:[%s1 + $0x20] sm:$0xf]
  %v407 = vld [vmem:[%s1 + $0x24] sm:$0xf]
  %v408 = vld [vmem:[%s1 + $0x28] sm:$0xf]
  %v409 = vld [vmem:[%s1 + $0x2c] sm:$0xf]
  %v410 = vld [vmem:[%s1 + $0x30] sm:$0xf]
  %v411 = vld [vmem:[%s1 + $0x34] sm:$0xf]
  %v412 = vld [vmem:[%s1 + $0x38] sm:$0xf]
  %v413 = vld [vmem:[%s1 + $0x3c] sm:$0xf]
  %v414 = vld [vmem:[%s1 + $0x40] sm:$0xf]
  %v415 = vld [vmem:[%s1 + $0x44] sm:$0xf]
  %v416 = vld [vmem:[%s1 + $0x48] sm:$0xf]
  %v417 = vld [vmem:[%s1 + $0x4c] sm:$0xf]
  %v418 = vld [vmem:[%s1 + $0x50] sm:$0xf]
  %v419 = vld [vmem:[%s1 + $0x54] sm:$0xf]
  %v420 = vld [vmem:[%s1 + $0x58] sm:$0xf]
  %v421 = vld [vmem:[%s1 + $0x5c] sm:$0xf]
  %v422 = vld [vmem:[%s1 + $0x60] sm:$0xf]
  %v423 = vld [vmem:[%s1 + $0x64] sm:$0xf]
  %v424 = vld [vmem:[%s1 + $0x68] sm:$0xf]
  %v425 = vld [vmem:[%s1 + $0x6c] sm:$0xf]
  %v426 = vld [vmem:[%s1 + $0x70] sm:$0xf]
  %v427 = vld [vmem:[%s1 + $0x74] sm:$0xf]
  %v428 = vld [vmem:[%s1 + $0x78] sm:$0xf]
  %v429 = vld [vmem:[%s1 + $0x7c] sm:$0xf]
  %v430 = vld [vmem:[%s1 + $0x80] sm:$0xf]
  %v431 = vld [vmem:[%s1 + $0x84] sm:$0xf]
  %v432 = vld [vmem:[%s1 + $0x88] sm:$0xf]
  %v433 = vld [vmem:[%s1 + $0x8c] sm:$0xf]
  %v470 = vunpack.c.l.b16 %v398
  %v471 = vunpack.c.l.b16 %v399
  %v472 = vunpack.c.l.b16 %v400
  %v473 = vunpack.c.l.b16 %v401
  %v474 = vunpack.c.l.b16 %v402
  %v475 = vunpack.c.l.b16 %v403
  %v476 = vunpack.c.l.b16 %v404
  %v477 = vunpack.c.l.b16 %v405
  %v478 = vunpack.c.l.b16 %v406
  %v479 = vunpack.c.l.b16 %v407
  %v480 = vunpack.c.l.b16 %v408
  %v481 = vunpack.c.l.b16 %v409
  %v482 = vunpack.c.l.b16 %v410
  %v483 = vunpack.c.l.b16 %v411
  %v484 = vunpack.c.l.b16 %v412
  %v485 = vunpack.c.l.b16 %v413
  %v486 = vunpack.c.l.b16 %v414
  %v487 = vunpack.c.l.b16 %v415
  %v488 = vunpack.c.l.b16 %v416
  %v489 = vunpack.c.l.b16 %v417
  %v490 = vunpack.c.l.b16 %v418
  %v491 = vunpack.c.l.b16 %v419
  %v492 = vunpack.c.l.b16 %v420
  %v493 = vunpack.c.l.b16 %v421
  %v494 = vunpack.c.l.b16 %v422
  %v495 = vunpack.c.l.b16 %v423
  %v496 = vunpack.c.l.b16 %v424
  %v497 = vunpack.c.l.b16 %v425
  %v498 = vunpack.c.l.b16 %v426
  %v499 = vunpack.c.l.b16 %v427
  %v500 = vunpack.c.l.b16 %v428
  %v501 = vunpack.c.l.b16 %v429
  %v502 = vunpack.c.l.b16 %v430
  %v503 = vunpack.c.l.b16 %v431
  %v504 = vunpack.c.l.b16 %v432
  %v505 = vunpack.c.l.b16 %v433
  %v506 = vpack.c.b16 %v471, %v470
  %v507 = vpack.c.b16 %v473, %v472
  %v508 = vpack.c.b16 %v475, %v474
  %v509 = vpack.c.b16 %v477, %v476
  %v510 = vpack.c.b16 %v479, %v478
  %v511 = vpack.c.b16 %v481, %v480
  %v512 = vpack.c.b16 %v483, %v482
  %v513 = vpack.c.b16 %v485, %v484
  %v514 = vpack.c.b16 %v487, %v486
  %v515 = vpack.c.b16 %v489, %v488
  %v516 = vpack.c.b16 %v491, %v490
  %v517 = vpack.c.b16 %v493, %v492
  %v518 = vpack.c.b16 %v495, %v494
  %v519 = vpack.c.b16 %v497, %v496
  %v520 = vpack.c.b16 %v499, %v498
  %v521 = vpack.c.b16 %v501, %v500
  %v522 = vpack.c.b16 %v503, %v502
  %v523 = vpack.c.b16 %v505, %v504
  %v525 = vsel %vm166, %v506, 0
  %v528 = vsel %vm166, %v507, 0
  %v531 = vsel %vm166, %v508, 0
  %v534 = vsel %vm166, %v509, 0
  %v537 = vsel %vm166, %v510, 0
  %v540 = vsel %vm166, %v511, 0
  %v543 = vsel %vm166, %v512, 0
  %v546 = vsel %vm166, %v513, 0
  %v549 = vsel %vm166, %v514, 0
  %v552 = vsel %vm166, %v515, 0
  %v555 = vsel %vm166, %v516, 0
  %v558 = vsel %vm166, %v517, 0
  %v561 = vsel %vm166, %v518, 0
  %v564 = vsel %vm166, %v519, 0
  %v567 = vsel %vm166, %v520, 0
  %v570 = vsel %vm166, %v521, 0
  %v573 = vsel %vm166, %v522, 0
  %v576 = vsel %vm166, %v523, 0
  %578 = vmatprep.subr.bf16.mxu0 0
  %579 = vmatpush1.bf16.msra.mxu0 %v162
  %580 = vmatprep.subr.bf16.mxu0 0
  %581 = vmatpush1.bf16.msra.mxu0 %v163
  %582 = vmatprep.subr.bf16.mxu0 0
  %583 = vmatpush1.bf16.msra.mxu0 0
  %584 = vmatprep.subr.bf16.mxu0 0
  %585 = vmatpush1.bf16.msra.mxu0 0
  %586 = vmatprep.subr.bf16.mxu0 0
  %587 = vmatpush1.bf16.msra.mxu0 0
  %588 = vmatprep.subr.bf16.mxu0 0
  %589 = vmatpush1.bf16.msra.mxu0 0
  %590 = vmatprep.subr.bf16.mxu0 0
  %591 = vmatpush1.bf16.msra.mxu0 0
  %592 = vmatprep.subr.bf16.mxu0 0
  %593 = vmatpush1.bf16.msra.mxu0 0
  %594 = vmatprep.subr.bf16.mxu0 0
  %595 = vmatpush1.bf16.msra.mxu0 0
  %596 = vmatprep.subr.bf16.mxu0 0
  %597 = vmatpush1.bf16.msra.mxu0 0
  %598 = vmatprep.subr.bf16.mxu0 0
  %599 = vmatpush1.bf16.msra.mxu0 0
  %600 = vmatprep.subr.bf16.mxu0 0
  %601 = vmatpush1.bf16.msra.mxu0 0
  %602 = vmatprep.subr.bf16.mxu0 0
  %603 = vmatpush1.bf16.msra.mxu0 0
  %604 = vmatprep.subr.bf16.mxu0 0
  %605 = vmatpush1.bf16.msra.mxu0 0
  %606 = vmatprep.subr.bf16.mxu0 0
  %607 = vmatpush1.bf16.msra.mxu0 0
  %608 = vmatprep.subr.bf16.mxu0 0
  %609 = vmatpush1.bf16.msra.mxu0 0
  %610 = vmatprep.mubr.bf16.mxu0 0
  %611 = vmatmul.mubr.bf16.gmra.mrb[0].mxu0 %v525
  %v612 = vpop.f32.mrb[0].mxu0
  %v613 = vadd.f32 0.0, %v612
  %v614 = vpop.f32.mrb[0].mxu0
  %v615 = vpop.f32.mrb[0].mxu0
  %v616 = vadd.f32 0.0, %v615
  %v617 = vpop.f32.mrb[0].mxu0
  %618 = vmatprep.mubr.bf16.mxu0 0
  %619 = vmatmul.mubr.bf16.gmra.mrb[0].mxu0 %v528
  %v620 = vpop.f32.mrb[0].mxu0
  %v621 = vadd.f32 0.0, %v620
  %v622 = vpop.f32.mrb[0].mxu0
  %v623 = vpop.f32.mrb[0].mxu0
  %v624 = vadd.f32 0.0, %v623
  %v625 = vpop.f32.mrb[0].mxu0
  %626 = vmatprep.mubr.bf16.mxu0 0
  %627 = vmatmul.mubr.bf16.gmra.mrb[0].mxu0 %v531
  %v628 = vpop.f32.mrb[0].mxu0
  %v629 = vadd.f32 0.0, %v628
  %v630 = vpop.f32.mrb[0].mxu0
  %v631 = vpop.f32.mrb[0].mxu0
  %v632 = vadd.f32 0.0, %v631
  %v633 = vpop.f32.mrb[0].mxu0
  %634 = vmatprep.mubr.bf16.mxu0 0
  %635 = vmatmul.mubr.bf16.gmra.mrb[0].mxu0 %v534
  %v636 = vpop.f32.mrb[0].mxu0
  %v637 = vadd.f32 0.0, %v636
  %v638 = vpop.f32.mrb[0].mxu0
  %v639 = vpop.f32.mrb[0].mxu0
  %v640 = vadd.f32 0.0, %v639
  %v641 = vpop.f32.mrb[0].mxu0
  %642 = vmatprep.mubr.bf16.mxu0 0
  %643 = vmatmul.mubr.bf16.gmra.mrb[0].mxu0 %v537
  %v644 = vpop.f32.mrb[0].mxu0
  %v645 = vadd.f32 0.0, %v644
  %v646 = vpop.f32.mrb[0].mxu0
  %v647 = vpop.f32.mrb[0].mxu0
  %v648 = vadd.f32 0.0, %v647
  %v649 = vpop.f32.mrb[0].mxu0
  %650 = vmatprep.mubr.bf16.mxu0 0
  %651 = vmatmul.mubr.bf16.gmra.mrb[0].mxu0 %v540
  %v652 = vpop.f32.mrb[0].mxu0
  %v653 = vadd.f32 0.0, %v652
  %v654 = vpop.f32.mrb[0].mxu0
  %v655 = vpop.f32.mrb[0].mxu0
  %v656 = vadd.f32 0.0, %v655
  %v657 = vpop.f32.mrb[0].mxu0
  %658 = vmatprep.mubr.bf16.mxu0 0
  %659 = vmatmul.mubr.bf16.gmra.mrb[0].mxu0 %v543
  %v660 = vpop.f32.mrb[0].mxu0
  %v661 = vadd.f32 0.0, %v660
  %v662 = vpop.f32.mrb[0].mxu0
  %v663 = vpop.f32.mrb[0].mxu0
  %v664 = vadd.f32 0.0, %v663
  %v665 = vpop.f32.mrb[0].mxu0
  %666 = vmatprep.mubr.bf16.mxu0 0
  %667 = vmatmul.mubr.bf16.gmra.mrb[0].mxu0 %v546
  %v668 = vpop.f32.mrb[0].mxu0
  %v669 = vadd.f32 0.0, %v668
  %v670 = vpop.f32.mrb[0].mxu0
  %v671 = vpop.f32.mrb[0].mxu0
  %v672 = vadd.f32 0.0, %v671
  %v673 = vpop.f32.mrb[0].mxu0
  %674 = vmatprep.mubr.bf16.mxu0 0
  %675 = vmatmul.mubr.bf16.gmra.mrb[0].mxu0 %v549
  %v676 = vpop.f32.mrb[0].mxu0
  %v677 = vadd.f32 0.0, %v676
  %v678 = vpop.f32.mrb[0].mxu0
  %v679 = vpop.f32.mrb[0].mxu0
  %v680 = vadd.f32 0.0, %v679
  %v681 = vpop.f32.mrb[0].mxu0
  %682 = vmatprep.mubr.bf16.mxu0 0
  %683 = vmatmul.mubr.bf16.gmra.mrb[0].mxu0 %v552
  %v684 = vpop.f32.mrb[0].mxu0
  %v685 = vadd.f32 0.0, %v684
  %v686 = vpop.f32.mrb[0].mxu0
  %v687 = vpop.f32.mrb[0].mxu0
  %v688 = vadd.f32 0.0, %v687
  %v689 = vpop.f32.mrb[0].mxu0
  %690 = vmatprep.mubr.bf16.mxu0 0
  %691 = vmatmul.mubr.bf16.gmra.mrb[0].mxu0 %v555
  %v692 = vpop.f32.mrb[0].mxu0
  %v693 = vadd.f32 0.0, %v692
  %v694 = vpop.f32.mrb[0].mxu0
  %v695 = vpop.f32.mrb[0].mxu0
  %v696 = vadd.f32 0.0, %v695
  %v697 = vpop.f32.mrb[0].mxu0
  %698 = vmatprep.mubr.bf16.mxu0 0
  %699 = vmatmul.mubr.bf16.gmra.mrb[0].mxu0 %v558
  %v700 = vpop.f32.mrb[0].mxu0
  %v701 = vadd.f32 0.0, %v700
  %v702 = vpop.f32.mrb[0].mxu0
  %v703 = vpop.f32.mrb[0].mxu0
  %v704 = vadd.f32 0.0, %v703
  %v705 = vpop.f32.mrb[0].mxu0
  %706 = vmatprep.mubr.bf16.mxu0 0
  %707 = vmatmul.mubr.bf16.gmra.mrb[0].mxu0 %v561
  %v708 = vpop.f32.mrb[0].mxu0
  %v709 = vadd.f32 0.0, %v708
  %v710 = vpop.f32.mrb[0].mxu0
  %v711 = vpop.f32.mrb[0].mxu0
  %v712 = vadd.f32 0.0, %v711
  %v713 = vpop.f32.mrb[0].mxu0
  %714 = vmatprep.mubr.bf16.mxu0 0
  %715 = vmatmul.mubr.bf16.gmra.mrb[0].mxu0 %v564
  %v716 = vpop.f32.mrb[0].mxu0
  %v717 = vadd.f32 0.0, %v716
  %v718 = vpop.f32.mrb[0].mxu0
  %v719 = vpop.f32.mrb[0].mxu0
  %v720 = vadd.f32 0.0, %v719
  %v721 = vpop.f32.mrb[0].mxu0
  %722 = vmatprep.mubr.bf16.mxu0 0
  %723 = vmatmul.mubr.bf16.gmra.mrb[0].mxu0 %v567
  %v724 = vpop.f32.mrb[0].mxu0
  %v725 = vadd.f32 0.0, %v724
  %v726 = vpop.f32.mrb[0].mxu0
  %v727 = vpop.f32.mrb[0].mxu0
  %v728 = vadd.f32 0.0, %v727
  %v729 = vpop.f32.mrb[0].mxu0
  %730 = vmatprep.mubr.bf16.mxu0 0
  %731 = vmatmul.mubr.bf16.gmra.mrb[0].mxu0 %v570
  %v732 = vpop.f32.mrb[0].mxu0
  %v733 = vadd.f32 0.0, %v732
  %v734 = vpop.f32.mrb[0].mxu0
  %v735 = vpop.f32.mrb[0].mxu0
  %v736 = vadd.f32 0.0, %v735
  %v737 = vpop.f32.mrb[0].mxu0
  %738 = vmatprep.mubr.bf16.mxu0 0
  %739 = vmatmul.mubr.bf16.gmra.mrb[0].mxu0 %v573
  %v740 = vpop.f32.mrb[0].mxu0
  %v741 = vadd.f32 0.0, %v740
  %v742 = vpop.f32.mrb[0].mxu0
  %v743 = vpop.f32.mrb[0].mxu0
  %v744 = vadd.f32 0.0, %v743
  %v745 = vpop.f32.mrb[0].mxu0
  %746 = vmatprep.mubr.bf16.mxu0 0
  %747 = vmatmul.mubr.bf16.gmra.mrb[0].mxu0 %v576
  %v748 = vpop.f32.mrb[0].mxu0
  %v749 = vadd.f32 0.0, %v748
  %v750 = vpop.f32.mrb[0].mxu0
  %v751 = vpop.f32.mrb[0].mxu0
  %v752 = vadd.f32 0.0, %v751
  %v753 = vpop.f32.mrb[0].mxu0
  %754 = vdwg.mxu0
  %v755 = vmax.f32 %v256, %v613
  %v756 = vmax.f32 %v259, %v616
  %v757 = vmax.f32 %v264, %v621
  %v758 = vmax.f32 %v267, %v624
  %v759 = vmax.f32 %v272, %v629
  %v760 = vmax.f32 %v275, %v632
  %v761 = vmax.f32 %v280, %v637
  %v762 = vmax.f32 %v283, %v640
  %v763 = vmax.f32 %v288, %v645
  %v764 = vmax.f32 %v291, %v648
  %v765 = vmax.f32 %v296, %v653
  %v766 = vmax.f32 %v299, %v656
  %v767 = vmax.f32 %v304, %v661
  %v768 = vmax.f32 %v307, %v664
  %v769 = vmax.f32 %v312, %v669
  %v770 = vmax.f32 %v315, %v672
  %v771 = vmax.f32 %v320, %v677
  %v772 = vmax.f32 %v323, %v680
  %v773 = vmax.f32 %v328, %v685
  %v774 = vmax.f32 %v331, %v688
  %v775 = vmax.f32 %v336, %v693
  %v776 = vmax.f32 %v339, %v696
  %v777 = vmax.f32 %v344, %v701
  %v778 = vmax.f32 %v347, %v704
  %v779 = vmax.f32 %v352, %v709
  %v780 = vmax.f32 %v355, %v712
  %v781 = vmax.f32 %v360, %v717
  %v782 = vmax.f32 %v363, %v720
  %v783 = vmax.f32 %v368, %v725
  %v784 = vmax.f32 %v371, %v728
  %v785 = vmax.f32 %v376, %v733
  %v786 = vmax.f32 %v379, %v736
  %v787 = vmax.f32 %v384, %v741
  %v788 = vmax.f32 %v387, %v744
  %v789 = vmax.f32 %v392, %v749
  %v790 = vmax.f32 %v395, %v752
  %v791 = vld [vmem:[%s2] sm:$0xf]
  %v792 = vld [vmem:[%s2 + $0x4] sm:$0xf]
  %v793 = vld [vmem:[%s2 + $0x8] sm:$0xf]
  %v794 = vld [vmem:[%s2 + $0xc] sm:$0xf]
  %v795 = vld [vmem:[%s2 + $0x10] sm:$0xf]
  %v796 = vld [vmem:[%s2 + $0x14] sm:$0xf]
  %v797 = vld [vmem:[%s2 + $0x18] sm:$0xf]
  %v798 = vld [vmem:[%s2 + $0x1c] sm:$0xf]
  %v799 = vld [vmem:[%s2 + $0x20] sm:$0xf]
  %v800 = vld [vmem:[%s2 + $0x24] sm:$0xf]
  %v801 = vld [vmem:[%s2 + $0x28] sm:$0xf]
  %v802 = vld [vmem:[%s2 + $0x2c] sm:$0xf]
  %v803 = vld [vmem:[%s2 + $0x30] sm:$0xf]
  %v804 = vld [vmem:[%s2 + $0x34] sm:$0xf]
  %v805 = vld [vmem:[%s2 + $0x38] sm:$0xf]
  %v806 = vld [vmem:[%s2 + $0x3c] sm:$0xf]
  %v807 = vld [vmem:[%s2 + $0x40] sm:$0xf]
  %v808 = vld [vmem:[%s2 + $0x44] sm:$0xf]
  %v809 = vld [vmem:[%s2 + $0x48] sm:$0xf]
  %v810 = vld [vmem:[%s2 + $0x4c] sm:$0xf]
  %v811 = vld [vmem:[%s2 + $0x50] sm:$0xf]
  %v812 = vld [vmem:[%s2 + $0x54] sm:$0xf]
  %v813 = vld [vmem:[%s2 + $0x58] sm:$0xf]
  %v814 = vld [vmem:[%s2 + $0x5c] sm:$0xf]
  %v815 = vld [vmem:[%s2 + $0x60] sm:$0xf]
  %v816 = vld [vmem:[%s2 + $0x64] sm:$0xf]
  %v817 = vld [vmem:[%s2 + $0x68] sm:$0xf]
  %v818 = vld [vmem:[%s2 + $0x6c] sm:$0xf]
  %v819 = vld [vmem:[%s2 + $0x70] sm:$0xf]
  %v820 = vld [vmem:[%s2 + $0x74] sm:$0xf]
  %v821 = vld [vmem:[%s2 + $0x78] sm:$0xf]
  %v822 = vld [vmem:[%s2 + $0x7c] sm:$0xf]
  %v823 = vld [vmem:[%s2 + $0x80] sm:$0xf]
  %v824 = vld [vmem:[%s2 + $0x84] sm:$0xf]
  %v825 = vld [vmem:[%s2 + $0x88] sm:$0xf]
  %v826 = vld [vmem:[%s2 + $0x8c] sm:$0xf]
  %v863 = vunpack.c.l.b16 %v791
  %v864 = vunpack.c.l.b16 %v792
  %v865 = vunpack.c.l.b16 %v793
  %v866 = vunpack.c.l.b16 %v794
  %v867 = vunpack.c.l.b16 %v795
  %v868 = vunpack.c.l.b16 %v796
  %v869 = vunpack.c.l.b16 %v797
  %v870 = vunpack.c.l.b16 %v798
  %v871 = vunpack.c.l.b16 %v799
  %v872 = vunpack.c.l.b16 %v800
  %v873 = vunpack.c.l.b16 %v801
  %v874 = vunpack.c.l.b16 %v802
  %v875 = vunpack.c.l.b16 %v803
  %v876 = vunpack.c.l.b16 %v804
  %v877 = vunpack.c.l.b16 %v805
  %v878 = vunpack.c.l.b16 %v806
  %v879 = vunpack.c.l.b16 %v807
  %v880 = vunpack.c.l.b16 %v808
  %v881 = vunpack.c.l.b16 %v809
  %v882 = vunpack.c.l.b16 %v810
  %v883 = vunpack.c.l.b16 %v811
  %v884 = vunpack.c.l.b16 %v812
  %v885 = vunpack.c.l.b16 %v813
  %v886 = vunpack.c.l.b16 %v814
  %v887 = vunpack.c.l.b16 %v815
  %v888 = vunpack.c.l.b16 %v816
  %v889 = vunpack.c.l.b16 %v817
  %v890 = vunpack.c.l.b16 %v818
  %v891 = vunpack.c.l.b16 %v819
  %v892 = vunpack.c.l.b16 %v820
  %v893 = vunpack.c.l.b16 %v821
  %v894 = vunpack.c.l.b16 %v822
  %v895 = vunpack.c.l.b16 %v823
  %v896 = vunpack.c.l.b16 %v824
  %v897 = vunpack.c.l.b16 %v825
  %v898 = vunpack.c.l.b16 %v826
  %v899 = vpack.c.b16 %v864, %v863
  %v900 = vpack.c.b16 %v866, %v865
  %v901 = vpack.c.b16 %v868, %v867
  %v902 = vpack.c.b16 %v870, %v869
  %v903 = vpack.c.b16 %v872, %v871
  %v904 = vpack.c.b16 %v874, %v873
  %v905 = vpack.c.b16 %v876, %v875
  %v906 = vpack.c.b16 %v878, %v877
  %v907 = vpack.c.b16 %v880, %v879
  %v908 = vpack.c.b16 %v882, %v881
  %v909 = vpack.c.b16 %v884, %v883
  %v910 = vpack.c.b16 %v886, %v885
  %v911 = vpack.c.b16 %v888, %v887
  %v912 = vpack.c.b16 %v890, %v889
  %v913 = vpack.c.b16 %v892, %v891
  %v914 = vpack.c.b16 %v894, %v893
  %v915 = vpack.c.b16 %v896, %v895
  %v916 = vpack.c.b16 %v898, %v897
  %v918 = vsel %vm166, %v899, 0
  %v921 = vsel %vm166, %v900, 0
  %v924 = vsel %vm166, %v901, 0
  %v927 = vsel %vm166, %v902, 0
  %v930 = vsel %vm166, %v903, 0
  %v933 = vsel %vm166, %v904, 0
  %v936 = vsel %vm166, %v905, 0
  %v939 = vsel %vm166, %v906, 0
  %v942 = vsel %vm166, %v907, 0
  %v945 = vsel %vm166, %v908, 0
  %v948 = vsel %vm166, %v909, 0
  %v951 = vsel %vm166, %v910, 0
  %v954 = vsel %vm166, %v911, 0
  %v957 = vsel %vm166, %v912, 0
  %v960 = vsel %vm166, %v913, 0
  %v963 = vsel %vm166, %v914, 0
  %v966 = vsel %vm166, %v915, 0
  %v969 = vsel %vm166, %v916, 0
  %971 = vmatprep.subr.bf16.mxu0 0
  %972 = vmatpush1.bf16.msra.mxu0 %v162
  %973 = vmatprep.subr.bf16.mxu0 0
  %974 = vmatpush1.bf16.msra.mxu0 %v163
  %975 = vmatprep.subr.bf16.mxu0 0
  %976 = vmatpush1.bf16.msra.mxu0 0
  %977 = vmatprep.subr.bf16.mxu0 0
  %978 = vmatpush1.bf16.msra.mxu0 0
  %979 = vmatprep.subr.bf16.mxu0 0
  %980 = vmatpush1.bf16.msra.mxu0 0
  %981 = vmatprep.subr.bf16.mxu0 0
  %982 = vmatpush1.bf16.msra.mxu0 0
  %983 = vmatprep.subr.bf16.mxu0 0
  %984 = vmatpush1.bf16.msra.mxu0 0
  %985 = vmatprep.subr.bf16.mxu0 0
  %986 = vmatpush1.bf16.msra.mxu0 0
  %987 = vmatprep.subr.bf16.mxu0 0
  %988 = vmatpush1.bf16.msra.mxu0 0
  %989 = vmatprep.subr.bf16.mxu0 0
  %990 = vmatpush1.bf16.msra.mxu0 0
  %991 = vmatprep.subr.bf16.mxu0 0
  %992 = vmatpush1.bf16.msra.mxu0 0
  %993 = vmatprep.subr.bf16.mxu0 0
  %994 = vmatpush1.bf16.msra.mxu0 0
  %995 = vmatprep.subr.bf16.mxu0 0
  %996 = vmatpush1.bf16.msra.mxu0 0
  %997 = vmatprep.subr.bf16.mxu0 0
  %998 = vmatpush1.bf16.msra.mxu0 0
  %999 = vmatprep.subr.bf16.mxu0 0
  %1000 = vmatpush1.bf16.msra.mxu0 0
  %1001 = vmatprep.subr.bf16.mxu0 0
  %1002 = vmatpush1.bf16.msra.mxu0 0
  %1003 = vmatprep.mubr.bf16.mxu0 0
  %1004 = vmatmul.mubr.bf16.gmra.mrb[0].mxu0 %v918
  %v1005 = vpop.f32.mrb[0].mxu0
  %v1006 = vadd.f32 0.0, %v1005
  %v1007 = vpop.f32.mrb[0].mxu0
  %v1008 = vpop.f32.mrb[0].mxu0
  %v1009 = vadd.f32 0.0, %v1008
  %v1010 = vpop.f32.mrb[0].mxu0
  %1011 = vmatprep.mubr.bf16.mxu0 0
  %1012 = vmatmul.mubr.bf16.gmra.mrb[0].mxu0 %v921
  %v1013 = vpop.f32.mrb[0].mxu0
  %v1014 = vadd.f32 0.0, %v1013
  %v1015 = vpop.f32.mrb[0].mxu0
  %v1016 = vpop.f32.mrb[0].mxu0
  %v1017 = vadd.f32 0.0, %v1016
  %v1018 = vpop.f32.mrb[0].mxu0
  %1019 = vmatprep.mubr.bf16.mxu0 0
  %1020 = vmatmul.mubr.bf16.gmra.mrb[0].mxu0 %v924
  %v1021 = vpop.f32.mrb[0].mxu0
  %v1022 = vadd.f32 0.0, %v1021
  %v1023 = vpop.f32.mrb[0].mxu0
  %v1024 = vpop.f32.mrb[0].mxu0
  %v1025 = vadd.f32 0.0, %v1024
  %v1026 = vpop.f32.mrb[0].mxu0
  %1027 = vmatprep.mubr.bf16.mxu0 0
  %1028 = vmatmul.mubr.bf16.gmra.mrb[0].mxu0 %v927
  %v1029 = vpop.f32.mrb[0].mxu0
  %v1030 = vadd.f32 0.0, %v1029
  %v1031 = vpop.f32.mrb[0].mxu0
  %v1032 = vpop.f32.mrb[0].mxu0
  %v1033 = vadd.f32 0.0, %v1032
  %v1034 = vpop.f32.mrb[0].mxu0
  %1035 = vmatprep.mubr.bf16.mxu0 0
  %1036 = vmatmul.mubr.bf16.gmra.mrb[0].mxu0 %v930
  %v1037 = vpop.f32.mrb[0].mxu0
  %v1038 = vadd.f32 0.0, %v1037
  %v1039 = vpop.f32.mrb[0].mxu0
  %v1040 = vpop.f32.mrb[0].mxu0
  %v1041 = vadd.f32 0.0, %v1040
  %v1042 = vpop.f32.mrb[0].mxu0
  %1043 = vmatprep.mubr.bf16.mxu0 0
  %1044 = vmatmul.mubr.bf16.gmra.mrb[0].mxu0 %v933
  %v1045 = vpop.f32.mrb[0].mxu0
  %v1046 = vadd.f32 0.0, %v1045
  %v1047 = vpop.f32.mrb[0].mxu0
  %v1048 = vpop.f32.mrb[0].mxu0
  %v1049 = vadd.f32 0.0, %v1048
  %v1050 = vpop.f32.mrb[0].mxu0
  %1051 = vmatprep.mubr.bf16.mxu0 0
  %1052 = vmatmul.mubr.bf16.gmra.mrb[0].mxu0 %v936
  %v1053 = vpop.f32.mrb[0].mxu0
  %v1054 = vadd.f32 0.0, %v1053
  %v1055 = vpop.f32.mrb[0].mxu0
  %v1056 = vpop.f32.mrb[0].mxu0
  %v1057 = vadd.f32 0.0, %v1056
  %v1058 = vpop.f32.mrb[0].mxu0
  %1059 = vmatprep.mubr.bf16.mxu0 0
  %1060 = vmatmul.mubr.bf16.gmra.mrb[0].mxu0 %v939
  %v1061 = vpop.f32.mrb[0].mxu0
  %v1062 = vadd.f32 0.0, %v1061
  %v1063 = vpop.f32.mrb[0].mxu0
  %v1064 = vpop.f32.mrb[0].mxu0
  %v1065 = vadd.f32 0.0, %v1064
  %v1066 = vpop.f32.mrb[0].mxu0
  %1067 = vmatprep.mubr.bf16.mxu0 0
  %1068 = vmatmul.mubr.bf16.gmra.mrb[0].mxu0 %v942
  %v1069 = vpop.f32.mrb[0].mxu0
  %v1070 = vadd.f32 0.0, %v1069
  %v1071 = vpop.f32.mrb[0].mxu0
  %v1072 = vpop.f32.mrb[0].mxu0
  %v1073 = vadd.f32 0.0, %v1072
  %v1074 = vpop.f32.mrb[0].mxu0
  %1075 = vmatprep.mubr.bf16.mxu0 0
  %1076 = vmatmul.mubr.bf16.gmra.mrb[0].mxu0 %v945
  %v1077 = vpop.f32.mrb[0].mxu0
  %v1078 = vadd.f32 0.0, %v1077
  %v1079 = vpop.f32.mrb[0].mxu0
  %v1080 = vpop.f32.mrb[0].mxu0
  %v1081 = vadd.f32 0.0, %v1080
  %v1082 = vpop.f32.mrb[0].mxu0
  %1083 = vmatprep.mubr.bf16.mxu0 0
  %1084 = vmatmul.mubr.bf16.gmra.mrb[0].mxu0 %v948
  %v1085 = vpop.f32.mrb[0].mxu0
  %v1086 = vadd.f32 0.0, %v1085
  %v1087 = vpop.f32.mrb[0].mxu0
  %v1088 = vpop.f32.mrb[0].mxu0
  %v1089 = vadd.f32 0.0, %v1088
  %v1090 = vpop.f32.mrb[0].mxu0
  %1091 = vmatprep.mubr.bf16.mxu0 0
  %1092 = vmatmul.mubr.bf16.gmra.mrb[0].mxu0 %v951
  %v1093 = vpop.f32.mrb[0].mxu0
  %v1094 = vadd.f32 0.0, %v1093
  %v1095 = vpop.f32.mrb[0].mxu0
  %v1096 = vpop.f32.mrb[0].mxu0
  %v1097 = vadd.f32 0.0, %v1096
  %v1098 = vpop.f32.mrb[0].mxu0
  %1099 = vmatprep.mubr.bf16.mxu0 0
  %1100 = vmatmul.mubr.bf16.gmra.mrb[0].mxu0 %v954
  %v1101 = vpop.f32.mrb[0].mxu0
  %v1102 = vadd.f32 0.0, %v1101
  %v1103 = vpop.f32.mrb[0].mxu0
  %v1104 = vpop.f32.mrb[0].mxu0
  %v1105 = vadd.f32 0.0, %v1104
  %v1106 = vpop.f32.mrb[0].mxu0
  %1107 = vmatprep.mubr.bf16.mxu0 0
  %1108 = vmatmul.mubr.bf16.gmra.mrb[0].mxu0 %v957
  %v1109 = vpop.f32.mrb[0].mxu0
  %v1110 = vadd.f32 0.0, %v1109
  %v1111 = vpop.f32.mrb[0].mxu0
  %v1112 = vpop.f32.mrb[0].mxu0
  %v1113 = vadd.f32 0.0, %v1112
  %v1114 = vpop.f32.mrb[0].mxu0
  %1115 = vmatprep.mubr.bf16.mxu0 0
  %1116 = vmatmul.mubr.bf16.gmra.mrb[0].mxu0 %v960
  %v1117 = vpop.f32.mrb[0].mxu0
  %v1118 = vadd.f32 0.0, %v1117
  %v1119 = vpop.f32.mrb[0].mxu0
  %v1120 = vpop.f32.mrb[0].mxu0
  %v1121 = vadd.f32 0.0, %v1120
  %v1122 = vpop.f32.mrb[0].mxu0
  %1123 = vmatprep.mubr.bf16.mxu0 0
  %1124 = vmatmul.mubr.bf16.gmra.mrb[0].mxu0 %v963
  %v1125 = vpop.f32.mrb[0].mxu0
  %v1126 = vadd.f32 0.0, %v1125
  %v1127 = vpop.f32.mrb[0].mxu0
  %v1128 = vpop.f32.mrb[0].mxu0
  %v1129 = vadd.f32 0.0, %v1128
  %v1130 = vpop.f32.mrb[0].mxu0
  %1131 = vmatprep.mubr.bf16.mxu0 0
  %1132 = vmatmul.mubr.bf16.gmra.mrb[0].mxu0 %v966
  %v1133 = vpop.f32.mrb[0].mxu0
  %v1134 = vadd.f32 0.0, %v1133
  %v1135 = vpop.f32.mrb[0].mxu0
  %v1136 = vpop.f32.mrb[0].mxu0
  %v1137 = vadd.f32 0.0, %v1136
  %v1138 = vpop.f32.mrb[0].mxu0
  %1139 = vmatprep.mubr.bf16.mxu0 0
  %1140 = vmatmul.mubr.bf16.gmra.mrb[0].mxu0 %v969
  %v1141 = vpop.f32.mrb[0].mxu0
  %v1142 = vadd.f32 0.0, %v1141
  %v1143 = vpop.f32.mrb[0].mxu0
  %v1144 = vpop.f32.mrb[0].mxu0
  %v1145 = vadd.f32 0.0, %v1144
  %v1146 = vpop.f32.mrb[0].mxu0
  %1147 = vdwg.mxu0
  %v1148 = vld [vmem:[%s3] sm:$0xf]
  %v1149 = vld [vmem:[%s3 + $0x4] sm:$0xf]
  %v1150 = vld [vmem:[%s3 + $0x8] sm:$0xf]
  %v1151 = vld [vmem:[%s3 + $0xc] sm:$0xf]
  %v1152 = vld [vmem:[%s3 + $0x10] sm:$0xf]
  %v1153 = vld [vmem:[%s3 + $0x14] sm:$0xf]
  %v1154 = vld [vmem:[%s3 + $0x18] sm:$0xf]
  %v1155 = vld [vmem:[%s3 + $0x1c] sm:$0xf]
  %v1156 = vld [vmem:[%s3 + $0x20] sm:$0xf]
  %v1157 = vld [vmem:[%s3 + $0x24] sm:$0xf]
  %v1158 = vld [vmem:[%s3 + $0x28] sm:$0xf]
  %v1159 = vld [vmem:[%s3 + $0x2c] sm:$0xf]
  %v1160 = vld [vmem:[%s3 + $0x30] sm:$0xf]
  %v1161 = vld [vmem:[%s3 + $0x34] sm:$0xf]
  %v1162 = vld [vmem:[%s3 + $0x38] sm:$0xf]
  %v1163 = vld [vmem:[%s3 + $0x3c] sm:$0xf]
  %v1164 = vld [vmem:[%s3 + $0x40] sm:$0xf]
  %v1165 = vld [vmem:[%s3 + $0x44] sm:$0xf]
  %v1166 = vld [vmem:[%s3 + $0x48] sm:$0xf]
  %v1167 = vld [vmem:[%s3 + $0x4c] sm:$0xf]
  %v1168 = vld [vmem:[%s3 + $0x50] sm:$0xf]
  %v1169 = vld [vmem:[%s3 + $0x54] sm:$0xf]
  %v1170 = vld [vmem:[%s3 + $0x58] sm:$0xf]
  %v1171 = vld [vmem:[%s3 + $0x5c] sm:$0xf]
  %v1172 = vld [vmem:[%s3 + $0x60] sm:$0xf]
  %v1173 = vld [vmem:[%s3 + $0x64] sm:$0xf]
  %v1174 = vld [vmem:[%s3 + $0x68] sm:$0xf]
  %v1175 = vld [vmem:[%s3 + $0x6c] sm:$0xf]
  %v1176 = vld [vmem:[%s3 + $0x70] sm:$0xf]
  %v1177 = vld [vmem:[%s3 + $0x74] sm:$0xf]
  %v1178 = vld [vmem:[%s3 + $0x78] sm:$0xf]
  %v1179 = vld [vmem:[%s3 + $0x7c] sm:$0xf]
  %v1180 = vld [vmem:[%s3 + $0x80] sm:$0xf]
  %v1181 = vld [vmem:[%s3 + $0x84] sm:$0xf]
  %v1182 = vld [vmem:[%s3 + $0x88] sm:$0xf]
  %v1183 = vld [vmem:[%s3 + $0x8c] sm:$0xf]
  %v1220 = vunpack.c.l.b16 %v1148
  %v1221 = vunpack.c.l.b16 %v1149
  %v1222 = vunpack.c.l.b16 %v1150
  %v1223 = vunpack.c.l.b16 %v1151
  %v1224 = vunpack.c.l.b16 %v1152
  %v1225 = vunpack.c.l.b16 %v1153
  %v1226 = vunpack.c.l.b16 %v1154
  %v1227 = vunpack.c.l.b16 %v1155
  %v1228 = vunpack.c.l.b16 %v1156
  %v1229 = vunpack.c.l.b16 %v1157
  %v1230 = vunpack.c.l.b16 %v1158
  %v1231 = vunpack.c.l.b16 %v1159
  %v1232 = vunpack.c.l.b16 %v1160
  %v1233 = vunpack.c.l.b16 %v1161
  %v1234 = vunpack.c.l.b16 %v1162
  %v1235 = vunpack.c.l.b16 %v1163
  %v1236 = vunpack.c.l.b16 %v1164
  %v1237 = vunpack.c.l.b16 %v1165
  %v1238 = vunpack.c.l.b16 %v1166
  %v1239 = vunpack.c.l.b16 %v1167
  %v1240 = vunpack.c.l.b16 %v1168
  %v1241 = vunpack.c.l.b16 %v1169
  %v1242 = vunpack.c.l.b16 %v1170
  %v1243 = vunpack.c.l.b16 %v1171
  %v1244 = vunpack.c.l.b16 %v1172
  %v1245 = vunpack.c.l.b16 %v1173
  %v1246 = vunpack.c.l.b16 %v1174
  %v1247 = vunpack.c.l.b16 %v1175
  %v1248 = vunpack.c.l.b16 %v1176
  %v1249 = vunpack.c.l.b16 %v1177
  %v1250 = vunpack.c.l.b16 %v1178
  %v1251 = vunpack.c.l.b16 %v1179
  %v1252 = vunpack.c.l.b16 %v1180
  %v1253 = vunpack.c.l.b16 %v1181
  %v1254 = vunpack.c.l.b16 %v1182
  %v1255 = vunpack.c.l.b16 %v1183
  %v1256 = vpack.c.b16 %v1221, %v1220
  %v1257 = vpack.c.b16 %v1223, %v1222
  %v1258 = vpack.c.b16 %v1225, %v1224
  %v1259 = vpack.c.b16 %v1227, %v1226
  %v1260 = vpack.c.b16 %v1229, %v1228
  %v1261 = vpack.c.b16 %v1231, %v1230
  %v1262 = vpack.c.b16 %v1233, %v1232
  %v1263 = vpack.c.b16 %v1235, %v1234
  %v1264 = vpack.c.b16 %v1237, %v1236
  %v1265 = vpack.c.b16 %v1239, %v1238
  %v1266 = vpack.c.b16 %v1241, %v1240
  %v1267 = vpack.c.b16 %v1243, %v1242
  %v1268 = vpack.c.b16 %v1245, %v1244
  %v1269 = vpack.c.b16 %v1247, %v1246
  %v1270 = vpack.c.b16 %v1249, %v1248
  %v1271 = vpack.c.b16 %v1251, %v1250
  %v1272 = vpack.c.b16 %v1253, %v1252
  %v1273 = vpack.c.b16 %v1255, %v1254
  %v1275 = vsel %vm166, %v1256, 0
  %v1278 = vsel %vm166, %v1257, 0
  %v1281 = vsel %vm166, %v1258, 0
  %v1284 = vsel %vm166, %v1259, 0
  %v1287 = vsel %vm166, %v1260, 0
  %v1290 = vsel %vm166, %v1261, 0
  %v1293 = vsel %vm166, %v1262, 0
  %v1296 = vsel %vm166, %v1263, 0
  %v1299 = vsel %vm166, %v1264, 0
  %v1302 = vsel %vm166, %v1265, 0
  %v1305 = vsel %vm166, %v1266, 0
  %v1308 = vsel %vm166, %v1267, 0
  %v1311 = vsel %vm166, %v1268, 0
  %v1314 = vsel %vm166, %v1269, 0
  %v1317 = vsel %vm166, %v1270, 0
  %v1320 = vsel %vm166, %v1271, 0
  %v1323 = vsel %vm166, %v1272, 0
  %v1326 = vsel %vm166, %v1273, 0
  %1328 = vmatprep.subr.bf16.mxu0 0
  %1329 = vmatpush1.bf16.msra.mxu0 %v162
  %1330 = vmatprep.subr.bf16.mxu0 0
  %1331 = vmatpush1.bf16.msra.mxu0 %v163
  %1332 = vmatprep.subr.bf16.mxu0 0
  %1333 = vmatpush1.bf16.msra.mxu0 0
  %1334 = vmatprep.subr.bf16.mxu0 0
  %1335 = vmatpush1.bf16.msra.mxu0 0
  %1336 = vmatprep.subr.bf16.mxu0 0
  %1337 = vmatpush1.bf16.msra.mxu0 0
  %1338 = vmatprep.subr.bf16.mxu0 0
  %1339 = vmatpush1.bf16.msra.mxu0 0
  %1340 = vmatprep.subr.bf16.mxu0 0
  %1341 = vmatpush1.bf16.msra.mxu0 0
  %1342 = vmatprep.subr.bf16.mxu0 0
  %1343 = vmatpush1.bf16.msra.mxu0 0
  %1344 = vmatprep.subr.bf16.mxu0 0
  %1345 = vmatpush1.bf16.msra.mxu0 0
  %1346 = vmatprep.subr.bf16.mxu0 0
  %1347 = vmatpush1.bf16.msra.mxu0 0
  %1348 = vmatprep.subr.bf16.mxu0 0
  %1349 = vmatpush1.bf16.msra.mxu0 0
  %1350 = vmatprep.subr.bf16.mxu0 0
  %1351 = vmatpush1.bf16.msra.mxu0 0
  %1352 = vmatprep.subr.bf16.mxu0 0
  %1353 = vmatpush1.bf16.msra.mxu0 0
  %1354 = vmatprep.subr.bf16.mxu0 0
  %1355 = vmatpush1.bf16.msra.mxu0 0
  %1356 = vmatprep.subr.bf16.mxu0 0
  %1357 = vmatpush1.bf16.msra.mxu0 0
  %1358 = vmatprep.subr.bf16.mxu0 0
  %1359 = vmatpush1.bf16.msra.mxu0 0
  %1360 = vmatprep.mubr.bf16.mxu0 0
  %1361 = vmatmul.mubr.bf16.gmra.mrb[0].mxu0 %v1275
  %v1362 = vpop.f32.mrb[0].mxu0
  %v1363 = vadd.f32 0.0, %v1362
  %v1364 = vpop.f32.mrb[0].mxu0
  %v1365 = vpop.f32.mrb[0].mxu0
  %v1366 = vadd.f32 0.0, %v1365
  %v1367 = vpop.f32.mrb[0].mxu0
  %1368 = vmatprep.mubr.bf16.mxu0 0
  %1369 = vmatmul.mubr.bf16.gmra.mrb[0].mxu0 %v1278
  %v1370 = vpop.f32.mrb[0].mxu0
  %v1371 = vadd.f32 0.0, %v1370
  %v1372 = vpop.f32.mrb[0].mxu0
  %v1373 = vpop.f32.mrb[0].mxu0
  %v1374 = vadd.f32 0.0, %v1373
  %v1375 = vpop.f32.mrb[0].mxu0
  %1376 = vmatprep.mubr.bf16.mxu0 0
  %1377 = vmatmul.mubr.bf16.gmra.mrb[0].mxu0 %v1281
  %v1378 = vpop.f32.mrb[0].mxu0
  %v1379 = vadd.f32 0.0, %v1378
  %v1380 = vpop.f32.mrb[0].mxu0
  %v1381 = vpop.f32.mrb[0].mxu0
  %v1382 = vadd.f32 0.0, %v1381
  %v1383 = vpop.f32.mrb[0].mxu0
  %1384 = vmatprep.mubr.bf16.mxu0 0
  %1385 = vmatmul.mubr.bf16.gmra.mrb[0].mxu0 %v1284
  %v1386 = vpop.f32.mrb[0].mxu0
  %v1387 = vadd.f32 0.0, %v1386
  %v1388 = vpop.f32.mrb[0].mxu0
  %v1389 = vpop.f32.mrb[0].mxu0
  %v1390 = vadd.f32 0.0, %v1389
  %v1391 = vpop.f32.mrb[0].mxu0
  %1392 = vmatprep.mubr.bf16.mxu0 0
  %1393 = vmatmul.mubr.bf16.gmra.mrb[0].mxu0 %v1287
  %v1394 = vpop.f32.mrb[0].mxu0
  %v1395 = vadd.f32 0.0, %v1394
  %v1396 = vpop.f32.mrb[0].mxu0
  %v1397 = vpop.f32.mrb[0].mxu0
  %v1398 = vadd.f32 0.0, %v1397
  %v1399 = vpop.f32.mrb[0].mxu0
  %1400 = vmatprep.mubr.bf16.mxu0 0
  %1401 = vmatmul.mubr.bf16.gmra.mrb[0].mxu0 %v1290
  %v1402 = vpop.f32.mrb[0].mxu0
  %v1403 = vadd.f32 0.0, %v1402
  %v1404 = vpop.f32.mrb[0].mxu0
  %v1405 = vpop.f32.mrb[0].mxu0
  %v1406 = vadd.f32 0.0, %v1405
  %v1407 = vpop.f32.mrb[0].mxu0
  %1408 = vmatprep.mubr.bf16.mxu0 0
  %1409 = vmatmul.mubr.bf16.gmra.mrb[0].mxu0 %v1293
  %v1410 = vpop.f32.mrb[0].mxu0
  %v1411 = vadd.f32 0.0, %v1410
  %v1412 = vpop.f32.mrb[0].mxu0
  %v1413 = vpop.f32.mrb[0].mxu0
  %v1414 = vadd.f32 0.0, %v1413
  %v1415 = vpop.f32.mrb[0].mxu0
  %1416 = vmatprep.mubr.bf16.mxu0 0
  %1417 = vmatmul.mubr.bf16.gmra.mrb[0].mxu0 %v1296
  %v1418 = vpop.f32.mrb[0].mxu0
  %v1419 = vadd.f32 0.0, %v1418
  %v1420 = vpop.f32.mrb[0].mxu0
  %v1421 = vpop.f32.mrb[0].mxu0
  %v1422 = vadd.f32 0.0, %v1421
  %v1423 = vpop.f32.mrb[0].mxu0
  %1424 = vmatprep.mubr.bf16.mxu0 0
  %1425 = vmatmul.mubr.bf16.gmra.mrb[0].mxu0 %v1299
  %v1426 = vpop.f32.mrb[0].mxu0
  %v1427 = vadd.f32 0.0, %v1426
  %v1428 = vpop.f32.mrb[0].mxu0
  %v1429 = vpop.f32.mrb[0].mxu0
  %v1430 = vadd.f32 0.0, %v1429
  %v1431 = vpop.f32.mrb[0].mxu0
  %1432 = vmatprep.mubr.bf16.mxu0 0
  %1433 = vmatmul.mubr.bf16.gmra.mrb[0].mxu0 %v1302
  %v1434 = vpop.f32.mrb[0].mxu0
  %v1435 = vadd.f32 0.0, %v1434
  %v1436 = vpop.f32.mrb[0].mxu0
  %v1437 = vpop.f32.mrb[0].mxu0
  %v1438 = vadd.f32 0.0, %v1437
  %v1439 = vpop.f32.mrb[0].mxu0
  %1440 = vmatprep.mubr.bf16.mxu0 0
  %1441 = vmatmul.mubr.bf16.gmra.mrb[0].mxu0 %v1305
  %v1442 = vpop.f32.mrb[0].mxu0
  %v1443 = vadd.f32 0.0, %v1442
  %v1444 = vpop.f32.mrb[0].mxu0
  %v1445 = vpop.f32.mrb[0].mxu0
  %v1446 = vadd.f32 0.0, %v1445
  %v1447 = vpop.f32.mrb[0].mxu0
  %1448 = vmatprep.mubr.bf16.mxu0 0
  %1449 = vmatmul.mubr.bf16.gmra.mrb[0].mxu0 %v1308
  %v1450 = vpop.f32.mrb[0].mxu0
  %v1451 = vadd.f32 0.0, %v1450
  %v1452 = vpop.f32.mrb[0].mxu0
  %v1453 = vpop.f32.mrb[0].mxu0
  %v1454 = vadd.f32 0.0, %v1453
  %v1455 = vpop.f32.mrb[0].mxu0
  %1456 = vmatprep.mubr.bf16.mxu0 0
  %1457 = vmatmul.mubr.bf16.gmra.mrb[0].mxu0 %v1311
  %v1458 = vpop.f32.mrb[0].mxu0
  %v1459 = vadd.f32 0.0, %v1458
  %v1460 = vpop.f32.mrb[0].mxu0
  %v1461 = vpop.f32.mrb[0].mxu0
  %v1462 = vadd.f32 0.0, %v1461
  %v1463 = vpop.f32.mrb[0].mxu0
  %1464 = vmatprep.mubr.bf16.mxu0 0
  %1465 = vmatmul.mubr.bf16.gmra.mrb[0].mxu0 %v1314
  %v1466 = vpop.f32.mrb[0].mxu0
  %v1467 = vadd.f32 0.0, %v1466
  %v1468 = vpop.f32.mrb[0].mxu0
  %v1469 = vpop.f32.mrb[0].mxu0
  %v1470 = vadd.f32 0.0, %v1469
  %v1471 = vpop.f32.mrb[0].mxu0
  %1472 = vmatprep.mubr.bf16.mxu0 0
  %1473 = vmatmul.mubr.bf16.gmra.mrb[0].mxu0 %v1317
  %v1474 = vpop.f32.mrb[0].mxu0
  %v1475 = vadd.f32 0.0, %v1474
  %v1476 = vpop.f32.mrb[0].mxu0
  %v1477 = vpop.f32.mrb[0].mxu0
  %v1478 = vadd.f32 0.0, %v1477
  %v1479 = vpop.f32.mrb[0].mxu0
  %1480 = vmatprep.mubr.bf16.mxu0 0
  %1481 = vmatmul.mubr.bf16.gmra.mrb[0].mxu0 %v1320
  %v1482 = vpop.f32.mrb[0].mxu0
  %v1483 = vadd.f32 0.0, %v1482
  %v1484 = vpop.f32.mrb[0].mxu0
  %v1485 = vpop.f32.mrb[0].mxu0
  %v1486 = vadd.f32 0.0, %v1485
  %v1487 = vpop.f32.mrb[0].mxu0
  %1488 = vmatprep.mubr.bf16.mxu0 0
  %1489 = vmatmul.mubr.bf16.gmra.mrb[0].mxu0 %v1323
  %v1490 = vpop.f32.mrb[0].mxu0
  %v1491 = vadd.f32 0.0, %v1490
  %v1492 = vpop.f32.mrb[0].mxu0
  %v1493 = vpop.f32.mrb[0].mxu0
  %v1494 = vadd.f32 0.0, %v1493
  %v1495 = vpop.f32.mrb[0].mxu0
  %1496 = vmatprep.mubr.bf16.mxu0 0
  %1497 = vmatmul.mubr.bf16.gmra.mrb[0].mxu0 %v1326
  %v1498 = vpop.f32.mrb[0].mxu0
  %v1499 = vadd.f32 0.0, %v1498
  %v1500 = vpop.f32.mrb[0].mxu0
  %v1501 = vpop.f32.mrb[0].mxu0
  %v1502 = vadd.f32 0.0, %v1501
  %v1503 = vpop.f32.mrb[0].mxu0
  %1504 = vdwg.mxu0
  %v1505 = vmax.f32 %v1006, %v1363
  %v1506 = vmax.f32 %v1009, %v1366
  %v1507 = vmax.f32 %v1014, %v1371
  %v1508 = vmax.f32 %v1017, %v1374
  %v1509 = vmax.f32 %v1022, %v1379
  %v1510 = vmax.f32 %v1025, %v1382
  %v1511 = vmax.f32 %v1030, %v1387
  %v1512 = vmax.f32 %v1033, %v1390
  %v1513 = vmax.f32 %v1038, %v1395
  %v1514 = vmax.f32 %v1041, %v1398
  %v1515 = vmax.f32 %v1046, %v1403
  %v1516 = vmax.f32 %v1049, %v1406
  %v1517 = vmax.f32 %v1054, %v1411
  %v1518 = vmax.f32 %v1057, %v1414
  %v1519 = vmax.f32 %v1062, %v1419
  %v1520 = vmax.f32 %v1065, %v1422
  %v1521 = vmax.f32 %v1070, %v1427
  %v1522 = vmax.f32 %v1073, %v1430
  %v1523 = vmax.f32 %v1078, %v1435
  %v1524 = vmax.f32 %v1081, %v1438
  %v1525 = vmax.f32 %v1086, %v1443
  %v1526 = vmax.f32 %v1089, %v1446
  %v1527 = vmax.f32 %v1094, %v1451
  %v1528 = vmax.f32 %v1097, %v1454
  %v1529 = vmax.f32 %v1102, %v1459
  %v1530 = vmax.f32 %v1105, %v1462
  %v1531 = vmax.f32 %v1110, %v1467
  %v1532 = vmax.f32 %v1113, %v1470
  %v1533 = vmax.f32 %v1118, %v1475
  %v1534 = vmax.f32 %v1121, %v1478
  %v1535 = vmax.f32 %v1126, %v1483
  %v1536 = vmax.f32 %v1129, %v1486
  %v1537 = vmax.f32 %v1134, %v1491
  %v1538 = vmax.f32 %v1137, %v1494
  %v1539 = vmax.f32 %v1142, %v1499
  %v1540 = vmax.f32 %v1145, %v1502
  %v1541 = vmax.f32 %v755, %v1505
  %v1542 = vmax.f32 %v756, %v1506
  %v1543 = vmax.f32 %v757, %v1507
  %v1544 = vmax.f32 %v758, %v1508
  %v1545 = vmax.f32 %v759, %v1509
  %v1546 = vmax.f32 %v760, %v1510
  %v1547 = vmax.f32 %v761, %v1511
  %v1548 = vmax.f32 %v762, %v1512
  %v1549 = vmax.f32 %v763, %v1513
  %v1550 = vmax.f32 %v764, %v1514
  %v1551 = vmax.f32 %v765, %v1515
  %v1552 = vmax.f32 %v766, %v1516
  %v1553 = vmax.f32 %v767, %v1517
  %v1554 = vmax.f32 %v768, %v1518
  %v1555 = vmax.f32 %v769, %v1519
  %v1556 = vmax.f32 %v770, %v1520
  %v1557 = vmax.f32 %v771, %v1521
  %v1558 = vmax.f32 %v772, %v1522
  %v1559 = vmax.f32 %v773, %v1523
  %v1560 = vmax.f32 %v774, %v1524
  %v1561 = vmax.f32 %v775, %v1525
  %v1562 = vmax.f32 %v776, %v1526
  %v1563 = vmax.f32 %v777, %v1527
  %v1564 = vmax.f32 %v778, %v1528
  %v1565 = vmax.f32 %v779, %v1529
  %v1566 = vmax.f32 %v780, %v1530
  %v1567 = vmax.f32 %v781, %v1531
  %v1568 = vmax.f32 %v782, %v1532
  %v1569 = vmax.f32 %v783, %v1533
  %v1570 = vmax.f32 %v784, %v1534
  %v1571 = vmax.f32 %v785, %v1535
  %v1572 = vmax.f32 %v786, %v1536
  %v1573 = vmax.f32 %v787, %v1537
  %v1574 = vmax.f32 %v788, %v1538
  %v1575 = vmax.f32 %v789, %v1539
  %v1576 = vmax.f32 %v790, %v1540
  %v1577 = vld [vmem:[%s5] sm:$0x1]
  %v1579 = vlaneseq
  %v1580 = vshrl.u32 %v1579, 7
  %v1581 = vsub.s32 0, %v1580
  %v1582 = vrot.slane %v1577, %v1581
  %v1584 = vadd.f32 %v1541, %v1582
  %v1585 = vadd.f32 %v1542, %v1582
  %v1586 = vadd.f32 %v1543, %v1582
  %v1587 = vadd.f32 %v1544, %v1582
  %v1588 = vadd.f32 %v1545, %v1582
  %v1589 = vadd.f32 %v1546, %v1582
  %v1590 = vadd.f32 %v1547, %v1582
  %v1591 = vadd.f32 %v1548, %v1582
  %v1592 = vadd.f32 %v1549, %v1582
  %v1593 = vadd.f32 %v1550, %v1582
  %v1594 = vadd.f32 %v1551, %v1582
  %v1595 = vadd.f32 %v1552, %v1582
  %v1596 = vadd.f32 %v1553, %v1582
  %v1597 = vadd.f32 %v1554, %v1582
  %v1598 = vadd.f32 %v1555, %v1582
  %v1599 = vadd.f32 %v1556, %v1582
  %v1600 = vadd.f32 %v1557, %v1582
  %v1601 = vadd.f32 %v1558, %v1582
  %v1602 = vadd.f32 %v1559, %v1582
  %v1603 = vadd.f32 %v1560, %v1582
  %v1604 = vadd.f32 %v1561, %v1582
  %v1605 = vadd.f32 %v1562, %v1582
  %v1606 = vadd.f32 %v1563, %v1582
  %v1607 = vadd.f32 %v1564, %v1582
  %v1608 = vadd.f32 %v1565, %v1582
  %v1609 = vadd.f32 %v1566, %v1582
  %v1610 = vadd.f32 %v1567, %v1582
  %v1611 = vadd.f32 %v1568, %v1582
  %v1612 = vadd.f32 %v1569, %v1582
  %v1613 = vadd.f32 %v1570, %v1582
  %v1614 = vadd.f32 %v1571, %v1582
  %v1615 = vadd.f32 %v1572, %v1582
  %v1616 = vadd.f32 %v1573, %v1582
  %v1617 = vadd.f32 %v1574, %v1582
  %v1618 = vadd.f32 %v1575, %v1582
  %v1619 = vadd.f32 %v1576, %v1582
  %v1620 = vmax.f32 %v1584, 0.0
  %v1621 = vmax.f32 %v1585, 0.0
  %v1622 = vmax.f32 %v1586, 0.0
  %v1623 = vmax.f32 %v1587, 0.0
  %v1624 = vmax.f32 %v1588, 0.0
  %v1625 = vmax.f32 %v1589, 0.0
  %v1626 = vmax.f32 %v1590, 0.0
  %v1627 = vmax.f32 %v1591, 0.0
  %v1628 = vmax.f32 %v1592, 0.0
  %v1629 = vmax.f32 %v1593, 0.0
  %v1630 = vmax.f32 %v1594, 0.0
  %v1631 = vmax.f32 %v1595, 0.0
  %v1632 = vmax.f32 %v1596, 0.0
  %v1633 = vmax.f32 %v1597, 0.0
  %v1634 = vmax.f32 %v1598, 0.0
  %v1635 = vmax.f32 %v1599, 0.0
  %v1636 = vmax.f32 %v1600, 0.0
  %v1637 = vmax.f32 %v1601, 0.0
  %v1638 = vmax.f32 %v1602, 0.0
  %v1639 = vmax.f32 %v1603, 0.0
  %v1640 = vmax.f32 %v1604, 0.0
  %v1641 = vmax.f32 %v1605, 0.0
  %v1642 = vmax.f32 %v1606, 0.0
  %v1643 = vmax.f32 %v1607, 0.0
  %v1644 = vmax.f32 %v1608, 0.0
  %v1645 = vmax.f32 %v1609, 0.0
  %v1646 = vmax.f32 %v1610, 0.0
  %v1647 = vmax.f32 %v1611, 0.0
  %v1648 = vmax.f32 %v1612, 0.0
  %v1649 = vmax.f32 %v1613, 0.0
  %v1650 = vmax.f32 %v1614, 0.0
  %v1651 = vmax.f32 %v1615, 0.0
  %v1652 = vmax.f32 %v1616, 0.0
  %v1653 = vmax.f32 %v1617, 0.0
  %v1654 = vmax.f32 %v1618, 0.0
  %v1655 = vmax.f32 %v1619, 0.0
  %v1656 = vpack.c.bf16 %v1621, %v1620
  %v1657 = vpack.c.bf16 %v1623, %v1622
  %v1658 = vpack.c.bf16 %v1625, %v1624
  %v1659 = vpack.c.bf16 %v1627, %v1626
  %v1660 = vpack.c.bf16 %v1629, %v1628
  %v1661 = vpack.c.bf16 %v1631, %v1630
  %v1662 = vpack.c.bf16 %v1633, %v1632
  %v1663 = vpack.c.bf16 %v1635, %v1634
  %v1664 = vpack.c.bf16 %v1637, %v1636
  %v1665 = vpack.c.bf16 %v1639, %v1638
  %v1666 = vpack.c.bf16 %v1641, %v1640
  %v1667 = vpack.c.bf16 %v1643, %v1642
  %v1668 = vpack.c.bf16 %v1645, %v1644
  %v1669 = vpack.c.bf16 %v1647, %v1646
  %v1670 = vpack.c.bf16 %v1649, %v1648
  %v1671 = vpack.c.bf16 %v1651, %v1650
  %v1672 = vpack.c.bf16 %v1653, %v1652
  %v1673 = vpack.c.bf16 %v1655, %v1654
  %v1692 = vunpack.c.l.b16 %v1656
  %v1693 = vunpack.c.h.b16 %v1656
  %v1694 = vunpack.c.l.b16 %v1657
  %v1695 = vunpack.c.h.b16 %v1657
  %v1696 = vunpack.c.l.b16 %v1658
  %v1697 = vunpack.c.h.b16 %v1658
  %v1698 = vunpack.c.l.b16 %v1659
  %v1699 = vunpack.c.h.b16 %v1659
  %v1700 = vunpack.c.l.b16 %v1660
  %v1701 = vunpack.c.h.b16 %v1660
  %v1702 = vunpack.c.l.b16 %v1661
  %v1703 = vunpack.c.h.b16 %v1661
  %v1704 = vunpack.c.l.b16 %v1662
  %v1705 = vunpack.c.h.b16 %v1662
  %v1706 = vunpack.c.l.b16 %v1663
  %v1707 = vunpack.c.h.b16 %v1663
  %v1708 = vunpack.c.l.b16 %v1664
  %v1709 = vunpack.c.h.b16 %v1664
  %v1710 = vunpack.c.l.b16 %v1665
  %v1711 = vunpack.c.h.b16 %v1665
  %v1712 = vunpack.c.l.b16 %v1666
  %v1713 = vunpack.c.h.b16 %v1666
  %v1714 = vunpack.c.l.b16 %v1667
  %v1715 = vunpack.c.h.b16 %v1667
  %v1716 = vunpack.c.l.b16 %v1668
  %v1717 = vunpack.c.h.b16 %v1668
  %v1718 = vunpack.c.l.b16 %v1669
  %v1719 = vunpack.c.h.b16 %v1669
  %v1720 = vunpack.c.l.b16 %v1670
  %v1721 = vunpack.c.h.b16 %v1670
  %v1722 = vunpack.c.l.b16 %v1671
  %v1723 = vunpack.c.h.b16 %v1671
  %v1724 = vunpack.c.l.b16 %v1672
  %v1725 = vunpack.c.h.b16 %v1672
  %v1726 = vunpack.c.l.b16 %v1673
  %v1727 = vunpack.c.h.b16 %v1673
  %v1728 = vpack.c.b16 %v1692, %v1692
  %v1729 = vpack.c.b16 %v1693, %v1693
  %v1730 = vpack.c.b16 %v1694, %v1694
  %v1731 = vpack.c.b16 %v1695, %v1695
  %v1732 = vpack.c.b16 %v1696, %v1696
  %v1733 = vpack.c.b16 %v1697, %v1697
  %v1734 = vpack.c.b16 %v1698, %v1698
  %v1735 = vpack.c.b16 %v1699, %v1699
  %v1736 = vpack.c.b16 %v1700, %v1700
  %v1737 = vpack.c.b16 %v1701, %v1701
  %v1738 = vpack.c.b16 %v1702, %v1702
  %v1739 = vpack.c.b16 %v1703, %v1703
  %v1740 = vpack.c.b16 %v1704, %v1704
  %v1741 = vpack.c.b16 %v1705, %v1705
  %v1742 = vpack.c.b16 %v1706, %v1706
  %v1743 = vpack.c.b16 %v1707, %v1707
  %v1744 = vpack.c.b16 %v1708, %v1708
  %v1745 = vpack.c.b16 %v1709, %v1709
  %v1746 = vpack.c.b16 %v1710, %v1710
  %v1747 = vpack.c.b16 %v1711, %v1711
  %v1748 = vpack.c.b16 %v1712, %v1712
  %v1749 = vpack.c.b16 %v1713, %v1713
  %v1750 = vpack.c.b16 %v1714, %v1714
  %v1751 = vpack.c.b16 %v1715, %v1715
  %v1752 = vpack.c.b16 %v1716, %v1716
  %v1753 = vpack.c.b16 %v1717, %v1717
  %v1754 = vpack.c.b16 %v1718, %v1718
  %v1755 = vpack.c.b16 %v1719, %v1719
  %v1756 = vpack.c.b16 %v1720, %v1720
  %v1757 = vpack.c.b16 %v1721, %v1721
  %v1758 = vpack.c.b16 %v1722, %v1722
  %v1759 = vpack.c.b16 %v1723, %v1723
  %v1760 = vpack.c.b16 %v1724, %v1724
  %v1761 = vpack.c.b16 %v1725, %v1725
  %v1762 = vpack.c.b16 %v1726, %v1726
  %v1763 = vpack.c.b16 %v1727, %v1727
  %1800 = vst [vmem:[%s6] sm:$0xf] %v1728
  %1801 = vst [vmem:[%s6 + $0x4] sm:$0xf] %v1729
  %1802 = vst [vmem:[%s6 + $0x8] sm:$0xf] %v1730
  %1803 = vst [vmem:[%s6 + $0xc] sm:$0xf] %v1731
  %1804 = vst [vmem:[%s6 + $0x10] sm:$0xf] %v1732
  %1805 = vst [vmem:[%s6 + $0x14] sm:$0xf] %v1733
  %1806 = vst [vmem:[%s6 + $0x18] sm:$0xf] %v1734
  %1807 = vst [vmem:[%s6 + $0x1c] sm:$0xf] %v1735
  %1808 = vst [vmem:[%s6 + $0x20] sm:$0xf] %v1736
  %1809 = vst [vmem:[%s6 + $0x24] sm:$0xf] %v1737
  %1810 = vst [vmem:[%s6 + $0x28] sm:$0xf] %v1738
  %1811 = vst [vmem:[%s6 + $0x2c] sm:$0xf] %v1739
  %1812 = vst [vmem:[%s6 + $0x30] sm:$0xf] %v1740
  %1813 = vst [vmem:[%s6 + $0x34] sm:$0xf] %v1741
  %1814 = vst [vmem:[%s6 + $0x38] sm:$0xf] %v1742
  %1815 = vst [vmem:[%s6 + $0x3c] sm:$0xf] %v1743
  %1816 = vst [vmem:[%s6 + $0x40] sm:$0xf] %v1744
  %1817 = vst [vmem:[%s6 + $0x44] sm:$0xf] %v1745
  %1818 = vst [vmem:[%s6 + $0x48] sm:$0xf] %v1746
  %1819 = vst [vmem:[%s6 + $0x4c] sm:$0xf] %v1747
  %1820 = vst [vmem:[%s6 + $0x50] sm:$0xf] %v1748
  %1821 = vst [vmem:[%s6 + $0x54] sm:$0xf] %v1749
  %1822 = vst [vmem:[%s6 + $0x58] sm:$0xf] %v1750
  %1823 = vst [vmem:[%s6 + $0x5c] sm:$0xf] %v1751
  %1824 = vst [vmem:[%s6 + $0x60] sm:$0xf] %v1752
  %1825 = vst [vmem:[%s6 + $0x64] sm:$0xf] %v1753
  %1826 = vst [vmem:[%s6 + $0x68] sm:$0xf] %v1754
  %1827 = vst [vmem:[%s6 + $0x6c] sm:$0xf] %v1755
  %1828 = vst [vmem:[%s6 + $0x70] sm:$0xf] %v1756
  %1829 = vst [vmem:[%s6 + $0x74] sm:$0xf] %v1757
  %1830 = vst [vmem:[%s6 + $0x78] sm:$0xf] %v1758
  %1831 = vst [vmem:[%s6 + $0x7c] sm:$0xf] %v1759
  %1832 = vst [vmem:[%s6 + $0x80] sm:$0xf] %v1760
  %1833 = vst [vmem:[%s6 + $0x84] sm:$0xf] %v1761
  %1834 = vst [vmem:[%s6 + $0x88] sm:$0xf] %v1762
  %1835 = vst [vmem:[%s6 + $0x8c] sm:$0xf] %v1763
  // Predicated region
  $region26: #{net_forward.3} parent=0 // pred_check
    _
  $region27: #{net_forward.3} parent=0 // pred_check_branch
    %1837 = sbr.rel (0) target = $region29
  $region28: #{net_forward.3} parent=0 // pred_region
    _
  $region29: #{net_forward.3} parent=0 // pred_fallthru
    _
  // Predicated region
  $region30: #{net_forward.3} parent=0 // pred_check
    _
  $region31: #{net_forward.3} parent=0 // pred_check_branch
    %1839 = sbr.rel (0) target = $region33
  $region32: #{net_forward.3} parent=0 // pred_region
    _
  $region33: #{net_forward.3} parent=0 // pred_fallthru
    _

// kernel: net_forward.4
$region0: #{net_forward.4}
  #allocation0 [shape = 'u32[]', space=smem, size = 0x4, offset = 0x4, fixed_abs, tag = 'smem constant byte address 0x4 - core index']
  #allocation1 [shape = 'u32[144,128]{1,0:T(1,128)}', space=vmem, size = 0x12000, scoped, tag = 'internal scratch']
  %s0 = inlined_call_operand.vmem [shape: bf16[32,256], index: 0, kind: input, shape index: {}]
  %s1 = inlined_call_operand.vmem [shape: bf16[32,256], index: 1, kind: input, shape index: {}]
  %s2 = inlined_call_operand.vmem [shape: bf16[32,256], index: 2, kind: input, shape index: {}]
  %s3 = inlined_call_operand.vmem [shape: bf16[32,256], index: 3, kind: input, shape index: {}]
  %s4 = inlined_call_operand.vmem [shape: bf16[256,128], index: 4, kind: input, shape index: {}]
  %s5 = inlined_call_operand.vmem [shape: f32[1,128], index: 5, kind: input, shape index: {}]
  %s6 = inlined_call_operand.vmem [shape: bf16[32,128], index: 6, kind: output, shape index: {}]
  %s7 = sld [smem:[#allocation0]]
  $region34: #{net_forward.4} parent=0
    _
  %s9 = ssub.s32 1, %s7
  %s10 = scalar_select 0, %s9, %s7
  // Predicated region
  $region2: #{net_forward.4} parent=0 // pred_check
    _
  $region3: #{net_forward.4} parent=0 // pred_check_branch
    %12 = sbr.rel (0) target = $region5
  $region4: #{net_forward.4} parent=0 // pred_region
    _
  $region5: #{net_forward.4} parent=0 // pred_fallthru
    _
  // Predicated region
  $region6: #{net_forward.4} parent=0 // pred_check
    _
  $region7: #{net_forward.4} parent=0 // pred_check_branch
    %14 = sbr.rel (0) target = $region9
  $region8: #{net_forward.4} parent=0 // pred_region
    _
  $region9: #{net_forward.4} parent=0 // pred_fallthru
    _
  // Predicated region
  $region10: #{net_forward.4} parent=0 // pred_check
    _
  $region11: #{net_forward.4} parent=0 // pred_check_branch
    %16 = sbr.rel (0) target = $region13
  $region12: #{net_forward.4} parent=0 // pred_region
    _
  $region13: #{net_forward.4} parent=0 // pred_fallthru
    _
  // Predicated region
  $region14: #{net_forward.4} parent=0 // pred_check
    _
  $region15: #{net_forward.4} parent=0 // pred_check_branch
    %18 = sbr.rel (0) target = $region17
  $region16: #{net_forward.4} parent=0 // pred_region
    _
  $region17: #{net_forward.4} parent=0 // pred_fallthru
    _
  // Predicated region
  $region18: #{net_forward.4} parent=0 // pred_check
    _
  $region19: #{net_forward.4} parent=0 // pred_check_branch
    %20 = sbr.rel (0) target = $region21
  $region20: #{net_forward.4} parent=0 // pred_region
    _
  $region21: #{net_forward.4} parent=0 // pred_fallthru
    _
  // Predicated region
  $region22: #{net_forward.4} parent=0 // pred_check
    _
  $region23: #{net_forward.4} parent=0 // pred_check_branch
    %22 = sbr.rel (0) target = $region25
  $region24: #{net_forward.4} parent=0 // pred_region
    _
  $region25: #{net_forward.4} parent=0 // pred_fallthru
    _
  %v24 = vld [vmem:[%s4] sm:$0xf]
  %v25 = vld [vmem:[%s4 + $0x4] sm:$0xf]
  %v26 = vld [vmem:[%s4 + $0x8] sm:$0xf]
  %v27 = vld [vmem:[%s4 + $0xc] sm:$0xf]
  %v28 = vld [vmem:[%s4 + $0x10] sm:$0xf]
  %v29 = vld [vmem:[%s4 + $0x14] sm:$0xf]
  %v30 = vld [vmem:[%s4 + $0x18] sm:$0xf]
  %v31 = vld [vmem:[%s4 + $0x1c] sm:$0xf]
  %v32 = vld [vmem:[%s4 + $0x20] sm:$0xf]
  %v33 = vld [vmem:[%s4 + $0x24] sm:$0xf]
  %v34 = vld [vmem:[%s4 + $0x28] sm:$0xf]
  %v35 = vld [vmem:[%s4 + $0x2c] sm:$0xf]
  %v36 = vld [vmem:[%s4 + $0x30] sm:$0xf]
  %v37 = vld [vmem:[%s4 + $0x34] sm:$0xf]
  %v38 = vld [vmem:[%s4 + $0x38] sm:$0xf]
  %v39 = vld [vmem:[%s4 + $0x3c] sm:$0xf]
  %v40 = vld [vmem:[%s4 + $0x40] sm:$0xf]
  %v41 = vld [vmem:[%s4 + $0x44] sm:$0xf]
  %v42 = vld [vmem:[%s4 + $0x48] sm:$0xf]
  %v43 = vld [vmem:[%s4 + $0x4c] sm:$0xf]
  %v44 = vld [vmem:[%s4 + $0x50] sm:$0xf]
  %v45 = vld [vmem:[%s4 + $0x54] sm:$0xf]
  %v46 = vld [vmem:[%s4 + $0x58] sm:$0xf]
  %v47 = vld [vmem:[%s4 + $0x5c] sm:$0xf]
  %v48 = vld [vmem:[%s4 + $0x60] sm:$0xf]
  %v49 = vld [vmem:[%s4 + $0x64] sm:$0xf]
  %v50 = vld [vmem:[%s4 + $0x68] sm:$0xf]
  %v51 = vld [vmem:[%s4 + $0x6c] sm:$0xf]
  %v52 = vld [vmem:[%s4 + $0x70] sm:$0xf]
  %v53 = vld [vmem:[%s4 + $0x74] sm:$0xf]
  %v54 = vld [vmem:[%s4 + $0x78] sm:$0xf]
  %v55 = vld [vmem:[%s4 + $0x7c] sm:$0xf]
  %v56 = vld [vmem:[%s0] sm:$0xff]
  %v57 = vld [vmem:[%s0 + $0x8] sm:$0xff]
  %v58 = vld [vmem:[%s0 + $0x10] sm:$0xff]
  %v59 = vld [vmem:[%s0 + $0x18] sm:$0xff]
  %v64 = vunpack.c.l.b16 %v56
  %v65 = vunpack.c.h.b16 %v56
  %v66 = vunpack.c.l.b16 %v57
  %v67 = vunpack.c.h.b16 %v57
  %v68 = vunpack.c.l.b16 %v58
  %v69 = vunpack.c.h.b16 %v58
  %v70 = vunpack.c.l.b16 %v59
  %v71 = vunpack.c.h.b16 %v59
  %v72 = vpack.c.b16 %v66, %v64
  %v73 = vpack.c.b16 %v67, %v65
  %v74 = vpack.c.b16 %v70, %v68
  %v75 = vpack.c.b16 %v71, %v69
  %v112 = vunpack.c.l.b16 %v24
  %v113 = vunpack.c.l.b16 %v25
  %v114 = vunpack.c.l.b16 %v26
  %v115 = vunpack.c.l.b16 %v27
  %v116 = vunpack.c.l.b16 %v28
  %v117 = vunpack.c.l.b16 %v29
  %v118 = vunpack.c.l.b16 %v30
  %v119 = vunpack.c.l.b16 %v31
  %v120 = vunpack.c.l.b16 %v32
  %v121 = vunpack.c.l.b16 %v33
  %v122 = vunpack.c.l.b16 %v34
  %v123 = vunpack.c.l.b16 %v35
  %v124 = vunpack.c.l.b16 %v36
  %v125 = vunpack.c.l.b16 %v37
  %v126 = vunpack.c.l.b16 %v38
  %v127 = vunpack.c.l.b16 %v39
  %v128 = vunpack.c.l.b16 %v40
  %v129 = vunpack.c.l.b16 %v41
  %v130 = vunpack.c.l.b16 %v42
  %v131 = vunpack.c.l.b16 %v43
  %v132 = vunpack.c.l.b16 %v44
  %v133 = vunpack.c.l.b16 %v45
  %v134 = vunpack.c.l.b16 %v46
  %v135 = vunpack.c.l.b16 %v47
  %v136 = vunpack.c.l.b16 %v48
  %v137 = vunpack.c.l.b16 %v49
  %v138 = vunpack.c.l.b16 %v50
  %v139 = vunpack.c.l.b16 %v51
  %v140 = vunpack.c.l.b16 %v52
  %v141 = vunpack.c.l.b16 %v53
  %v142 = vunpack.c.l.b16 %v54
  %v143 = vunpack.c.l.b16 %v55
  %v144 = vpack.c.b16 %v113, %v112
  %v145 = vpack.c.b16 %v115, %v114
  %v146 = vpack.c.b16 %v117, %v116
  %v147 = vpack.c.b16 %v119, %v118
  %v148 = vpack.c.b16 %v121, %v120
  %v149 = vpack.c.b16 %v123, %v122
  %v150 = vpack.c.b16 %v125, %v124
  %v151 = vpack.c.b16 %v127, %v126
  %v152 = vpack.c.b16 %v129, %v128
  %v153 = vpack.c.b16 %v131, %v130
  %v154 = vpack.c.b16 %v133, %v132
  %v155 = vpack.c.b16 %v135, %v134
  %v156 = vpack.c.b16 %v137, %v136
  %v157 = vpack.c.b16 %v139, %v138
  %v158 = vpack.c.b16 %v141, %v140
  %v159 = vpack.c.b16 %v143, %v142
  %176 = vmatprep.subr.bf16.mxu0 0
  %177 = vmatpush1.bf16.msra.mxu0 %v144
  %178 = vmatprep.subr.bf16.mxu0 0
  %179 = vmatpush1.bf16.msra.mxu0 %v145
  %180 = vmatprep.subr.bf16.mxu0 0
  %181 = vmatpush1.bf16.msra.mxu0 %v146
  %182 = vmatprep.subr.bf16.mxu0 0
  %183 = vmatpush1.bf16.msra.mxu0 %v147
  %184 = vmatprep.subr.bf16.mxu0 0
  %185 = vmatpush1.bf16.msra.mxu0 %v148
  %186 = vmatprep.subr.bf16.mxu0 0
  %187 = vmatpush1.bf16.msra.mxu0 %v149
  %188 = vmatprep.subr.bf16.mxu0 0
  %189 = vmatpush1.bf16.msra.mxu0 %v150
  %190 = vmatprep.subr.bf16.mxu0 0
  %191 = vmatpush1.bf16.msra.mxu0 %v151
  %192 = vmatprep.subr.bf16.mxu0 0
  %193 = vmatpush1.bf16.msra.mxu0 %v152
  %194 = vmatprep.subr.bf16.mxu0 0
  %195 = vmatpush1.bf16.msra.mxu0 %v153
  %196 = vmatprep.subr.bf16.mxu0 0
  %197 = vmatpush1.bf16.msra.mxu0 %v154
  %198 = vmatprep.subr.bf16.mxu0 0
  %199 = vmatpush1.bf16.msra.mxu0 %v155
  %200 = vmatprep.subr.bf16.mxu0 0
  %201 = vmatpush1.bf16.msra.mxu0 %v156
  %202 = vmatprep.subr.bf16.mxu0 0
  %203 = vmatpush1.bf16.msra.mxu0 %v157
  %204 = vmatprep.subr.bf16.mxu0 0
  %205 = vmatpush1.bf16.msra.mxu0 %v158
  %206 = vmatprep.subr.bf16.mxu0 0
  %207 = vmatpush1.bf16.msra.mxu0 %v159
  %208 = vmatprep.mubr.bf16.mxu0 %v73
  %209 = vmatmul.mubr.bf16.gmra.mrb[0].mxu0 %v72
  %v210 = vpop.f32.mrb[0].mxu0
  %v211 = vadd.f32 0.0, %v210
  %v212 = vpop.f32.mrb[0].mxu0
  %v213 = vpop.f32.mrb[0].mxu0
  %v214 = vadd.f32 0.0, %v213
  %v215 = vpop.f32.mrb[0].mxu0
  %216 = vmatprep.mubr.bf16.mxu0 %v75
  %217 = vmatmul.mubr.bf16.gmra.mrb[0].mxu0 %v74
  %v218 = vpop.f32.mrb[0].mxu0
  %v219 = vadd.f32 0.0, %v218
  %v220 = vpop.f32.mrb[0].mxu0
  %v221 = vpop.f32.mrb[0].mxu0
  %v222 = vadd.f32 0.0, %v221
  %v223 = vpop.f32.mrb[0].mxu0
  %224 = vdwg.mxu0
  %v225 = vld [vmem:[%s1] sm:$0xff]
  %v226 = vld [vmem:[%s1 + $0x8] sm:$0xff]
  %v227 = vld [vmem:[%s1 + $0x10] sm:$0xff]
  %v228 = vld [vmem:[%s1 + $0x18] sm:$0xff]
  %v233 = vunpack.c.l.b16 %v225
  %v234 = vunpack.c.h.b16 %v225
  %v235 = vunpack.c.l.b16 %v226
  %v236 = vunpack.c.h.b16 %v226
  %v237 = vunpack.c.l.b16 %v227
  %v238 = vunpack.c.h.b16 %v227
  %v239 = vunpack.c.l.b16 %v228
  %v240 = vunpack.c.h.b16 %v228
  %v241 = vpack.c.b16 %v235, %v233
  %v242 = vpack.c.b16 %v236, %v234
  %v243 = vpack.c.b16 %v239, %v237
  %v244 = vpack.c.b16 %v240, %v238
  %249 = vmatprep.subr.bf16.mxu0 0
  %250 = vmatpush1.bf16.msra.mxu0 %v144
  %251 = vmatprep.subr.bf16.mxu0 0
  %252 = vmatpush1.bf16.msra.mxu0 %v145
  %253 = vmatprep.subr.bf16.mxu0 0
  %254 = vmatpush1.bf16.msra.mxu0 %v146
  %255 = vmatprep.subr.bf16.mxu0 0
  %256 = vmatpush1.bf16.msra.mxu0 %v147
  %257 = vmatprep.subr.bf16.mxu0 0
  %258 = vmatpush1.bf16.msra.mxu0 %v148
  %259 = vmatprep.subr.bf16.mxu0 0
  %260 = vmatpush1.bf16.msra.mxu0 %v149
  %261 = vmatprep.subr.bf16.mxu0 0
  %262 = vmatpush1.bf16.msra.mxu0 %v150
  %263 = vmatprep.subr.bf16.mxu0 0
  %264 = vmatpush1.bf16.msra.mxu0 %v151
  %265 = vmatprep.subr.bf16.mxu0 0
  %266 = vmatpush1.bf16.msra.mxu0 %v152
  %267 = vmatprep.subr.bf16.mxu0 0
  %268 = vmatpush1.bf16.msra.mxu0 %v153
  %269 = vmatprep.subr.bf16.mxu0 0
  %270 = vmatpush1.bf16.msra.mxu0 %v154
  %271 = vmatprep.subr.bf16.mxu0 0
  %272 = vmatpush1.bf16.msra.mxu0 %v155
  %273 = vmatprep.subr.bf16.mxu0 0
  %274 = vmatpush1.bf16.msra.mxu0 %v156
  %275 = vmatprep.subr.bf16.mxu0 0
  %276 = vmatpush1.bf16.msra.mxu0 %v157
  %277 = vmatprep.subr.bf16.mxu0 0
  %278 = vmatpush1.bf16.msra.mxu0 %v158
  %279 = vmatprep.subr.bf16.mxu0 0
  %280 = vmatpush1.bf16.msra.mxu0 %v159
  %281 = vmatprep.mubr.bf16.mxu0 %v242
  %282 = vmatmul.mubr.bf16.gmra.mrb[0].mxu0 %v241
  %v283 = vpop.f32.mrb[0].mxu0
  %v284 = vadd.f32 0.0, %v283
  %v285 = vpop.f32.mrb[0].mxu0
  %v286 = vpop.f32.mrb[0].mxu0
  %v287 = vadd.f32 0.0, %v286
  %v288 = vpop.f32.mrb[0].mxu0
  %289 = vmatprep.mubr.bf16.mxu0 %v244
  %290 = vmatmul.mubr.bf16.gmra.mrb[0].mxu0 %v243
  %v291 = vpop.f32.mrb[0].mxu0
  %v292 = vadd.f32 0.0, %v291
  %v293 = vpop.f32.mrb[0].mxu0
  %v294 = vpop.f32.mrb[0].mxu0
  %v295 = vadd.f32 0.0, %v294
  %v296 = vpop.f32.mrb[0].mxu0
  %297 = vdwg.mxu0
  %v298 = vmax.f32 %v211, %v284
  %v299 = vmax.f32 %v214, %v287
  %v300 = vmax.f32 %v219, %v292
  %v301 = vmax.f32 %v222, %v295
  %v302 = vld [vmem:[%s2] sm:$0xff]
  %v303 = vld [vmem:[%s2 + $0x8] sm:$0xff]
  %v304 = vld [vmem:[%s2 + $0x10] sm:$0xff]
  %v305 = vld [vmem:[%s2 + $0x18] sm:$0xff]
  %v310 = vunpack.c.l.b16 %v302
  %v311 = vunpack.c.h.b16 %v302
  %v312 = vunpack.c.l.b16 %v303
  %v313 = vunpack.c.h.b16 %v303
  %v314 = vunpack.c.l.b16 %v304
  %v315 = vunpack.c.h.b16 %v304
  %v316 = vunpack.c.l.b16 %v305
  %v317 = vunpack.c.h.b16 %v305
  %v318 = vpack.c.b16 %v312, %v310
  %v319 = vpack.c.b16 %v313, %v311
  %v320 = vpack.c.b16 %v316, %v314
  %v321 = vpack.c.b16 %v317, %v315
  %326 = vmatprep.subr.bf16.mxu0 0
  %327 = vmatpush1.bf16.msra.mxu0 %v144
  %328 = vmatprep.subr.bf16.mxu0 0
  %329 = vmatpush1.bf16.msra.mxu0 %v145
  %330 = vmatprep.subr.bf16.mxu0 0
  %331 = vmatpush1.bf16.msra.mxu0 %v146
  %332 = vmatprep.subr.bf16.mxu0 0
  %333 = vmatpush1.bf16.msra.mxu0 %v147
  %334 = vmatprep.subr.bf16.mxu0 0
  %335 = vmatpush1.bf16.msra.mxu0 %v148
  %336 = vmatprep.subr.bf16.mxu0 0
  %337 = vmatpush1.bf16.msra.mxu0 %v149
  %338 = vmatprep.subr.bf16.mxu0 0
  %339 = vmatpush1.bf16.msra.mxu0 %v150
  %340 = vmatprep.subr.bf16.mxu0 0
  %341 = vmatpush1.bf16.msra.mxu0 %v151
  %342 = vmatprep.subr.bf16.mxu0 0
  %343 = vmatpush1.bf16.msra.mxu0 %v152
  %344 = vmatprep.subr.bf16.mxu0 0
  %345 = vmatpush1.bf16.msra.mxu0 %v153
  %346 = vmatprep.subr.bf16.mxu0 0
  %347 = vmatpush1.bf16.msra.mxu0 %v154
  %348 = vmatprep.subr.bf16.mxu0 0
  %349 = vmatpush1.bf16.msra.mxu0 %v155
  %350 = vmatprep.subr.bf16.mxu0 0
  %351 = vmatpush1.bf16.msra.mxu0 %v156
  %352 = vmatprep.subr.bf16.mxu0 0
  %353 = vmatpush1.bf16.msra.mxu0 %v157
  %354 = vmatprep.subr.bf16.mxu0 0
  %355 = vmatpush1.bf16.msra.mxu0 %v158
  %356 = vmatprep.subr.bf16.mxu0 0
  %357 = vmatpush1.bf16.msra.mxu0 %v159
  %358 = vmatprep.mubr.bf16.mxu0 %v319
  %359 = vmatmul.mubr.bf16.gmra.mrb[0].mxu0 %v318
  %v360 = vpop.f32.mrb[0].mxu0
  %v361 = vadd.f32 0.0, %v360
  %v362 = vpop.f32.mrb[0].mxu0
  %v363 = vpop.f32.mrb[0].mxu0
  %v364 = vadd.f32 0.0, %v363
  %v365 = vpop.f32.mrb[0].mxu0
  %366 = vmatprep.mubr.bf16.mxu0 %v321
  %367 = vmatmul.mubr.bf16.gmra.mrb[0].mxu0 %v320
  %v368 = vpop.f32.mrb[0].mxu0
  %v369 = vadd.f32 0.0, %v368
  %v370 = vpop.f32.mrb[0].mxu0
  %v371 = vpop.f32.mrb[0].mxu0
  %v372 = vadd.f32 0.0, %v371
  %v373 = vpop.f32.mrb[0].mxu0
  %374 = vdwg.mxu0
  %v375 = vld [vmem:[%s3] sm:$0xff]
  %v376 = vld [vmem:[%s3 + $0x8] sm:$0xff]
  %v377 = vld [vmem:[%s3 + $0x10] sm:$0xff]
  %v378 = vld [vmem:[%s3 + $0x18] sm:$0xff]
  %v383 = vunpack.c.l.b16 %v375
  %v384 = vunpack.c.h.b16 %v375
  %v385 = vunpack.c.l.b16 %v376
  %v386 = vunpack.c.h.b16 %v376
  %v387 = vunpack.c.l.b16 %v377
  %v388 = vunpack.c.h.b16 %v377
  %v389 = vunpack.c.l.b16 %v378
  %v390 = vunpack.c.h.b16 %v378
  %v391 = vpack.c.b16 %v385, %v383
  %v392 = vpack.c.b16 %v386, %v384
  %v393 = vpack.c.b16 %v389, %v387
  %v394 = vpack.c.b16 %v390, %v388
  %399 = vmatprep.subr.bf16.mxu0 0
  %400 = vmatpush1.bf16.msra.mxu0 %v144
  %401 = vmatprep.subr.bf16.mxu0 0
  %402 = vmatpush1.bf16.msra.mxu0 %v145
  %403 = vmatprep.subr.bf16.mxu0 0
  %404 = vmatpush1.bf16.msra.mxu0 %v146
  %405 = vmatprep.subr.bf16.mxu0 0
  %406 = vmatpush1.bf16.msra.mxu0 %v147
  %407 = vmatprep.subr.bf16.mxu0 0
  %408 = vmatpush1.bf16.msra.mxu0 %v148
  %409 = vmatprep.subr.bf16.mxu0 0
  %410 = vmatpush1.bf16.msra.mxu0 %v149
  %411 = vmatprep.subr.bf16.mxu0 0
  %412 = vmatpush1.bf16.msra.mxu0 %v150
  %413 = vmatprep.subr.bf16.mxu0 0
  %414 = vmatpush1.bf16.msra.mxu0 %v151
  %415 = vmatprep.subr.bf16.mxu0 0
  %416 = vmatpush1.bf16.msra.mxu0 %v152
  %417 = vmatprep.subr.bf16.mxu0 0
  %418 = vmatpush1.bf16.msra.mxu0 %v153
  %419 = vmatprep.subr.bf16.mxu0 0
  %420 = vmatpush1.bf16.msra.mxu0 %v154
  %421 = vmatprep.subr.bf16.mxu0 0
  %422 = vmatpush1.bf16.msra.mxu0 %v155
  %423 = vmatprep.subr.bf16.mxu0 0
  %424 = vmatpush1.bf16.msra.mxu0 %v156
  %425 = vmatprep.subr.bf16.mxu0 0
  %426 = vmatpush1.bf16.msra.mxu0 %v157
  %427 = vmatprep.subr.bf16.mxu0 0
  %428 = vmatpush1.bf16.msra.mxu0 %v158
  %429 = vmatprep.subr.bf16.mxu0 0
  %430 = vmatpush1.bf16.msra.mxu0 %v159
  %431 = vmatprep.mubr.bf16.mxu0 %v392
  %432 = vmatmul.mubr.bf16.gmra.mrb[0].mxu0 %v391
  %v433 = vpop.f32.mrb[0].mxu0
  %v434 = vadd.f32 0.0, %v433
  %v435 = vpop.f32.mrb[0].mxu0
  %v436 = vpop.f32.mrb[0].mxu0
  %v437 = vadd.f32 0.0, %v436
  %v438 = vpop.f32.mrb[0].mxu0
  %439 = vmatprep.mubr.bf16.mxu0 %v394
  %440 = vmatmul.mubr.bf16.gmra.mrb[0].mxu0 %v393
  %v441 = vpop.f32.mrb[0].mxu0
  %v442 = vadd.f32 0.0, %v441
  %v443 = vpop.f32.mrb[0].mxu0
  %v444 = vpop.f32.mrb[0].mxu0
  %v445 = vadd.f32 0.0, %v444
  %v446 = vpop.f32.mrb[0].mxu0
  %447 = vdwg.mxu0
  %v448 = vmax.f32 %v361, %v434
  %v449 = vmax.f32 %v364, %v437
  %v450 = vmax.f32 %v369, %v442
  %v451 = vmax.f32 %v372, %v445
  %v452 = vmax.f32 %v298, %v448
  %v453 = vmax.f32 %v299, %v449
  %v454 = vmax.f32 %v300, %v450
  %v455 = vmax.f32 %v301, %v451
  %v456 = vld [vmem:[%s5] sm:$0x1]
  %v458 = vlaneseq
  %v459 = vshrl.u32 %v458, 7
  %v460 = vsub.s32 0, %v459
  %v461 = vrot.slane %v456, %v460
  %v463 = vadd.f32 %v452, %v461
  %v464 = vadd.f32 %v453, %v461
  %v465 = vadd.f32 %v454, %v461
  %v466 = vadd.f32 %v455, %v461
  %v467 = vmax.f32 %v463, 0.0
  %v468 = vmax.f32 %v464, 0.0
  %v469 = vmax.f32 %v465, 0.0
  %v470 = vmax.f32 %v466, 0.0
  %v471 = vpack.c.bf16 %v468, %v467
  %v472 = vpack.c.bf16 %v470, %v469
  %v475 = vunpack.c.l.b16 %v471
  %v476 = vunpack.c.h.b16 %v471
  %v477 = vunpack.c.l.b16 %v472
  %v478 = vunpack.c.h.b16 %v472
  %v479 = vpack.c.b16 %v475, %v475
  %v480 = vpack.c.b16 %v476, %v476
  %v481 = vpack.c.b16 %v477, %v477
  %v482 = vpack.c.b16 %v478, %v478
  %487 = vst [vmem:[%s6] sm:$0xf] %v479
  %488 = vst [vmem:[%s6 + $0x4] sm:$0xf] %v480
  %489 = vst [vmem:[%s6 + $0x8] sm:$0xf] %v481
  %490 = vst [vmem:[%s6 + $0xc] sm:$0xf] %v482
  // Predicated region
  $region26: #{net_forward.4} parent=0 // pred_check
    _
  $region27: #{net_forward.4} parent=0 // pred_check_branch
    %492 = sbr.rel (0) target = $region29
  $region28: #{net_forward.4} parent=0 // pred_region
    _
  $region29: #{net_forward.4} parent=0 // pred_fallthru
    _
  // Predicated region
  $region30: #{net_forward.4} parent=0 // pred_check
    _
  $region31: #{net_forward.4} parent=0 // pred_check_branch
    %494 = sbr.rel (0) target = $region33
  $region32: #{net_forward.4} parent=0 // pred_region
    _
  $region33: #{net_forward.4} parent=0 // pred_fallthru
    _

// kernel: net_forward.5
$region0: #{net_forward.5}
  #allocation0 [shape = 'u32[]', space=smem, size = 0x4, offset = 0x4, fixed_abs, tag = 'smem constant byte address 0x4 - core index']
  #allocation1 [shape = 'u32[144,128]{1,0:T(1,128)}', space=vmem, size = 0x12000, scoped, tag = 'internal scratch']
  %s0 = inlined_call_operand.vmem [shape: bf16[2,2048], index: 0, kind: input, shape index: {}]
  %s1 = inlined_call_operand.vmem [shape: bf16[2048,360], index: 1, kind: input, shape index: {}]
  %s2 = inlined_call_operand.vmem [shape: f32[1,360], index: 2, kind: input, shape index: {}]
  %s3 = inlined_call_operand.vmem [shape: bf16[360,180], index: 3, kind: input, shape index: {}]
  %s4 = inlined_call_operand.vmem [shape: f32[1,180], index: 4, kind: input, shape index: {}]
  %s5 = inlined_call_operand.vmem [shape: bf16[180,10], index: 5, kind: input, shape index: {}]
  %s6 = inlined_call_operand.vmem [shape: f32[1,10], index: 6, kind: input, shape index: {}]
  %s7 = inlined_call_operand.hbm [shape: f32[2,10], index: 7, kind: output, shape index: {}]
  %s8 = sld [smem:[#allocation0]]
  $region38: #{net_forward.5} parent=0
    _
  %s10 = ssub.s32 1, %s8
  %s11 = scalar_select 0, %s10, %s8
  $region1: #{net_forward.5} parent=0
    #allocation2 [shape = 'u8[1024]{0}', space=vmem, size = 0x400, scoped, tag = 'output window, operand 0, single buffered']
    #allocation3 [shape = 's32[1]{0}', space=sflag, size = 0x4, scoped, tag = 'scoped memory for net_forward.5']
    %12 = vsyncpa [#allocation3], 0
    // Predicated region
    $region2: #{net_forward.5} parent=1 // pred_check
      _
    $region3: #{net_forward.5} parent=1 // pred_check_branch
      %14 = sbr.rel (0) target = $region5
    $region4: #{net_forward.5} parent=1 // pred_region
      _
    $region5: #{net_forward.5} parent=1 // pred_fallthru
      _
    // Predicated region
    $region6: #{net_forward.5} parent=1 // pred_check
      _
    $region7: #{net_forward.5} parent=1 // pred_check_branch
      %16 = sbr.rel (0) target = $region9
    $region8: #{net_forward.5} parent=1 // pred_region
      _
    $region9: #{net_forward.5} parent=1 // pred_fallthru
      _
    // Predicated region
    $region10: #{net_forward.5} parent=1 // pred_check
      _
    $region11: #{net_forward.5} parent=1 // pred_check_branch
      %18 = sbr.rel (0) target = $region13
    $region12: #{net_forward.5} parent=1 // pred_region
      _
    $region13: #{net_forward.5} parent=1 // pred_fallthru
      _
    // Predicated region
    $region14: #{net_forward.5} parent=1 // pred_check
      _
    $region15: #{net_forward.5} parent=1 // pred_check_branch
      %20 = sbr.rel (0) target = $region17
    $region16: #{net_forward.5} parent=1 // pred_region
      _
    $region17: #{net_forward.5} parent=1 // pred_fallthru
      _
    // Predicated region
    $region18: #{net_forward.5} parent=1 // pred_check
      _
    $region19: #{net_forward.5} parent=1 // pred_check_branch
      %22 = sbr.rel (0) target = $region21
    $region20: #{net_forward.5} parent=1 // pred_region
      _
    $region21: #{net_forward.5} parent=1 // pred_fallthru
      _
    // Predicated region
    $region22: #{net_forward.5} parent=1 // pred_check
      _
    $region23: #{net_forward.5} parent=1 // pred_check_branch
      %24 = sbr.rel (0) target = $region25
    $region24: #{net_forward.5} parent=1 // pred_region
      _
    $region25: #{net_forward.5} parent=1 // pred_fallthru
      _
    // Predicated region
    $region26: #{net_forward.5} parent=1 // pred_check
      _
    $region27: #{net_forward.5} parent=1 // pred_check_branch
      %26 = sbr.rel (0) target = $region29
    $region28: #{net_forward.5} parent=1 // pred_region
      _
    $region29: #{net_forward.5} parent=1 // pred_fallthru
      _
    %v28 = vld [vmem:[%s0] sm:$0xff]
    %v29 = vld [vmem:[%s0 + $0x8] sm:$0xff]
    %v30 = vld [vmem:[%s1] sm:$0xff]
    %v31 = vld [vmem:[%s1 + $0x8] sm:$0xf]
    %v32 = vld [vmem:[%s1 + $0xc] sm:$0xff]
    %v33 = vld [vmem:[%s1 + $0x14] sm:$0xf]
    %v34 = vld [vmem:[%s1 + $0x18] sm:$0xff]
    %v35 = vld [vmem:[%s1 + $0x20] sm:$0xf]
    %v36 = vld [vmem:[%s1 + $0x24] sm:$0xff]
    %v37 = vld [vmem:[%s1 + $0x2c] sm:$0xf]
    %v38 = vld [vmem:[%s1 + $0x30] sm:$0xff]
    %v39 = vld [vmem:[%s1 + $0x38] sm:$0xf]
    %v40 = vld [vmem:[%s1 + $0x3c] sm:$0xff]
    %v41 = vld [vmem:[%s1 + $0x44] sm:$0xf]
    %v42 = vld [vmem:[%s1 + $0x48] sm:$0xff]
    %v43 = vld [vmem:[%s1 + $0x50] sm:$0xf]
    %v44 = vld [vmem:[%s1 + $0x54] sm:$0xff]
    %v45 = vld [vmem:[%s1 + $0x5c] sm:$0xf]
    %v46 = vld [vmem:[%s1 + $0x60] sm:$0xff]
    %v47 = vld [vmem:[%s1 + $0x68] sm:$0xf]
    %v48 = vld [vmem:[%s1 + $0x6c] sm:$0xff]
    %v49 = vld [vmem:[%s1 + $0x74] sm:$0xf]
    %v50 = vld [vmem:[%s1 + $0x78] sm:$0xff]
    %v51 = vld [vmem:[%s1 + $0x80] sm:$0xf]
    %v52 = vld [vmem:[%s1 + $0x84] sm:$0xff]
    %v53 = vld [vmem:[%s1 + $0x8c] sm:$0xf]
    %v54 = vld [vmem:[%s1 + $0x90] sm:$0xff]
    %v55 = vld [vmem:[%s1 + $0x98] sm:$0xf]
    %v56 = vld [vmem:[%s1 + $0x9c] sm:$0xff]
    %v57 = vld [vmem:[%s1 + $0xa4] sm:$0xf]
    %v58 = vld [vmem:[%s1 + $0xa8] sm:$0xff]
    %v59 = vld [vmem:[%s1 + $0xb0] sm:$0xf]
    %v60 = vld [vmem:[%s1 + $0xb4] sm:$0xff]
    %v61 = vld [vmem:[%s1 + $0xbc] sm:$0xf]
    %v62 = vld [vmem:[%s1 + $0xc0] sm:$0xff]
    %v63 = vld [vmem:[%s1 + $0xc8] sm:$0xf]
    %v64 = vld [vmem:[%s1 + $0xcc] sm:$0xff]
    %v65 = vld [vmem:[%s1 + $0xd4] sm:$0xf]
    %v66 = vld [vmem:[%s1 + $0xd8] sm:$0xff]
    %v67 = vld [vmem:[%s1 + $0xe0] sm:$0xf]
    %v68 = vld [vmem:[%s1 + $0xe4] sm:$0xff]
    %v69 = vld [vmem:[%s1 + $0xec] sm:$0xf]
    %v70 = vld [vmem:[%s1 + $0xf0] sm:$0xff]
    %v71 = vld [vmem:[%s1 + $0xf8] sm:$0xf]
    %v72 = vld [vmem:[%s1 + $0xfc] sm:$0xff]
    %v73 = vld [vmem:[%s1 + $0x104] sm:$0xf]
    %v74 = vld [vmem:[%s1 + $0x108] sm:$0xff]
    %v75 = vld [vmem:[%s1 + $0x110] sm:$0xf]
    %v76 = vld [vmem:[%s1 + $0x114] sm:$0xff]
    %v77 = vld [vmem:[%s1 + $0x11c] sm:$0xf]
    %v78 = vld [vmem:[%s1 + $0x120] sm:$0xff]
    %v79 = vld [vmem:[%s1 + $0x128] sm:$0xf]
    %v80 = vld [vmem:[%s1 + $0x12c] sm:$0xff]
    %v81 = vld [vmem:[%s1 + $0x134] sm:$0xf]
    %v82 = vld [vmem:[%s1 + $0x138] sm:$0xff]
    %v83 = vld [vmem:[%s1 + $0x140] sm:$0xf]
    %v84 = vld [vmem:[%s1 + $0x144] sm:$0xff]
    %v85 = vld [vmem:[%s1 + $0x14c] sm:$0xf]
    %v86 = vld [vmem:[%s1 + $0x150] sm:$0xff]
    %v87 = vld [vmem:[%s1 + $0x158] sm:$0xf]
    %v88 = vld [vmem:[%s1 + $0x15c] sm:$0xff]
    %v89 = vld [vmem:[%s1 + $0x164] sm:$0xf]
    %v90 = vld [vmem:[%s1 + $0x168] sm:$0xff]
    %v91 = vld [vmem:[%s1 + $0x170] sm:$0xf]
    %v92 = vld [vmem:[%s1 + $0x174] sm:$0xff]
    %v93 = vld [vmem:[%s1 + $0x17c] sm:$0xf]
    %v94 = vld [vmem:[%s1 + $0x180] sm:$0xff]
    %v95 = vld [vmem:[%s1 + $0x188] sm:$0xf]
    %v96 = vld [vmem:[%s1 + $0x18c] sm:$0xff]
    %v97 = vld [vmem:[%s1 + $0x194] sm:$0xf]
    %v98 = vld [vmem:[%s1 + $0x198] sm:$0xff]
    %v99 = vld [vmem:[%s1 + $0x1a0] sm:$0xf]
    %v100 = vld [vmem:[%s1 + $0x1a4] sm:$0xff]
    %v101 = vld [vmem:[%s1 + $0x1ac] sm:$0xf]
    %v102 = vld [vmem:[%s1 + $0x1b0] sm:$0xff]
    %v103 = vld [vmem:[%s1 + $0x1b8] sm:$0xf]
    %v104 = vld [vmem:[%s1 + $0x1bc] sm:$0xff]
    %v105 = vld [vmem:[%s1 + $0x1c4] sm:$0xf]
    %v106 = vld [vmem:[%s1 + $0x1c8] sm:$0xff]
    %v107 = vld [vmem:[%s1 + $0x1d0] sm:$0xf]
    %v108 = vld [vmem:[%s1 + $0x1d4] sm:$0xff]
    %v109 = vld [vmem:[%s1 + $0x1dc] sm:$0xf]
    %v110 = vld [vmem:[%s1 + $0x1e0] sm:$0xff]
    %v111 = vld [vmem:[%s1 + $0x1e8] sm:$0xf]
    %v112 = vld [vmem:[%s1 + $0x1ec] sm:$0xff]
    %v113 = vld [vmem:[%s1 + $0x1f4] sm:$0xf]
    %v114 = vld [vmem:[%s1 + $0x1f8] sm:$0xff]
    %v115 = vld [vmem:[%s1 + $0x200] sm:$0xf]
    %v116 = vld [vmem:[%s1 + $0x204] sm:$0xff]
    %v117 = vld [vmem:[%s1 + $0x20c] sm:$0xf]
    %v118 = vld [vmem:[%s1 + $0x210] sm:$0xff]
    %v119 = vld [vmem:[%s1 + $0x218] sm:$0xf]
    %v120 = vld [vmem:[%s1 + $0x21c] sm:$0xff]
    %v121 = vld [vmem:[%s1 + $0x224] sm:$0xf]
    %v122 = vld [vmem:[%s1 + $0x228] sm:$0xff]
    %v123 = vld [vmem:[%s1 + $0x230] sm:$0xf]
    %v124 = vld [vmem:[%s1 + $0x234] sm:$0xff]
    %v125 = vld [vmem:[%s1 + $0x23c] sm:$0xf]
    %v126 = vld [vmem:[%s1 + $0x240] sm:$0xff]
    %v127 = vld [vmem:[%s1 + $0x248] sm:$0xf]
    %v128 = vld [vmem:[%s1 + $0x24c] sm:$0xff]
    %v129 = vld [vmem:[%s1 + $0x254] sm:$0xf]
    %v130 = vld [vmem:[%s1 + $0x258] sm:$0xff]
    %v131 = vld [vmem:[%s1 + $0x260] sm:$0xf]
    %v132 = vld [vmem:[%s1 + $0x264] sm:$0xff]
    %v133 = vld [vmem:[%s1 + $0x26c] sm:$0xf]
    %v134 = vld [vmem:[%s1 + $0x270] sm:$0xff]
    %v135 = vld [vmem:[%s1 + $0x278] sm:$0xf]
    %v136 = vld [vmem:[%s1 + $0x27c] sm:$0xff]
    %v137 = vld [vmem:[%s1 + $0x284] sm:$0xf]
    %v138 = vld [vmem:[%s1 + $0x288] sm:$0xff]
    %v139 = vld [vmem:[%s1 + $0x290] sm:$0xf]
    %v140 = vld [vmem:[%s1 + $0x294] sm:$0xff]
    %v141 = vld [vmem:[%s1 + $0x29c] sm:$0xf]
    %v142 = vld [vmem:[%s1 + $0x2a0] sm:$0xff]
    %v143 = vld [vmem:[%s1 + $0x2a8] sm:$0xf]
    %v144 = vld [vmem:[%s1 + $0x2ac] sm:$0xff]
    %v145 = vld [vmem:[%s1 + $0x2b4] sm:$0xf]
    %v146 = vld [vmem:[%s1 + $0x2b8] sm:$0xff]
    %v147 = vld [vmem:[%s1 + $0x2c0] sm:$0xf]
    %v148 = vld [vmem:[%s1 + $0x2c4] sm:$0xff]
    %v149 = vld [vmem:[%s1 + $0x2cc] sm:$0xf]
    %v150 = vld [vmem:[%s1 + $0x2d0] sm:$0xff]
    %v151 = vld [vmem:[%s1 + $0x2d8] sm:$0xf]
    %v152 = vld [vmem:[%s1 + $0x2dc] sm:$0xff]
    %v153 = vld [vmem:[%s1 + $0x2e4] sm:$0xf]
    %v154 = vld [vmem:[%s1 + $0x2e8] sm:$0xff]
    %v155 = vld [vmem:[%s1 + $0x2f0] sm:$0xf]
    %v156 = vld [vmem:[%s1 + $0x2f4] sm:$0xff]
    %v157 = vld [vmem:[%s1 + $0x2fc] sm:$0xf]
    %v158 = vld [vmem:[%s1 + $0x300] sm:$0xff]
    %v159 = vld [vmem:[%s1 + $0x308] sm:$0xf]
    %v160 = vld [vmem:[%s1 + $0x30c] sm:$0xff]
    %v161 = vld [vmem:[%s1 + $0x314] sm:$0xf]
    %v162 = vld [vmem:[%s1 + $0x318] sm:$0xff]
    %v163 = vld [vmem:[%s1 + $0x320] sm:$0xf]
    %v164 = vld [vmem:[%s1 + $0x324] sm:$0xff]
    %v165 = vld [vmem:[%s1 + $0x32c] sm:$0xf]
    %v166 = vld [vmem:[%s1 + $0x330] sm:$0xff]
    %v167 = vld [vmem:[%s1 + $0x338] sm:$0xf]
    %v168 = vld [vmem:[%s1 + $0x33c] sm:$0xff]
    %v169 = vld [vmem:[%s1 + $0x344] sm:$0xf]
    %v170 = vld [vmem:[%s1 + $0x348] sm:$0xff]
    %v171 = vld [vmem:[%s1 + $0x350] sm:$0xf]
    %v172 = vld [vmem:[%s1 + $0x354] sm:$0xff]
    %v173 = vld [vmem:[%s1 + $0x35c] sm:$0xf]
    %v174 = vld [vmem:[%s1 + $0x360] sm:$0xff]
    %v175 = vld [vmem:[%s1 + $0x368] sm:$0xf]
    %v176 = vld [vmem:[%s1 + $0x36c] sm:$0xff]
    %v177 = vld [vmem:[%s1 + $0x374] sm:$0xf]
    %v178 = vld [vmem:[%s1 + $0x378] sm:$0xff]
    %v179 = vld [vmem:[%s1 + $0x380] sm:$0xf]
    %v180 = vld [vmem:[%s1 + $0x384] sm:$0xff]
    %v181 = vld [vmem:[%s1 + $0x38c] sm:$0xf]
    %v182 = vld [vmem:[%s1 + $0x390] sm:$0xff]
    %v183 = vld [vmem:[%s1 + $0x398] sm:$0xf]
    %v184 = vld [vmem:[%s1 + $0x39c] sm:$0xff]
    %v185 = vld [vmem:[%s1 + $0x3a4] sm:$0xf]
    %v186 = vld [vmem:[%s1 + $0x3a8] sm:$0xff]
    %v187 = vld [vmem:[%s1 + $0x3b0] sm:$0xf]
    %v188 = vld [vmem:[%s1 + $0x3b4] sm:$0xff]
    %v189 = vld [vmem:[%s1 + $0x3bc] sm:$0xf]
    %v190 = vld [vmem:[%s1 + $0x3c0] sm:$0xff]
    %v191 = vld [vmem:[%s1 + $0x3c8] sm:$0xf]
    %v192 = vld [vmem:[%s1 + $0x3cc] sm:$0xff]
    %v193 = vld [vmem:[%s1 + $0x3d4] sm:$0xf]
    %v194 = vld [vmem:[%s1 + $0x3d8] sm:$0xff]
    %v195 = vld [vmem:[%s1 + $0x3e0] sm:$0xf]
    %v196 = vld [vmem:[%s1 + $0x3e4] sm:$0xff]
    %v197 = vld [vmem:[%s1 + $0x3ec] sm:$0xf]
    %v198 = vld [vmem:[%s1 + $0x3f0] sm:$0xff]
    %v199 = vld [vmem:[%s1 + $0x3f8] sm:$0xf]
    %v200 = vld [vmem:[%s1 + $0x3fc] sm:$0xff]
    %v201 = vld [vmem:[%s1 + $0x404] sm:$0xf]
    %v202 = vld [vmem:[%s1 + $0x408] sm:$0xff]
    %v203 = vld [vmem:[%s1 + $0x410] sm:$0xf]
    %v204 = vld [vmem:[%s1 + $0x414] sm:$0xff]
    %v205 = vld [vmem:[%s1 + $0x41c] sm:$0xf]
    %v206 = vld [vmem:[%s1 + $0x420] sm:$0xff]
    %v207 = vld [vmem:[%s1 + $0x428] sm:$0xf]
    %v208 = vld [vmem:[%s1 + $0x42c] sm:$0xff]
    %v209 = vld [vmem:[%s1 + $0x434] sm:$0xf]
    %v210 = vld [vmem:[%s1 + $0x438] sm:$0xff]
    %v211 = vld [vmem:[%s1 + $0x440] sm:$0xf]
    %v212 = vld [vmem:[%s1 + $0x444] sm:$0xff]
    %v213 = vld [vmem:[%s1 + $0x44c] sm:$0xf]
    %v214 = vld [vmem:[%s1 + $0x450] sm:$0xff]
    %v215 = vld [vmem:[%s1 + $0x458] sm:$0xf]
    %v216 = vld [vmem:[%s1 + $0x45c] sm:$0xff]
    %v217 = vld [vmem:[%s1 + $0x464] sm:$0xf]
    %v218 = vld [vmem:[%s1 + $0x468] sm:$0xff]
    %v219 = vld [vmem:[%s1 + $0x470] sm:$0xf]
    %v220 = vld [vmem:[%s1 + $0x474] sm:$0xff]
    %v221 = vld [vmem:[%s1 + $0x47c] sm:$0xf]
    %v222 = vld [vmem:[%s1 + $0x480] sm:$0xff]
    %v223 = vld [vmem:[%s1 + $0x488] sm:$0xf]
    %v224 = vld [vmem:[%s1 + $0x48c] sm:$0xff]
    %v225 = vld [vmem:[%s1 + $0x494] sm:$0xf]
    %v226 = vld [vmem:[%s1 + $0x498] sm:$0xff]
    %v227 = vld [vmem:[%s1 + $0x4a0] sm:$0xf]
    %v228 = vld [vmem:[%s1 + $0x4a4] sm:$0xff]
    %v229 = vld [vmem:[%s1 + $0x4ac] sm:$0xf]
    %v230 = vld [vmem:[%s1 + $0x4b0] sm:$0xff]
    %v231 = vld [vmem:[%s1 + $0x4b8] sm:$0xf]
    %v232 = vld [vmem:[%s1 + $0x4bc] sm:$0xff]
    %v233 = vld [vmem:[%s1 + $0x4c4] sm:$0xf]
    %v234 = vld [vmem:[%s1 + $0x4c8] sm:$0xff]
    %v235 = vld [vmem:[%s1 + $0x4d0] sm:$0xf]
    %v236 = vld [vmem:[%s1 + $0x4d4] sm:$0xff]
    %v237 = vld [vmem:[%s1 + $0x4dc] sm:$0xf]
    %v238 = vld [vmem:[%s1 + $0x4e0] sm:$0xff]
    %v239 = vld [vmem:[%s1 + $0x4e8] sm:$0xf]
    %v240 = vld [vmem:[%s1 + $0x4ec] sm:$0xff]
    %v241 = vld [vmem:[%s1 + $0x4f4] sm:$0xf]
    %v242 = vld [vmem:[%s1 + $0x4f8] sm:$0xff]
    %v243 = vld [vmem:[%s1 + $0x500] sm:$0xf]
    %v244 = vld [vmem:[%s1 + $0x504] sm:$0xff]
    %v245 = vld [vmem:[%s1 + $0x50c] sm:$0xf]
    %v246 = vld [vmem:[%s1 + $0x510] sm:$0xff]
    %v247 = vld [vmem:[%s1 + $0x518] sm:$0xf]
    %v248 = vld [vmem:[%s1 + $0x51c] sm:$0xff]
    %v249 = vld [vmem:[%s1 + $0x524] sm:$0xf]
    %v250 = vld [vmem:[%s1 + $0x528] sm:$0xff]
    %v251 = vld [vmem:[%s1 + $0x530] sm:$0xf]
    %v252 = vld [vmem:[%s1 + $0x534] sm:$0xff]
    %v253 = vld [vmem:[%s1 + $0x53c] sm:$0xf]
    %v254 = vld [vmem:[%s1 + $0x540] sm:$0xff]
    %v255 = vld [vmem:[%s1 + $0x548] sm:$0xf]
    %v256 = vld [vmem:[%s1 + $0x54c] sm:$0xff]
    %v257 = vld [vmem:[%s1 + $0x554] sm:$0xf]
    %v258 = vld [vmem:[%s1 + $0x558] sm:$0xff]
    %v259 = vld [vmem:[%s1 + $0x560] sm:$0xf]
    %v260 = vld [vmem:[%s1 + $0x564] sm:$0xff]
    %v261 = vld [vmem:[%s1 + $0x56c] sm:$0xf]
    %v262 = vld [vmem:[%s1 + $0x570] sm:$0xff]
    %v263 = vld [vmem:[%s1 + $0x578] sm:$0xf]
    %v264 = vld [vmem:[%s1 + $0x57c] sm:$0xff]
    %v265 = vld [vmem:[%s1 + $0x584] sm:$0xf]
    %v266 = vld [vmem:[%s1 + $0x588] sm:$0xff]
    %v267 = vld [vmem:[%s1 + $0x590] sm:$0xf]
    %v268 = vld [vmem:[%s1 + $0x594] sm:$0xff]
    %v269 = vld [vmem:[%s1 + $0x59c] sm:$0xf]
    %v270 = vld [vmem:[%s1 + $0x5a0] sm:$0xff]
    %v271 = vld [vmem:[%s1 + $0x5a8] sm:$0xf]
    %v272 = vld [vmem:[%s1 + $0x5ac] sm:$0xff]
    %v273 = vld [vmem:[%s1 + $0x5b4] sm:$0xf]
    %v274 = vld [vmem:[%s1 + $0x5b8] sm:$0xff]
    %v275 = vld [vmem:[%s1 + $0x5c0] sm:$0xf]
    %v276 = vld [vmem:[%s1 + $0x5c4] sm:$0xff]
    %v277 = vld [vmem:[%s1 + $0x5cc] sm:$0xf]
    %v278 = vld [vmem:[%s1 + $0x5d0] sm:$0xff]
    %v279 = vld [vmem:[%s1 + $0x5d8] sm:$0xf]
    %v280 = vld [vmem:[%s1 + $0x5dc] sm:$0xff]
    %v281 = vld [vmem:[%s1 + $0x5e4] sm:$0xf]
    %v282 = vld [vmem:[%s1 + $0x5e8] sm:$0xff]
    %v283 = vld [vmem:[%s1 + $0x5f0] sm:$0xf]
    %v284 = vld [vmem:[%s1 + $0x5f4] sm:$0xff]
    %v285 = vld [vmem:[%s1 + $0x5fc] sm:$0xf]
    %v286 = vld [vmem:[%s1 + $0x600] sm:$0xff]
    %v287 = vld [vmem:[%s1 + $0x608] sm:$0xf]
    %v288 = vld [vmem:[%s1 + $0x60c] sm:$0xff]
    %v289 = vld [vmem:[%s1 + $0x614] sm:$0xf]
    %v290 = vld [vmem:[%s1 + $0x618] sm:$0xff]
    %v291 = vld [vmem:[%s1 + $0x620] sm:$0xf]
    %v292 = vld [vmem:[%s1 + $0x624] sm:$0xff]
    %v293 = vld [vmem:[%s1 + $0x62c] sm:$0xf]
    %v294 = vld [vmem:[%s1 + $0x630] sm:$0xff]
    %v295 = vld [vmem:[%s1 + $0x638] sm:$0xf]
    %v296 = vld [vmem:[%s1 + $0x63c] sm:$0xff]
    %v297 = vld [vmem:[%s1 + $0x644] sm:$0xf]
    %v298 = vld [vmem:[%s1 + $0x648] sm:$0xff]
    %v299 = vld [vmem:[%s1 + $0x650] sm:$0xf]
    %v300 = vld [vmem:[%s1 + $0x654] sm:$0xff]
    %v301 = vld [vmem:[%s1 + $0x65c] sm:$0xf]
    %v302 = vld [vmem:[%s1 + $0x660] sm:$0xff]
    %v303 = vld [vmem:[%s1 + $0x668] sm:$0xf]
    %v304 = vld [vmem:[%s1 + $0x66c] sm:$0xff]
    %v305 = vld [vmem:[%s1 + $0x674] sm:$0xf]
    %v306 = vld [vmem:[%s1 + $0x678] sm:$0xff]
    %v307 = vld [vmem:[%s1 + $0x680] sm:$0xf]
    %v308 = vld [vmem:[%s1 + $0x684] sm:$0xff]
    %v309 = vld [vmem:[%s1 + $0x68c] sm:$0xf]
    %v310 = vld [vmem:[%s1 + $0x690] sm:$0xff]
    %v311 = vld [vmem:[%s1 + $0x698] sm:$0xf]
    %v312 = vld [vmem:[%s1 + $0x69c] sm:$0xff]
    %v313 = vld [vmem:[%s1 + $0x6a4] sm:$0xf]
    %v314 = vld [vmem:[%s1 + $0x6a8] sm:$0xff]
    %v315 = vld [vmem:[%s1 + $0x6b0] sm:$0xf]
    %v316 = vld [vmem:[%s1 + $0x6b4] sm:$0xff]
    %v317 = vld [vmem:[%s1 + $0x6bc] sm:$0xf]
    %v318 = vld [vmem:[%s1 + $0x6c0] sm:$0xff]
    %v319 = vld [vmem:[%s1 + $0x6c8] sm:$0xf]
    %v320 = vld [vmem:[%s1 + $0x6cc] sm:$0xff]
    %v321 = vld [vmem:[%s1 + $0x6d4] sm:$0xf]
    %v322 = vld [vmem:[%s1 + $0x6d8] sm:$0xff]
    %v323 = vld [vmem:[%s1 + $0x6e0] sm:$0xf]
    %v324 = vld [vmem:[%s1 + $0x6e4] sm:$0xff]
    %v325 = vld [vmem:[%s1 + $0x6ec] sm:$0xf]
    %v326 = vld [vmem:[%s1 + $0x6f0] sm:$0xff]
    %v327 = vld [vmem:[%s1 + $0x6f8] sm:$0xf]
    %v328 = vld [vmem:[%s1 + $0x6fc] sm:$0xff]
    %v329 = vld [vmem:[%s1 + $0x704] sm:$0xf]
    %v330 = vld [vmem:[%s1 + $0x708] sm:$0xff]
    %v331 = vld [vmem:[%s1 + $0x710] sm:$0xf]
    %v332 = vld [vmem:[%s1 + $0x714] sm:$0xff]
    %v333 = vld [vmem:[%s1 + $0x71c] sm:$0xf]
    %v334 = vld [vmem:[%s1 + $0x720] sm:$0xff]
    %v335 = vld [vmem:[%s1 + $0x728] sm:$0xf]
    %v336 = vld [vmem:[%s1 + $0x72c] sm:$0xff]
    %v337 = vld [vmem:[%s1 + $0x734] sm:$0xf]
    %v338 = vld [vmem:[%s1 + $0x738] sm:$0xff]
    %v339 = vld [vmem:[%s1 + $0x740] sm:$0xf]
    %v340 = vld [vmem:[%s1 + $0x744] sm:$0xff]
    %v341 = vld [vmem:[%s1 + $0x74c] sm:$0xf]
    %v342 = vld [vmem:[%s1 + $0x750] sm:$0xff]
    %v343 = vld [vmem:[%s1 + $0x758] sm:$0xf]
    %v344 = vld [vmem:[%s1 + $0x75c] sm:$0xff]
    %v345 = vld [vmem:[%s1 + $0x764] sm:$0xf]
    %v346 = vld [vmem:[%s1 + $0x768] sm:$0xff]
    %v347 = vld [vmem:[%s1 + $0x770] sm:$0xf]
    %v348 = vld [vmem:[%s1 + $0x774] sm:$0xff]
    %v349 = vld [vmem:[%s1 + $0x77c] sm:$0xf]
    %v350 = vld [vmem:[%s1 + $0x780] sm:$0xff]
    %v351 = vld [vmem:[%s1 + $0x788] sm:$0xf]
    %v352 = vld [vmem:[%s1 + $0x78c] sm:$0xff]
    %v353 = vld [vmem:[%s1 + $0x794] sm:$0xf]
    %v354 = vld [vmem:[%s1 + $0x798] sm:$0xff]
    %v355 = vld [vmem:[%s1 + $0x7a0] sm:$0xf]
    %v356 = vld [vmem:[%s1 + $0x7a4] sm:$0xff]
    %v357 = vld [vmem:[%s1 + $0x7ac] sm:$0xf]
    %v358 = vld [vmem:[%s1 + $0x7b0] sm:$0xff]
    %v359 = vld [vmem:[%s1 + $0x7b8] sm:$0xf]
    %v360 = vld [vmem:[%s1 + $0x7bc] sm:$0xff]
    %v361 = vld [vmem:[%s1 + $0x7c4] sm:$0xf]
    %v362 = vld [vmem:[%s1 + $0x7c8] sm:$0xff]
    %v363 = vld [vmem:[%s1 + $0x7d0] sm:$0xf]
    %v364 = vld [vmem:[%s1 + $0x7d4] sm:$0xff]
    %v365 = vld [vmem:[%s1 + $0x7dc] sm:$0xf]
    %v366 = vld [vmem:[%s1 + $0x7e0] sm:$0xff]
    %v367 = vld [vmem:[%s1 + $0x7e8] sm:$0xf]
    %v368 = vld [vmem:[%s1 + $0x7ec] sm:$0xff]
    %v369 = vld [vmem:[%s1 + $0x7f4] sm:$0xf]
    %v370 = vld [vmem:[%s1 + $0x7f8] sm:$0xff]
    %v371 = vld [vmem:[%s1 + $0x800] sm:$0xf]
    %v372 = vld [vmem:[%s1 + $0x804] sm:$0xff]
    %v373 = vld [vmem:[%s1 + $0x80c] sm:$0xf]
    %v374 = vld [vmem:[%s1 + $0x810] sm:$0xff]
    %v375 = vld [vmem:[%s1 + $0x818] sm:$0xf]
    %v376 = vld [vmem:[%s1 + $0x81c] sm:$0xff]
    %v377 = vld [vmem:[%s1 + $0x824] sm:$0xf]
    %v378 = vld [vmem:[%s1 + $0x828] sm:$0xff]
    %v379 = vld [vmem:[%s1 + $0x830] sm:$0xf]
    %v380 = vld [vmem:[%s1 + $0x834] sm:$0xff]
    %v381 = vld [vmem:[%s1 + $0x83c] sm:$0xf]
    %v382 = vld [vmem:[%s1 + $0x840] sm:$0xff]
    %v383 = vld [vmem:[%s1 + $0x848] sm:$0xf]
    %v384 = vld [vmem:[%s1 + $0x84c] sm:$0xff]
    %v385 = vld [vmem:[%s1 + $0x854] sm:$0xf]
    %v386 = vld [vmem:[%s1 + $0x858] sm:$0xff]
    %v387 = vld [vmem:[%s1 + $0x860] sm:$0xf]
    %v388 = vld [vmem:[%s1 + $0x864] sm:$0xff]
    %v389 = vld [vmem:[%s1 + $0x86c] sm:$0xf]
    %v390 = vld [vmem:[%s1 + $0x870] sm:$0xff]
    %v391 = vld [vmem:[%s1 + $0x878] sm:$0xf]
    %v392 = vld [vmem:[%s1 + $0x87c] sm:$0xff]
    %v393 = vld [vmem:[%s1 + $0x884] sm:$0xf]
    %v394 = vld [vmem:[%s1 + $0x888] sm:$0xff]
    %v395 = vld [vmem:[%s1 + $0x890] sm:$0xf]
    %v396 = vld [vmem:[%s1 + $0x894] sm:$0xff]
    %v397 = vld [vmem:[%s1 + $0x89c] sm:$0xf]
    %v398 = vld [vmem:[%s1 + $0x8a0] sm:$0xff]
    %v399 = vld [vmem:[%s1 + $0x8a8] sm:$0xf]
    %v400 = vld [vmem:[%s1 + $0x8ac] sm:$0xff]
    %v401 = vld [vmem:[%s1 + $0x8b4] sm:$0xf]
    %v402 = vld [vmem:[%s1 + $0x8b8] sm:$0xff]
    %v403 = vld [vmem:[%s1 + $0x8c0] sm:$0xf]
    %v404 = vld [vmem:[%s1 + $0x8c4] sm:$0xff]
    %v405 = vld [vmem:[%s1 + $0x8cc] sm:$0xf]
    %v406 = vld [vmem:[%s1 + $0x8d0] sm:$0xff]
    %v407 = vld [vmem:[%s1 + $0x8d8] sm:$0xf]
    %v408 = vld [vmem:[%s1 + $0x8dc] sm:$0xff]
    %v409 = vld [vmem:[%s1 + $0x8e4] sm:$0xf]
    %v410 = vld [vmem:[%s1 + $0x8e8] sm:$0xff]
    %v411 = vld [vmem:[%s1 + $0x8f0] sm:$0xf]
    %v412 = vld [vmem:[%s1 + $0x8f4] sm:$0xff]
    %v413 = vld [vmem:[%s1 + $0x8fc] sm:$0xf]
    %v414 = vld [vmem:[%s1 + $0x900] sm:$0xff]
    %v415 = vld [vmem:[%s1 + $0x908] sm:$0xf]
    %v416 = vld [vmem:[%s1 + $0x90c] sm:$0xff]
    %v417 = vld [vmem:[%s1 + $0x914] sm:$0xf]
    %v418 = vld [vmem:[%s1 + $0x918] sm:$0xff]
    %v419 = vld [vmem:[%s1 + $0x920] sm:$0xf]
    %v420 = vld [vmem:[%s1 + $0x924] sm:$0xff]
    %v421 = vld [vmem:[%s1 + $0x92c] sm:$0xf]
    %v422 = vld [vmem:[%s1 + $0x930] sm:$0xff]
    %v423 = vld [vmem:[%s1 + $0x938] sm:$0xf]
    %v424 = vld [vmem:[%s1 + $0x93c] sm:$0xff]
    %v425 = vld [vmem:[%s1 + $0x944] sm:$0xf]
    %v426 = vld [vmem:[%s1 + $0x948] sm:$0xff]
    %v427 = vld [vmem:[%s1 + $0x950] sm:$0xf]
    %v428 = vld [vmem:[%s1 + $0x954] sm:$0xff]
    %v429 = vld [vmem:[%s1 + $0x95c] sm:$0xf]
    %v430 = vld [vmem:[%s1 + $0x960] sm:$0xff]
    %v431 = vld [vmem:[%s1 + $0x968] sm:$0xf]
    %v432 = vld [vmem:[%s1 + $0x96c] sm:$0xff]
    %v433 = vld [vmem:[%s1 + $0x974] sm:$0xf]
    %v434 = vld [vmem:[%s1 + $0x978] sm:$0xff]
    %v435 = vld [vmem:[%s1 + $0x980] sm:$0xf]
    %v436 = vld [vmem:[%s1 + $0x984] sm:$0xff]
    %v437 = vld [vmem:[%s1 + $0x98c] sm:$0xf]
    %v438 = vld [vmem:[%s1 + $0x990] sm:$0xff]
    %v439 = vld [vmem:[%s1 + $0x998] sm:$0xf]
    %v440 = vld [vmem:[%s1 + $0x99c] sm:$0xff]
    %v441 = vld [vmem:[%s1 + $0x9a4] sm:$0xf]
    %v442 = vld [vmem:[%s1 + $0x9a8] sm:$0xff]
    %v443 = vld [vmem:[%s1 + $0x9b0] sm:$0xf]
    %v444 = vld [vmem:[%s1 + $0x9b4] sm:$0xff]
    %v445 = vld [vmem:[%s1 + $0x9bc] sm:$0xf]
    %v446 = vld [vmem:[%s1 + $0x9c0] sm:$0xff]
    %v447 = vld [vmem:[%s1 + $0x9c8] sm:$0xf]
    %v448 = vld [vmem:[%s1 + $0x9cc] sm:$0xff]
    %v449 = vld [vmem:[%s1 + $0x9d4] sm:$0xf]
    %v450 = vld [vmem:[%s1 + $0x9d8] sm:$0xff]
    %v451 = vld [vmem:[%s1 + $0x9e0] sm:$0xf]
    %v452 = vld [vmem:[%s1 + $0x9e4] sm:$0xff]
    %v453 = vld [vmem:[%s1 + $0x9ec] sm:$0xf]
    %v454 = vld [vmem:[%s1 + $0x9f0] sm:$0xff]
    %v455 = vld [vmem:[%s1 + $0x9f8] sm:$0xf]
    %v456 = vld [vmem:[%s1 + $0x9fc] sm:$0xff]
    %v457 = vld [vmem:[%s1 + $0xa04] sm:$0xf]
    %v458 = vld [vmem:[%s1 + $0xa08] sm:$0xff]
    %v459 = vld [vmem:[%s1 + $0xa10] sm:$0xf]
    %v460 = vld [vmem:[%s1 + $0xa14] sm:$0xff]
    %v461 = vld [vmem:[%s1 + $0xa1c] sm:$0xf]
    %v462 = vld [vmem:[%s1 + $0xa20] sm:$0xff]
    %v463 = vld [vmem:[%s1 + $0xa28] sm:$0xf]
    %v464 = vld [vmem:[%s1 + $0xa2c] sm:$0xff]
    %v465 = vld [vmem:[%s1 + $0xa34] sm:$0xf]
    %v466 = vld [vmem:[%s1 + $0xa38] sm:$0xff]
    %v467 = vld [vmem:[%s1 + $0xa40] sm:$0xf]
    %v468 = vld [vmem:[%s1 + $0xa44] sm:$0xff]
    %v469 = vld [vmem:[%s1 + $0xa4c] sm:$0xf]
    %v470 = vld [vmem:[%s1 + $0xa50] sm:$0xff]
    %v471 = vld [vmem:[%s1 + $0xa58] sm:$0xf]
    %v472 = vld [vmem:[%s1 + $0xa5c] sm:$0xff]
    %v473 = vld [vmem:[%s1 + $0xa64] sm:$0xf]
    %v474 = vld [vmem:[%s1 + $0xa68] sm:$0xff]
    %v475 = vld [vmem:[%s1 + $0xa70] sm:$0xf]
    %v476 = vld [vmem:[%s1 + $0xa74] sm:$0xff]
    %v477 = vld [vmem:[%s1 + $0xa7c] sm:$0xf]
    %v478 = vld [vmem:[%s1 + $0xa80] sm:$0xff]
    %v479 = vld [vmem:[%s1 + $0xa88] sm:$0xf]
    %v480 = vld [vmem:[%s1 + $0xa8c] sm:$0xff]
    %v481 = vld [vmem:[%s1 + $0xa94] sm:$0xf]
    %v482 = vld [vmem:[%s1 + $0xa98] sm:$0xff]
    %v483 = vld [vmem:[%s1 + $0xaa0] sm:$0xf]
    %v484 = vld [vmem:[%s1 + $0xaa4] sm:$0xff]
    %v485 = vld [vmem:[%s1 + $0xaac] sm:$0xf]
    %v486 = vld [vmem:[%s1 + $0xab0] sm:$0xff]
    %v487 = vld [vmem:[%s1 + $0xab8] sm:$0xf]
    %v488 = vld [vmem:[%s1 + $0xabc] sm:$0xff]
    %v489 = vld [vmem:[%s1 + $0xac4] sm:$0xf]
    %v490 = vld [vmem:[%s1 + $0xac8] sm:$0xff]
    %v491 = vld [vmem:[%s1 + $0xad0] sm:$0xf]
    %v492 = vld [vmem:[%s1 + $0xad4] sm:$0xff]
    %v493 = vld [vmem:[%s1 + $0xadc] sm:$0xf]
    %v494 = vld [vmem:[%s1 + $0xae0] sm:$0xff]
    %v495 = vld [vmem:[%s1 + $0xae8] sm:$0xf]
    %v496 = vld [vmem:[%s1 + $0xaec] sm:$0xff]
    %v497 = vld [vmem:[%s1 + $0xaf4] sm:$0xf]
    %v498 = vld [vmem:[%s1 + $0xaf8] sm:$0xff]
    %v499 = vld [vmem:[%s1 + $0xb00] sm:$0xf]
    %v500 = vld [vmem:[%s1 + $0xb04] sm:$0xff]
    %v501 = vld [vmem:[%s1 + $0xb0c] sm:$0xf]
    %v502 = vld [vmem:[%s1 + $0xb10] sm:$0xff]
    %v503 = vld [vmem:[%s1 + $0xb18] sm:$0xf]
    %v504 = vld [vmem:[%s1 + $0xb1c] sm:$0xff]
    %v505 = vld [vmem:[%s1 + $0xb24] sm:$0xf]
    %v506 = vld [vmem:[%s1 + $0xb28] sm:$0xff]
    %v507 = vld [vmem:[%s1 + $0xb30] sm:$0xf]
    %v508 = vld [vmem:[%s1 + $0xb34] sm:$0xff]
    %v509 = vld [vmem:[%s1 + $0xb3c] sm:$0xf]
    %v510 = vld [vmem:[%s1 + $0xb40] sm:$0xff]
    %v511 = vld [vmem:[%s1 + $0xb48] sm:$0xf]
    %v512 = vld [vmem:[%s1 + $0xb4c] sm:$0xff]
    %v513 = vld [vmem:[%s1 + $0xb54] sm:$0xf]
    %v514 = vld [vmem:[%s1 + $0xb58] sm:$0xff]
    %v515 = vld [vmem:[%s1 + $0xb60] sm:$0xf]
    %v516 = vld [vmem:[%s1 + $0xb64] sm:$0xff]
    %v517 = vld [vmem:[%s1 + $0xb6c] sm:$0xf]
    %v518 = vld [vmem:[%s1 + $0xb70] sm:$0xff]
    %v519 = vld [vmem:[%s1 + $0xb78] sm:$0xf]
    %v520 = vld [vmem:[%s1 + $0xb7c] sm:$0xff]
    %v521 = vld [vmem:[%s1 + $0xb84] sm:$0xf]
    %v522 = vld [vmem:[%s1 + $0xb88] sm:$0xff]
    %v523 = vld [vmem:[%s1 + $0xb90] sm:$0xf]
    %v524 = vld [vmem:[%s1 + $0xb94] sm:$0xff]
    %v525 = vld [vmem:[%s1 + $0xb9c] sm:$0xf]
    %v526 = vld [vmem:[%s1 + $0xba0] sm:$0xff]
    %v527 = vld [vmem:[%s1 + $0xba8] sm:$0xf]
    %v528 = vld [vmem:[%s1 + $0xbac] sm:$0xff]
    %v529 = vld [vmem:[%s1 + $0xbb4] sm:$0xf]
    %v530 = vld [vmem:[%s1 + $0xbb8] sm:$0xff]
    %v531 = vld [vmem:[%s1 + $0xbc0] sm:$0xf]
    %v532 = vld [vmem:[%s1 + $0xbc4] sm:$0xff]
    %v533 = vld [vmem:[%s1 + $0xbcc] sm:$0xf]
    %v534 = vld [vmem:[%s1 + $0xbd0] sm:$0xff]
    %v535 = vld [vmem:[%s1 + $0xbd8] sm:$0xf]
    %v536 = vld [vmem:[%s1 + $0xbdc] sm:$0xff]
    %v537 = vld [vmem:[%s1 + $0xbe4] sm:$0xf]
    %v538 = vld [vmem:[%s1 + $0xbe8] sm:$0xff]
    %v539 = vld [vmem:[%s1 + $0xbf0] sm:$0xf]
    %v540 = vld [vmem:[%s1 + $0xbf4] sm:$0xff]
    %v541 = vld [vmem:[%s1 + $0xbfc] sm:$0xf]
    %v542 = vld [vmem:[%s2] sm:$0x7]
    %v544 = vlaneseq
    %v545 = vshrl.u32 %v544, 7
    %v546 = vsub.s32 0, %v545
    %v547 = vrot.slane %v542, %v546
    %v548 = vlaneseq
    %v549 = vshrl.u32 %v548, 7
    %v550 = vsub.s32 1, %v549
    %v551 = vrot.slane %v542, %v550
    %v552 = vlaneseq
    %v553 = vshrl.u32 %v552, 7
    %v554 = vsub.s32 2, %v553
    %v555 = vrot.slane %v542, %v554
    %v561 = vcombine.high %v28, %v28
    %v563 = vunpack.c.l.s4 1966171168
    %v564 = vunpack.c.0.s8 %v563
    %v565 = vlaneseq
    %v566 = vshrl.u32 %v565, 7
    %v567 = vsub.s32 %v564, %v566
    %v568 = vrot.slane %v28, %v567
    %v570 = vunpack.c.l.s4 1966171168
    %v571 = vunpack.c.0.s8 %v570
    %v572 = vlaneseq
    %v573 = vshrl.u32 %v572, 7
    %v574 = vsub.s32 %v571, %v573
    %v575 = vrot.slane %v561, %v574
    %v576 = vcombine.high %v568, %v568
    %v577 = vcombine.high %v575, %v575
    %v579 = vunpack.c.l.s4 1966171168
    %v580 = vunpack.c.0.s8 %v579
    %v581 = vlaneseq
    %v582 = vshrl.u32 %v581, 7
    %v583 = vsub.s32 %v580, %v582
    %v584 = vrot.slane %v568, %v583
    %v586 = vunpack.c.l.s4 1966171168
    %v587 = vunpack.c.0.s8 %v586
    %v588 = vlaneseq
    %v589 = vshrl.u32 %v588, 7
    %v590 = vsub.s32 %v587, %v589
    %v591 = vrot.slane %v575, %v590
    %v593 = vunpack.c.l.s4 1966171168
    %v594 = vunpack.c.0.s8 %v593
    %v595 = vlaneseq
    %v596 = vshrl.u32 %v595, 7
    %v597 = vsub.s32 %v594, %v596
    %v598 = vrot.slane %v576, %v597
    %v600 = vunpack.c.l.s4 1966171168
    %v601 = vunpack.c.0.s8 %v600
    %v602 = vlaneseq
    %v603 = vshrl.u32 %v602, 7
    %v604 = vsub.s32 %v601, %v603
    %v605 = vrot.slane %v577, %v604
    %v606 = vcombine.high %v584, %v584
    %v607 = vcombine.high %v591, %v591
    %v608 = vcombine.high %v598, %v598
    %v609 = vcombine.high %v605, %v605
    %v610 = vcombine.high %v29, %v29
    %v612 = vunpack.c.l.s4 1966171168
    %v613 = vunpack.c.0.s8 %v612
    %v614 = vlaneseq
    %v615 = vshrl.u32 %v614, 7
    %v616 = vsub.s32 %v613, %v615
    %v617 = vrot.slane %v29, %v616
    %v619 = vunpack.c.l.s4 1966171168
    %v620 = vunpack.c.0.s8 %v619
    %v621 = vlaneseq
    %v622 = vshrl.u32 %v621, 7
    %v623 = vsub.s32 %v620, %v622
    %v624 = vrot.slane %v610, %v623
    %v625 = vcombine.high %v617, %v617
    %v626 = vcombine.high %v624, %v624
    %v628 = vunpack.c.l.s4 1966171168
    %v629 = vunpack.c.0.s8 %v628
    %v630 = vlaneseq
    %v631 = vshrl.u32 %v630, 7
    %v632 = vsub.s32 %v629, %v631
    %v633 = vrot.slane %v617, %v632
    %v635 = vunpack.c.l.s4 1966171168
    %v636 = vunpack.c.0.s8 %v635
    %v637 = vlaneseq
    %v638 = vshrl.u32 %v637, 7
    %v639 = vsub.s32 %v636, %v638
    %v640 = vrot.slane %v624, %v639
    %v642 = vunpack.c.l.s4 1966171168
    %v643 = vunpack.c.0.s8 %v642
    %v644 = vlaneseq
    %v645 = vshrl.u32 %v644, 7
    %v646 = vsub.s32 %v643, %v645
    %v647 = vrot.slane %v625, %v646
    %v649 = vunpack.c.l.s4 1966171168
    %v650 = vunpack.c.0.s8 %v649
    %v651 = vlaneseq
    %v652 = vshrl.u32 %v651, 7
    %v653 = vsub.s32 %v650, %v652
    %v654 = vrot.slane %v626, %v653
    %v655 = vcombine.high %v633, %v633
    %v656 = vcombine.high %v640, %v640
    %v657 = vcombine.high %v647, %v647
    %v658 = vcombine.high %v654, %v654
    %v1187 = vunpack.c.l.b16 %v30
    %v1188 = vunpack.c.h.b16 %v30
    %v1189 = vunpack.c.l.b16 %v31
    %v1190 = vunpack.c.l.b16 %v32
    %v1191 = vunpack.c.h.b16 %v32
    %v1192 = vunpack.c.l.b16 %v33
    %v1193 = vunpack.c.l.b16 %v34
    %v1194 = vunpack.c.h.b16 %v34
    %v1195 = vunpack.c.l.b16 %v35
    %v1196 = vunpack.c.l.b16 %v36
    %v1197 = vunpack.c.h.b16 %v36
    %v1198 = vunpack.c.l.b16 %v37
    %v1199 = vunpack.c.l.b16 %v38
    %v1200 = vunpack.c.h.b16 %v38
    %v1201 = vunpack.c.l.b16 %v39
    %v1202 = vunpack.c.l.b16 %v40
    %v1203 = vunpack.c.h.b16 %v40
    %v1204 = vunpack.c.l.b16 %v41
    %v1205 = vunpack.c.l.b16 %v42
    %v1206 = vunpack.c.h.b16 %v42
    %v1207 = vunpack.c.l.b16 %v43
    %v1208 = vunpack.c.l.b16 %v44
    %v1209 = vunpack.c.h.b16 %v44
    %v1210 = vunpack.c.l.b16 %v45
    %v1211 = vunpack.c.l.b16 %v46
    %v1212 = vunpack.c.h.b16 %v46
    %v1213 = vunpack.c.l.b16 %v47
    %v1214 = vunpack.c.l.b16 %v48
    %v1215 = vunpack.c.h.b16 %v48
    %v1216 = vunpack.c.l.b16 %v49
    %v1217 = vunpack.c.l.b16 %v50
    %v1218 = vunpack.c.h.b16 %v50
    %v1219 = vunpack.c.l.b16 %v51
    %v1220 = vunpack.c.l.b16 %v52
    %v1221 = vunpack.c.h.b16 %v52
    %v1222 = vunpack.c.l.b16 %v53
    %v1223 = vunpack.c.l.b16 %v54
    %v1224 = vunpack.c.h.b16 %v54
    %v1225 = vunpack.c.l.b16 %v55
    %v1226 = vunpack.c.l.b16 %v56
    %v1227 = vunpack.c.h.b16 %v56
    %v1228 = vunpack.c.l.b16 %v57
    %v1229 = vunpack.c.l.b16 %v58
    %v1230 = vunpack.c.h.b16 %v58
    %v1231 = vunpack.c.l.b16 %v59
    %v1232 = vunpack.c.l.b16 %v60
    %v1233 = vunpack.c.h.b16 %v60
    %v1234 = vunpack.c.l.b16 %v61
    %v1235 = vunpack.c.l.b16 %v62
    %v1236 = vunpack.c.h.b16 %v62
    %v1237 = vunpack.c.l.b16 %v63
    %v1238 = vunpack.c.l.b16 %v64
    %v1239 = vunpack.c.h.b16 %v64
    %v1240 = vunpack.c.l.b16 %v65
    %v1241 = vunpack.c.l.b16 %v66
    %v1242 = vunpack.c.h.b16 %v66
    %v1243 = vunpack.c.l.b16 %v67
    %v1244 = vunpack.c.l.b16 %v68
    %v1245 = vunpack.c.h.b16 %v68
    %v1246 = vunpack.c.l.b16 %v69
    %v1247 = vunpack.c.l.b16 %v70
    %v1248 = vunpack.c.h.b16 %v70
    %v1249 = vunpack.c.l.b16 %v71
    %v1250 = vunpack.c.l.b16 %v72
    %v1251 = vunpack.c.h.b16 %v72
    %v1252 = vunpack.c.l.b16 %v73
    %v1253 = vunpack.c.l.b16 %v74
    %v1254 = vunpack.c.h.b16 %v74
    %v1255 = vunpack.c.l.b16 %v75
    %v1256 = vunpack.c.l.b16 %v76
    %v1257 = vunpack.c.h.b16 %v76
    %v1258 = vunpack.c.l.b16 %v77
    %v1259 = vunpack.c.l.b16 %v78
    %v1260 = vunpack.c.h.b16 %v78
    %v1261 = vunpack.c.l.b16 %v79
    %v1262 = vunpack.c.l.b16 %v80
    %v1263 = vunpack.c.h.b16 %v80
    %v1264 = vunpack.c.l.b16 %v81
    %v1265 = vunpack.c.l.b16 %v82
    %v1266 = vunpack.c.h.b16 %v82
    %v1267 = vunpack.c.l.b16 %v83
    %v1268 = vunpack.c.l.b16 %v84
    %v1269 = vunpack.c.h.b16 %v84
    %v1270 = vunpack.c.l.b16 %v85
    %v1271 = vunpack.c.l.b16 %v86
    %v1272 = vunpack.c.h.b16 %v86
    %v1273 = vunpack.c.l.b16 %v87
    %v1274 = vunpack.c.l.b16 %v88
    %v1275 = vunpack.c.h.b16 %v88
    %v1276 = vunpack.c.l.b16 %v89
    %v1277 = vunpack.c.l.b16 %v90
    %v1278 = vunpack.c.h.b16 %v90
    %v1279 = vunpack.c.l.b16 %v91
    %v1280 = vunpack.c.l.b16 %v92
    %v1281 = vunpack.c.h.b16 %v92
    %v1282 = vunpack.c.l.b16 %v93
    %v1283 = vunpack.c.l.b16 %v94
    %v1284 = vunpack.c.h.b16 %v94
    %v1285 = vunpack.c.l.b16 %v95
    %v1286 = vunpack.c.l.b16 %v96
    %v1287 = vunpack.c.h.b16 %v96
    %v1288 = vunpack.c.l.b16 %v97
    %v1289 = vunpack.c.l.b16 %v98
    %v1290 = vunpack.c.h.b16 %v98
    %v1291 = vunpack.c.l.b16 %v99
    %v1292 = vunpack.c.l.b16 %v100
    %v1293 = vunpack.c.h.b16 %v100
    %v1294 = vunpack.c.l.b16 %v101
    %v1295 = vunpack.c.l.b16 %v102
    %v1296 = vunpack.c.h.b16 %v102
    %v1297 = vunpack.c.l.b16 %v103
    %v1298 = vunpack.c.l.b16 %v104
    %v1299 = vunpack.c.h.b16 %v104
    %v1300 = vunpack.c.l.b16 %v105
    %v1301 = vunpack.c.l.b16 %v106
    %v1302 = vunpack.c.h.b16 %v106
    %v1303 = vunpack.c.l.b16 %v107
    %v1304 = vunpack.c.l.b16 %v108
    %v1305 = vunpack.c.h.b16 %v108
    %v1306 = vunpack.c.l.b16 %v109
    %v1307 = vunpack.c.l.b16 %v110
    %v1308 = vunpack.c.h.b16 %v110
    %v1309 = vunpack.c.l.b16 %v111
    %v1310 = vunpack.c.l.b16 %v112
    %v1311 = vunpack.c.h.b16 %v112
    %v1312 = vunpack.c.l.b16 %v113
    %v1313 = vunpack.c.l.b16 %v114
    %v1314 = vunpack.c.h.b16 %v114
    %v1315 = vunpack.c.l.b16 %v115
    %v1316 = vunpack.c.l.b16 %v116
    %v1317 = vunpack.c.h.b16 %v116
    %v1318 = vunpack.c.l.b16 %v117
    %v1319 = vunpack.c.l.b16 %v118
    %v1320 = vunpack.c.h.b16 %v118
    %v1321 = vunpack.c.l.b16 %v119
    %v1322 = vunpack.c.l.b16 %v120
    %v1323 = vunpack.c.h.b16 %v120
    %v1324 = vunpack.c.l.b16 %v121
    %v1325 = vunpack.c.l.b16 %v122
    %v1326 = vunpack.c.h.b16 %v122
    %v1327 = vunpack.c.l.b16 %v123
    %v1328 = vunpack.c.l.b16 %v124
    %v1329 = vunpack.c.h.b16 %v124
    %v1330 = vunpack.c.l.b16 %v125
    %v1331 = vunpack.c.l.b16 %v126
    %v1332 = vunpack.c.h.b16 %v126
    %v1333 = vunpack.c.l.b16 %v127
    %v1334 = vunpack.c.l.b16 %v128
    %v1335 = vunpack.c.h.b16 %v128
    %v1336 = vunpack.c.l.b16 %v129
    %v1337 = vunpack.c.l.b16 %v130
    %v1338 = vunpack.c.h.b16 %v130
    %v1339 = vunpack.c.l.b16 %v131
    %v1340 = vunpack.c.l.b16 %v132
    %v1341 = vunpack.c.h.b16 %v132
    %v1342 = vunpack.c.l.b16 %v133
    %v1343 = vunpack.c.l.b16 %v134
    %v1344 = vunpack.c.h.b16 %v134
    %v1345 = vunpack.c.l.b16 %v135
    %v1346 = vunpack.c.l.b16 %v136
    %v1347 = vunpack.c.h.b16 %v136
    %v1348 = vunpack.c.l.b16 %v137
    %v1349 = vunpack.c.l.b16 %v138
    %v1350 = vunpack.c.h.b16 %v138
    %v1351 = vunpack.c.l.b16 %v139
    %v1352 = vunpack.c.l.b16 %v140
    %v1353 = vunpack.c.h.b16 %v140
    %v1354 = vunpack.c.l.b16 %v141
    %v1355 = vunpack.c.l.b16 %v142
    %v1356 = vunpack.c.h.b16 %v142
    %v1357 = vunpack.c.l.b16 %v143
    %v1358 = vunpack.c.l.b16 %v144
    %v1359 = vunpack.c.h.b16 %v144
    %v1360 = vunpack.c.l.b16 %v145
    %v1361 = vunpack.c.l.b16 %v146
    %v1362 = vunpack.c.h.b16 %v146
    %v1363 = vunpack.c.l.b16 %v147
    %v1364 = vunpack.c.l.b16 %v148
    %v1365 = vunpack.c.h.b16 %v148
    %v1366 = vunpack.c.l.b16 %v149
    %v1367 = vunpack.c.l.b16 %v150
    %v1368 = vunpack.c.h.b16 %v150
    %v1369 = vunpack.c.l.b16 %v151
    %v1370 = vunpack.c.l.b16 %v152
    %v1371 = vunpack.c.h.b16 %v152
    %v1372 = vunpack.c.l.b16 %v153
    %v1373 = vunpack.c.l.b16 %v154
    %v1374 = vunpack.c.h.b16 %v154
    %v1375 = vunpack.c.l.b16 %v155
    %v1376 = vunpack.c.l.b16 %v156
    %v1377 = vunpack.c.h.b16 %v156
    %v1378 = vunpack.c.l.b16 %v157
    %v1379 = vunpack.c.l.b16 %v158
    %v1380 = vunpack.c.h.b16 %v158
    %v1381 = vunpack.c.l.b16 %v159
    %v1382 = vunpack.c.l.b16 %v160
    %v1383 = vunpack.c.h.b16 %v160
    %v1384 = vunpack.c.l.b16 %v161
    %v1385 = vunpack.c.l.b16 %v162
    %v1386 = vunpack.c.h.b16 %v162
    %v1387 = vunpack.c.l.b16 %v163
    %v1388 = vunpack.c.l.b16 %v164
    %v1389 = vunpack.c.h.b16 %v164
    %v1390 = vunpack.c.l.b16 %v165
    %v1391 = vunpack.c.l.b16 %v166
    %v1392 = vunpack.c.h.b16 %v166
    %v1393 = vunpack.c.l.b16 %v167
    %v1394 = vunpack.c.l.b16 %v168
    %v1395 = vunpack.c.h.b16 %v168
    %v1396 = vunpack.c.l.b16 %v169
    %v1397 = vunpack.c.l.b16 %v170
    %v1398 = vunpack.c.h.b16 %v170
    %v1399 = vunpack.c.l.b16 %v171
    %v1400 = vunpack.c.l.b16 %v172
    %v1401 = vunpack.c.h.b16 %v172
    %v1402 = vunpack.c.l.b16 %v173
    %v1403 = vunpack.c.l.b16 %v174
    %v1404 = vunpack.c.h.b16 %v174
    %v1405 = vunpack.c.l.b16 %v175
    %v1406 = vunpack.c.l.b16 %v176
    %v1407 = vunpack.c.h.b16 %v176
    %v1408 = vunpack.c.l.b16 %v177
    %v1409 = vunpack.c.l.b16 %v178
    %v1410 = vunpack.c.h.b16 %v178
    %v1411 = vunpack.c.l.b16 %v179
    %v1412 = vunpack.c.l.b16 %v180
    %v1413 = vunpack.c.h.b16 %v180
    %v1414 = vunpack.c.l.b16 %v181
    %v1415 = vunpack.c.l.b16 %v182
    %v1416 = vunpack.c.h.b16 %v182
    %v1417 = vunpack.c.l.b16 %v183
    %v1418 = vunpack.c.l.b16 %v184
    %v1419 = vunpack.c.h.b16 %v184
    %v1420 = vunpack.c.l.b16 %v185
    %v1421 = vunpack.c.l.b16 %v186
    %v1422 = vunpack.c.h.b16 %v186
    %v1423 = vunpack.c.l.b16 %v187
    %v1424 = vunpack.c.l.b16 %v188
    %v1425 = vunpack.c.h.b16 %v188
    %v1426 = vunpack.c.l.b16 %v189
    %v1427 = vunpack.c.l.b16 %v190
    %v1428 = vunpack.c.h.b16 %v190
    %v1429 = vunpack.c.l.b16 %v191
    %v1430 = vunpack.c.l.b16 %v192
    %v1431 = vunpack.c.h.b16 %v192
    %v1432 = vunpack.c.l.b16 %v193
    %v1433 = vunpack.c.l.b16 %v194
    %v1434 = vunpack.c.h.b16 %v194
    %v1435 = vunpack.c.l.b16 %v195
    %v1436 = vunpack.c.l.b16 %v196
    %v1437 = vunpack.c.h.b16 %v196
    %v1438 = vunpack.c.l.b16 %v197
    %v1439 = vunpack.c.l.b16 %v198
    %v1440 = vunpack.c.h.b16 %v198
    %v1441 = vunpack.c.l.b16 %v199
    %v1442 = vunpack.c.l.b16 %v200
    %v1443 = vunpack.c.h.b16 %v200
    %v1444 = vunpack.c.l.b16 %v201
    %v1445 = vunpack.c.l.b16 %v202
    %v1446 = vunpack.c.h.b16 %v202
    %v1447 = vunpack.c.l.b16 %v203
    %v1448 = vunpack.c.l.b16 %v204
    %v1449 = vunpack.c.h.b16 %v204
    %v1450 = vunpack.c.l.b16 %v205
    %v1451 = vunpack.c.l.b16 %v206
    %v1452 = vunpack.c.h.b16 %v206
    %v1453 = vunpack.c.l.b16 %v207
    %v1454 = vunpack.c.l.b16 %v208
    %v1455 = vunpack.c.h.b16 %v208
    %v1456 = vunpack.c.l.b16 %v209
    %v1457 = vunpack.c.l.b16 %v210
    %v1458 = vunpack.c.h.b16 %v210
    %v1459 = vunpack.c.l.b16 %v211
    %v1460 = vunpack.c.l.b16 %v212
    %v1461 = vunpack.c.h.b16 %v212
    %v1462 = vunpack.c.l.b16 %v213
    %v1463 = vunpack.c.l.b16 %v214
    %v1464 = vunpack.c.h.b16 %v214
    %v1465 = vunpack.c.l.b16 %v215
    %v1466 = vunpack.c.l.b16 %v216
    %v1467 = vunpack.c.h.b16 %v216
    %v1468 = vunpack.c.l.b16 %v217
    %v1469 = vunpack.c.l.b16 %v218
    %v1470 = vunpack.c.h.b16 %v218
    %v1471 = vunpack.c.l.b16 %v219
    %v1472 = vunpack.c.l.b16 %v220
    %v1473 = vunpack.c.h.b16 %v220
    %v1474 = vunpack.c.l.b16 %v221
    %v1475 = vunpack.c.l.b16 %v222
    %v1476 = vunpack.c.h.b16 %v222
    %v1477 = vunpack.c.l.b16 %v223
    %v1478 = vunpack.c.l.b16 %v224
    %v1479 = vunpack.c.h.b16 %v224
    %v1480 = vunpack.c.l.b16 %v225
    %v1481 = vunpack.c.l.b16 %v226
    %v1482 = vunpack.c.h.b16 %v226
    %v1483 = vunpack.c.l.b16 %v227
    %v1484 = vunpack.c.l.b16 %v228
    %v1485 = vunpack.c.h.b16 %v228
    %v1486 = vunpack.c.l.b16 %v229
    %v1487 = vunpack.c.l.b16 %v230
    %v1488 = vunpack.c.h.b16 %v230
    %v1489 = vunpack.c.l.b16 %v231
    %v1490 = vunpack.c.l.b16 %v232
    %v1491 = vunpack.c.h.b16 %v232
    %v1492 = vunpack.c.l.b16 %v233
    %v1493 = vunpack.c.l.b16 %v234
    %v1494 = vunpack.c.h.b16 %v234
    %v1495 = vunpack.c.l.b16 %v235
    %v1496 = vunpack.c.l.b16 %v236
    %v1497 = vunpack.c.h.b16 %v236
    %v1498 = vunpack.c.l.b16 %v237
    %v1499 = vunpack.c.l.b16 %v238
    %v1500 = vunpack.c.h.b16 %v238
    %v1501 = vunpack.c.l.b16 %v239
    %v1502 = vunpack.c.l.b16 %v240
    %v1503 = vunpack.c.h.b16 %v240
    %v1504 = vunpack.c.l.b16 %v241
    %v1505 = vunpack.c.l.b16 %v242
    %v1506 = vunpack.c.h.b16 %v242
    %v1507 = vunpack.c.l.b16 %v243
    %v1508 = vunpack.c.l.b16 %v244
    %v1509 = vunpack.c.h.b16 %v244
    %v1510 = vunpack.c.l.b16 %v245
    %v1511 = vunpack.c.l.b16 %v246
    %v1512 = vunpack.c.h.b16 %v246
    %v1513 = vunpack.c.l.b16 %v247
    %v1514 = vunpack.c.l.b16 %v248
    %v1515 = vunpack.c.h.b16 %v248
    %v1516 = vunpack.c.l.b16 %v249
    %v1517 = vunpack.c.l.b16 %v250
    %v1518 = vunpack.c.h.b16 %v250
    %v1519 = vunpack.c.l.b16 %v251
    %v1520 = vunpack.c.l.b16 %v252
    %v1521 = vunpack.c.h.b16 %v252
    %v1522 = vunpack.c.l.b16 %v253
    %v1523 = vunpack.c.l.b16 %v254
    %v1524 = vunpack.c.h.b16 %v254
    %v1525 = vunpack.c.l.b16 %v255
    %v1526 = vunpack.c.l.b16 %v256
    %v1527 = vunpack.c.h.b16 %v256
    %v1528 = vunpack.c.l.b16 %v257
    %v1529 = vunpack.c.l.b16 %v258
    %v1530 = vunpack.c.h.b16 %v258
    %v1531 = vunpack.c.l.b16 %v259
    %v1532 = vunpack.c.l.b16 %v260
    %v1533 = vunpack.c.h.b16 %v260
    %v1534 = vunpack.c.l.b16 %v261
    %v1535 = vunpack.c.l.b16 %v262
    %v1536 = vunpack.c.h.b16 %v262
    %v1537 = vunpack.c.l.b16 %v263
    %v1538 = vunpack.c.l.b16 %v264
    %v1539 = vunpack.c.h.b16 %v264
    %v1540 = vunpack.c.l.b16 %v265
    %v1541 = vunpack.c.l.b16 %v266
    %v1542 = vunpack.c.h.b16 %v266
    %v1543 = vunpack.c.l.b16 %v267
    %v1544 = vunpack.c.l.b16 %v268
    %v1545 = vunpack.c.h.b16 %v268
    %v1546 = vunpack.c.l.b16 %v269
    %v1547 = vunpack.c.l.b16 %v270
    %v1548 = vunpack.c.h.b16 %v270
    %v1549 = vunpack.c.l.b16 %v271
    %v1550 = vunpack.c.l.b16 %v272
    %v1551 = vunpack.c.h.b16 %v272
    %v1552 = vunpack.c.l.b16 %v273
    %v1553 = vunpack.c.l.b16 %v274
    %v1554 = vunpack.c.h.b16 %v274
    %v1555 = vunpack.c.l.b16 %v275
    %v1556 = vunpack.c.l.b16 %v276
    %v1557 = vunpack.c.h.b16 %v276
    %v1558 = vunpack.c.l.b16 %v277
    %v1559 = vunpack.c.l.b16 %v278
    %v1560 = vunpack.c.h.b16 %v278
    %v1561 = vunpack.c.l.b16 %v279
    %v1562 = vunpack.c.l.b16 %v280
    %v1563 = vunpack.c.h.b16 %v280
    %v1564 = vunpack.c.l.b16 %v281
    %v1565 = vunpack.c.l.b16 %v282
    %v1566 = vunpack.c.h.b16 %v282
    %v1567 = vunpack.c.l.b16 %v283
    %v1568 = vunpack.c.l.b16 %v284
    %v1569 = vunpack.c.h.b16 %v284
    %v1570 = vunpack.c.l.b16 %v285
    %v1571 = vunpack.c.l.b16 %v286
    %v1572 = vunpack.c.h.b16 %v286
    %v1573 = vunpack.c.l.b16 %v287
    %v1574 = vunpack.c.l.b16 %v288
    %v1575 = vunpack.c.h.b16 %v288
    %v1576 = vunpack.c.l.b16 %v289
    %v1577 = vunpack.c.l.b16 %v290
    %v1578 = vunpack.c.h.b16 %v290
    %v1579 = vunpack.c.l.b16 %v291
    %v1580 = vunpack.c.l.b16 %v292
    %v1581 = vunpack.c.h.b16 %v292
    %v1582 = vunpack.c.l.b16 %v293
    %v1583 = vunpack.c.l.b16 %v294
    %v1584 = vunpack.c.h.b16 %v294
    %v1585 = vunpack.c.l.b16 %v295
    %v1586 = vunpack.c.l.b16 %v296
    %v1587 = vunpack.c.h.b16 %v296
    %v1588 = vunpack.c.l.b16 %v297
    %v1589 = vunpack.c.l.b16 %v298
    %v1590 = vunpack.c.h.b16 %v298
    %v1591 = vunpack.c.l.b16 %v299
    %v1592 = vunpack.c.l.b16 %v300
    %v1593 = vunpack.c.h.b16 %v300
    %v1594 = vunpack.c.l.b16 %v301
    %v1595 = vunpack.c.l.b16 %v302
    %v1596 = vunpack.c.h.b16 %v302
    %v1597 = vunpack.c.l.b16 %v303
    %v1598 = vunpack.c.l.b16 %v304
    %v1599 = vunpack.c.h.b16 %v304
    %v1600 = vunpack.c.l.b16 %v305
    %v1601 = vunpack.c.l.b16 %v306
    %v1602 = vunpack.c.h.b16 %v306
    %v1603 = vunpack.c.l.b16 %v307
    %v1604 = vunpack.c.l.b16 %v308
    %v1605 = vunpack.c.h.b16 %v308
    %v1606 = vunpack.c.l.b16 %v309
    %v1607 = vunpack.c.l.b16 %v310
    %v1608 = vunpack.c.h.b16 %v310
    %v1609 = vunpack.c.l.b16 %v311
    %v1610 = vunpack.c.l.b16 %v312
    %v1611 = vunpack.c.h.b16 %v312
    %v1612 = vunpack.c.l.b16 %v313
    %v1613 = vunpack.c.l.b16 %v314
    %v1614 = vunpack.c.h.b16 %v314
    %v1615 = vunpack.c.l.b16 %v315
    %v1616 = vunpack.c.l.b16 %v316
    %v1617 = vunpack.c.h.b16 %v316
    %v1618 = vunpack.c.l.b16 %v317
    %v1619 = vunpack.c.l.b16 %v318
    %v1620 = vunpack.c.h.b16 %v318
    %v1621 = vunpack.c.l.b16 %v319
    %v1622 = vunpack.c.l.b16 %v320
    %v1623 = vunpack.c.h.b16 %v320
    %v1624 = vunpack.c.l.b16 %v321
    %v1625 = vunpack.c.l.b16 %v322
    %v1626 = vunpack.c.h.b16 %v322
    %v1627 = vunpack.c.l.b16 %v323
    %v1628 = vunpack.c.l.b16 %v324
    %v1629 = vunpack.c.h.b16 %v324
    %v1630 = vunpack.c.l.b16 %v325
    %v1631 = vunpack.c.l.b16 %v326
    %v1632 = vunpack.c.h.b16 %v326
    %v1633 = vunpack.c.l.b16 %v327
    %v1634 = vunpack.c.l.b16 %v328
    %v1635 = vunpack.c.h.b16 %v328
    %v1636 = vunpack.c.l.b16 %v329
    %v1637 = vunpack.c.l.b16 %v330
    %v1638 = vunpack.c.h.b16 %v330
    %v1639 = vunpack.c.l.b16 %v331
    %v1640 = vunpack.c.l.b16 %v332
    %v1641 = vunpack.c.h.b16 %v332
    %v1642 = vunpack.c.l.b16 %v333
    %v1643 = vunpack.c.l.b16 %v334
    %v1644 = vunpack.c.h.b16 %v334
    %v1645 = vunpack.c.l.b16 %v335
    %v1646 = vunpack.c.l.b16 %v336
    %v1647 = vunpack.c.h.b16 %v336
    %v1648 = vunpack.c.l.b16 %v337
    %v1649 = vunpack.c.l.b16 %v338
    %v1650 = vunpack.c.h.b16 %v338
    %v1651 = vunpack.c.l.b16 %v339
    %v1652 = vunpack.c.l.b16 %v340
    %v1653 = vunpack.c.h.b16 %v340
    %v1654 = vunpack.c.l.b16 %v341
    %v1655 = vunpack.c.l.b16 %v342
    %v1656 = vunpack.c.h.b16 %v342
    %v1657 = vunpack.c.l.b16 %v343
    %v1658 = vunpack.c.l.b16 %v344
    %v1659 = vunpack.c.h.b16 %v344
    %v1660 = vunpack.c.l.b16 %v345
    %v1661 = vunpack.c.l.b16 %v346
    %v1662 = vunpack.c.h.b16 %v346
    %v1663 = vunpack.c.l.b16 %v347
    %v1664 = vunpack.c.l.b16 %v348
    %v1665 = vunpack.c.h.b16 %v348
    %v1666 = vunpack.c.l.b16 %v349
    %v1667 = vunpack.c.l.b16 %v350
    %v1668 = vunpack.c.h.b16 %v350
    %v1669 = vunpack.c.l.b16 %v351
    %v1670 = vunpack.c.l.b16 %v352
    %v1671 = vunpack.c.h.b16 %v352
    %v1672 = vunpack.c.l.b16 %v353
    %v1673 = vunpack.c.l.b16 %v354
    %v1674 = vunpack.c.h.b16 %v354
    %v1675 = vunpack.c.l.b16 %v355
    %v1676 = vunpack.c.l.b16 %v356
    %v1677 = vunpack.c.h.b16 %v356
    %v1678 = vunpack.c.l.b16 %v357
    %v1679 = vunpack.c.l.b16 %v358
    %v1680 = vunpack.c.h.b16 %v358
    %v1681 = vunpack.c.l.b16 %v359
    %v1682 = vunpack.c.l.b16 %v360
    %v1683 = vunpack.c.h.b16 %v360
    %v1684 = vunpack.c.l.b16 %v361
    %v1685 = vunpack.c.l.b16 %v362
    %v1686 = vunpack.c.h.b16 %v362
    %v1687 = vunpack.c.l.b16 %v363
    %v1688 = vunpack.c.l.b16 %v364
    %v1689 = vunpack.c.h.b16 %v364
    %v1690 = vunpack.c.l.b16 %v365
    %v1691 = vunpack.c.l.b16 %v366
    %v1692 = vunpack.c.h.b16 %v366
    %v1693 = vunpack.c.l.b16 %v367
    %v1694 = vunpack.c.l.b16 %v368
    %v1695 = vunpack.c.h.b16 %v368
    %v1696 = vunpack.c.l.b16 %v369
    %v1697 = vunpack.c.l.b16 %v370
    %v1698 = vunpack.c.h.b16 %v370
    %v1699 = vunpack.c.l.b16 %v371
    %v1700 = vunpack.c.l.b16 %v372
    %v1701 = vunpack.c.h.b16 %v372
    %v1702 = vunpack.c.l.b16 %v373
    %v1703 = vunpack.c.l.b16 %v374
    %v1704 = vunpack.c.h.b16 %v374
    %v1705 = vunpack.c.l.b16 %v375
    %v1706 = vunpack.c.l.b16 %v376
    %v1707 = vunpack.c.h.b16 %v376
    %v1708 = vunpack.c.l.b16 %v377
    %v1709 = vunpack.c.l.b16 %v378
    %v1710 = vunpack.c.h.b16 %v378
    %v1711 = vunpack.c.l.b16 %v379
    %v1712 = vunpack.c.l.b16 %v380
    %v1713 = vunpack.c.h.b16 %v380
    %v1714 = vunpack.c.l.b16 %v381
    %v1715 = vunpack.c.l.b16 %v382
    %v1716 = vunpack.c.h.b16 %v382
    %v1717 = vunpack.c.l.b16 %v383
    %v1718 = vunpack.c.l.b16 %v384
    %v1719 = vunpack.c.h.b16 %v384
    %v1720 = vunpack.c.l.b16 %v385
    %v1721 = vunpack.c.l.b16 %v386
    %v1722 = vunpack.c.h.b16 %v386
    %v1723 = vunpack.c.l.b16 %v387
    %v1724 = vunpack.c.l.b16 %v388
    %v1725 = vunpack.c.h.b16 %v388
    %v1726 = vunpack.c.l.b16 %v389
    %v1727 = vunpack.c.l.b16 %v390
    %v1728 = vunpack.c.h.b16 %v390
    %v1729 = vunpack.c.l.b16 %v391
    %v1730 = vunpack.c.l.b16 %v392
    %v1731 = vunpack.c.h.b16 %v392
    %v1732 = vunpack.c.l.b16 %v393
    %v1733 = vunpack.c.l.b16 %v394
    %v1734 = vunpack.c.h.b16 %v394
    %v1735 = vunpack.c.l.b16 %v395
    %v1736 = vunpack.c.l.b16 %v396
    %v1737 = vunpack.c.h.b16 %v396
    %v1738 = vunpack.c.l.b16 %v397
    %v1739 = vunpack.c.l.b16 %v398
    %v1740 = vunpack.c.h.b16 %v398
    %v1741 = vunpack.c.l.b16 %v399
    %v1742 = vunpack.c.l.b16 %v400
    %v1743 = vunpack.c.h.b16 %v400
    %v1744 = vunpack.c.l.b16 %v401
    %v1745 = vunpack.c.l.b16 %v402
    %v1746 = vunpack.c.h.b16 %v402
    %v1747 = vunpack.c.l.b16 %v403
    %v1748 = vunpack.c.l.b16 %v404
    %v1749 = vunpack.c.h.b16 %v404
    %v1750 = vunpack.c.l.b16 %v405
    %v1751 = vunpack.c.l.b16 %v406
    %v1752 = vunpack.c.h.b16 %v406
    %v1753 = vunpack.c.l.b16 %v407
    %v1754 = vunpack.c.l.b16 %v408
    %v1755 = vunpack.c.h.b16 %v408
    %v1756 = vunpack.c.l.b16 %v409
    %v1757 = vunpack.c.l.b16 %v410
    %v1758 = vunpack.c.h.b16 %v410
    %v1759 = vunpack.c.l.b16 %v411
    %v1760 = vunpack.c.l.b16 %v412
    %v1761 = vunpack.c.h.b16 %v412
    %v1762 = vunpack.c.l.b16 %v413
    %v1763 = vunpack.c.l.b16 %v414
    %v1764 = vunpack.c.h.b16 %v414
    %v1765 = vunpack.c.l.b16 %v415
    %v1766 = vunpack.c.l.b16 %v416
    %v1767 = vunpack.c.h.b16 %v416
    %v1768 = vunpack.c.l.b16 %v417
    %v1769 = vunpack.c.l.b16 %v418
    %v1770 = vunpack.c.h.b16 %v418
    %v1771 = vunpack.c.l.b16 %v419
    %v1772 = vunpack.c.l.b16 %v420
    %v1773 = vunpack.c.h.b16 %v420
    %v1774 = vunpack.c.l.b16 %v421
    %v1775 = vunpack.c.l.b16 %v422
    %v1776 = vunpack.c.h.b16 %v422
    %v1777 = vunpack.c.l.b16 %v423
    %v1778 = vunpack.c.l.b16 %v424
    %v1779 = vunpack.c.h.b16 %v424
    %v1780 = vunpack.c.l.b16 %v425
    %v1781 = vunpack.c.l.b16 %v426
    %v1782 = vunpack.c.h.b16 %v426
    %v1783 = vunpack.c.l.b16 %v427
    %v1784 = vunpack.c.l.b16 %v428
    %v1785 = vunpack.c.h.b16 %v428
    %v1786 = vunpack.c.l.b16 %v429
    %v1787 = vunpack.c.l.b16 %v430
    %v1788 = vunpack.c.h.b16 %v430
    %v1789 = vunpack.c.l.b16 %v431
    %v1790 = vunpack.c.l.b16 %v432
    %v1791 = vunpack.c.h.b16 %v432
    %v1792 = vunpack.c.l.b16 %v433
    %v1793 = vunpack.c.l.b16 %v434
    %v1794 = vunpack.c.h.b16 %v434
    %v1795 = vunpack.c.l.b16 %v435
    %v1796 = vunpack.c.l.b16 %v436
    %v1797 = vunpack.c.h.b16 %v436
    %v1798 = vunpack.c.l.b16 %v437
    %v1799 = vunpack.c.l.b16 %v438
    %v1800 = vunpack.c.h.b16 %v438
    %v1801 = vunpack.c.l.b16 %v439
    %v1802 = vunpack.c.l.b16 %v440
    %v1803 = vunpack.c.h.b16 %v440
    %v1804 = vunpack.c.l.b16 %v441
    %v1805 = vunpack.c.l.b16 %v442
    %v1806 = vunpack.c.h.b16 %v442
    %v1807 = vunpack.c.l.b16 %v443
    %v1808 = vunpack.c.l.b16 %v444
    %v1809 = vunpack.c.h.b16 %v444
    %v1810 = vunpack.c.l.b16 %v445
    %v1811 = vunpack.c.l.b16 %v446
    %v1812 = vunpack.c.h.b16 %v446
    %v1813 = vunpack.c.l.b16 %v447
    %v1814 = vunpack.c.l.b16 %v448
    %v1815 = vunpack.c.h.b16 %v448
    %v1816 = vunpack.c.l.b16 %v449
    %v1817 = vunpack.c.l.b16 %v450
    %v1818 = vunpack.c.h.b16 %v450
    %v1819 = vunpack.c.l.b16 %v451
    %v1820 = vunpack.c.l.b16 %v452
    %v1821 = vunpack.c.h.b16 %v452
    %v1822 = vunpack.c.l.b16 %v453
    %v1823 = vunpack.c.l.b16 %v454
    %v1824 = vunpack.c.h.b16 %v454
    %v1825 = vunpack.c.l.b16 %v455
    %v1826 = vunpack.c.l.b16 %v456
    %v1827 = vunpack.c.h.b16 %v456
    %v1828 = vunpack.c.l.b16 %v457
    %v1829 = vunpack.c.l.b16 %v458
    %v1830 = vunpack.c.h.b16 %v458
    %v1831 = vunpack.c.l.b16 %v459
    %v1832 = vunpack.c.l.b16 %v460
    %v1833 = vunpack.c.h.b16 %v460
    %v1834 = vunpack.c.l.b16 %v461
    %v1835 = vunpack.c.l.b16 %v462
    %v1836 = vunpack.c.h.b16 %v462
    %v1837 = vunpack.c.l.b16 %v463
    %v1838 = vunpack.c.l.b16 %v464
    %v1839 = vunpack.c.h.b16 %v464
    %v1840 = vunpack.c.l.b16 %v465
    %v1841 = vunpack.c.l.b16 %v466
    %v1842 = vunpack.c.h.b16 %v466
    %v1843 = vunpack.c.l.b16 %v467
    %v1844 = vunpack.c.l.b16 %v468
    %v1845 = vunpack.c.h.b16 %v468
    %v1846 = vunpack.c.l.b16 %v469
    %v1847 = vunpack.c.l.b16 %v470
    %v1848 = vunpack.c.h.b16 %v470
    %v1849 = vunpack.c.l.b16 %v471
    %v1850 = vunpack.c.l.b16 %v472
    %v1851 = vunpack.c.h.b16 %v472
    %v1852 = vunpack.c.l.b16 %v473
    %v1853 = vunpack.c.l.b16 %v474
    %v1854 = vunpack.c.h.b16 %v474
    %v1855 = vunpack.c.l.b16 %v475
    %v1856 = vunpack.c.l.b16 %v476
    %v1857 = vunpack.c.h.b16 %v476
    %v1858 = vunpack.c.l.b16 %v477
    %v1859 = vunpack.c.l.b16 %v478
    %v1860 = vunpack.c.h.b16 %v478
    %v1861 = vunpack.c.l.b16 %v479
    %v1862 = vunpack.c.l.b16 %v480
    %v1863 = vunpack.c.h.b16 %v480
    %v1864 = vunpack.c.l.b16 %v481
    %v1865 = vunpack.c.l.b16 %v482
    %v1866 = vunpack.c.h.b16 %v482
    %v1867 = vunpack.c.l.b16 %v483
    %v1868 = vunpack.c.l.b16 %v484
    %v1869 = vunpack.c.h.b16 %v484
    %v1870 = vunpack.c.l.b16 %v485
    %v1871 = vunpack.c.l.b16 %v486
    %v1872 = vunpack.c.h.b16 %v486
    %v1873 = vunpack.c.l.b16 %v487
    %v1874 = vunpack.c.l.b16 %v488
    %v1875 = vunpack.c.h.b16 %v488
    %v1876 = vunpack.c.l.b16 %v489
    %v1877 = vunpack.c.l.b16 %v490
    %v1878 = vunpack.c.h.b16 %v490
    %v1879 = vunpack.c.l.b16 %v491
    %v1880 = vunpack.c.l.b16 %v492
    %v1881 = vunpack.c.h.b16 %v492
    %v1882 = vunpack.c.l.b16 %v493
    %v1883 = vunpack.c.l.b16 %v494
    %v1884 = vunpack.c.h.b16 %v494
    %v1885 = vunpack.c.l.b16 %v495
    %v1886 = vunpack.c.l.b16 %v496
    %v1887 = vunpack.c.h.b16 %v496
    %v1888 = vunpack.c.l.b16 %v497
    %v1889 = vunpack.c.l.b16 %v498
    %v1890 = vunpack.c.h.b16 %v498
    %v1891 = vunpack.c.l.b16 %v499
    %v1892 = vunpack.c.l.b16 %v500
    %v1893 = vunpack.c.h.b16 %v500
    %v1894 = vunpack.c.l.b16 %v501
    %v1895 = vunpack.c.l.b16 %v502
    %v1896 = vunpack.c.h.b16 %v502
    %v1897 = vunpack.c.l.b16 %v503
    %v1898 = vunpack.c.l.b16 %v504
    %v1899 = vunpack.c.h.b16 %v504
    %v1900 = vunpack.c.l.b16 %v505
    %v1901 = vunpack.c.l.b16 %v506
    %v1902 = vunpack.c.h.b16 %v506
    %v1903 = vunpack.c.l.b16 %v507
    %v1904 = vunpack.c.l.b16 %v508
    %v1905 = vunpack.c.h.b16 %v508
    %v1906 = vunpack.c.l.b16 %v509
    %v1907 = vunpack.c.l.b16 %v510
    %v1908 = vunpack.c.h.b16 %v510
    %v1909 = vunpack.c.l.b16 %v511
    %v1910 = vunpack.c.l.b16 %v512
    %v1911 = vunpack.c.h.b16 %v512
    %v1912 = vunpack.c.l.b16 %v513
    %v1913 = vunpack.c.l.b16 %v514
    %v1914 = vunpack.c.h.b16 %v514
    %v1915 = vunpack.c.l.b16 %v515
    %v1916 = vunpack.c.l.b16 %v516
    %v1917 = vunpack.c.h.b16 %v516
    %v1918 = vunpack.c.l.b16 %v517
    %v1919 = vunpack.c.l.b16 %v518
    %v1920 = vunpack.c.h.b16 %v518
    %v1921 = vunpack.c.l.b16 %v519
    %v1922 = vunpack.c.l.b16 %v520
    %v1923 = vunpack.c.h.b16 %v520
    %v1924 = vunpack.c.l.b16 %v521
    %v1925 = vunpack.c.l.b16 %v522
    %v1926 = vunpack.c.h.b16 %v522
    %v1927 = vunpack.c.l.b16 %v523
    %v1928 = vunpack.c.l.b16 %v524
    %v1929 = vunpack.c.h.b16 %v524
    %v1930 = vunpack.c.l.b16 %v525
    %v1931 = vunpack.c.l.b16 %v526
    %v1932 = vunpack.c.h.b16 %v526
    %v1933 = vunpack.c.l.b16 %v527
    %v1934 = vunpack.c.l.b16 %v528
    %v1935 = vunpack.c.h.b16 %v528
    %v1936 = vunpack.c.l.b16 %v529
    %v1937 = vunpack.c.l.b16 %v530
    %v1938 = vunpack.c.h.b16 %v530
    %v1939 = vunpack.c.l.b16 %v531
    %v1940 = vunpack.c.l.b16 %v532
    %v1941 = vunpack.c.h.b16 %v532
    %v1942 = vunpack.c.l.b16 %v533
    %v1943 = vunpack.c.l.b16 %v534
    %v1944 = vunpack.c.h.b16 %v534
    %v1945 = vunpack.c.l.b16 %v535
    %v1946 = vunpack.c.l.b16 %v536
    %v1947 = vunpack.c.h.b16 %v536
    %v1948 = vunpack.c.l.b16 %v537
    %v1949 = vunpack.c.l.b16 %v538
    %v1950 = vunpack.c.h.b16 %v538
    %v1951 = vunpack.c.l.b16 %v539
    %v1952 = vunpack.c.l.b16 %v540
    %v1953 = vunpack.c.h.b16 %v540
    %v1954 = vunpack.c.l.b16 %v541
    %v1955 = vpack.c.b16 %v1190, %v1187
    %v1956 = vpack.c.b16 %v1191, %v1188
    %v1957 = vpack.c.b16 %v1192, %v1189
    %v1958 = vpack.c.b16 %v1196, %v1193
    %v1959 = vpack.c.b16 %v1197, %v1194
    %v1960 = vpack.c.b16 %v1198, %v1195
    %v1961 = vpack.c.b16 %v1202, %v1199
    %v1962 = vpack.c.b16 %v1203, %v1200
    %v1963 = vpack.c.b16 %v1204, %v1201
    %v1964 = vpack.c.b16 %v1208, %v1205
    %v1965 = vpack.c.b16 %v1209, %v1206
    %v1966 = vpack.c.b16 %v1210, %v1207
    %v1967 = vpack.c.b16 %v1214, %v1211
    %v1968 = vpack.c.b16 %v1215, %v1212
    %v1969 = vpack.c.b16 %v1216, %v1213
    %v1970 = vpack.c.b16 %v1220, %v1217
    %v1971 = vpack.c.b16 %v1221, %v1218
    %v1972 = vpack.c.b16 %v1222, %v1219
    %v1973 = vpack.c.b16 %v1226, %v1223
    %v1974 = vpack.c.b16 %v1227, %v1224
    %v1975 = vpack.c.b16 %v1228, %v1225
    %v1976 = vpack.c.b16 %v1232, %v1229
    %v1977 = vpack.c.b16 %v1233, %v1230
    %v1978 = vpack.c.b16 %v1234, %v1231
    %v1979 = vpack.c.b16 %v1238, %v1235
    %v1980 = vpack.c.b16 %v1239, %v1236
    %v1981 = vpack.c.b16 %v1240, %v1237
    %v1982 = vpack.c.b16 %v1244, %v1241
    %v1983 = vpack.c.b16 %v1245, %v1242
    %v1984 = vpack.c.b16 %v1246, %v1243
    %v1985 = vpack.c.b16 %v1250, %v1247
    %v1986 = vpack.c.b16 %v1251, %v1248
    %v1987 = vpack.c.b16 %v1252, %v1249
    %v1988 = vpack.c.b16 %v1256, %v1253
    %v1989 = vpack.c.b16 %v1257, %v1254
    %v1990 = vpack.c.b16 %v1258, %v1255
    %v1991 = vpack.c.b16 %v1262, %v1259
    %v1992 = vpack.c.b16 %v1263, %v1260
    %v1993 = vpack.c.b16 %v1264, %v1261
    %v1994 = vpack.c.b16 %v1268, %v1265
    %v1995 = vpack.c.b16 %v1269, %v1266
    %v1996 = vpack.c.b16 %v1270, %v1267
    %v1997 = vpack.c.b16 %v1274, %v1271
    %v1998 = vpack.c.b16 %v1275, %v1272
    %v1999 = vpack.c.b16 %v1276, %v1273
    %v2000 = vpack.c.b16 %v1280, %v1277
    %v2001 = vpack.c.b16 %v1281, %v1278
    %v2002 = vpack.c.b16 %v1282, %v1279
    %v2003 = vpack.c.b16 %v1286, %v1283
    %v2004 = vpack.c.b16 %v1287, %v1284
    %v2005 = vpack.c.b16 %v1288, %v1285
    %v2006 = vpack.c.b16 %v1292, %v1289
    %v2007 = vpack.c.b16 %v1293, %v1290
    %v2008 = vpack.c.b16 %v1294, %v1291
    %v2009 = vpack.c.b16 %v1298, %v1295
    %v2010 = vpack.c.b16 %v1299, %v1296
    %v2011 = vpack.c.b16 %v1300, %v1297
    %v2012 = vpack.c.b16 %v1304, %v1301
    %v2013 = vpack.c.b16 %v1305, %v1302
    %v2014 = vpack.c.b16 %v1306, %v1303
    %v2015 = vpack.c.b16 %v1310, %v1307
    %v2016 = vpack.c.b16 %v1311, %v1308
    %v2017 = vpack.c.b16 %v1312, %v1309
    %v2018 = vpack.c.b16 %v1316, %v1313
    %v2019 = vpack.c.b16 %v1317, %v1314
    %v2020 = vpack.c.b16 %v1318, %v1315
    %v2021 = vpack.c.b16 %v1322, %v1319
    %v2022 = vpack.c.b16 %v1323, %v1320
    %v2023 = vpack.c.b16 %v1324, %v1321
    %v2024 = vpack.c.b16 %v1328, %v1325
    %v2025 = vpack.c.b16 %v1329, %v1326
    %v2026 = vpack.c.b16 %v1330, %v1327
    %v2027 = vpack.c.b16 %v1334, %v1331
    %v2028 = vpack.c.b16 %v1335, %v1332
    %v2029 = vpack.c.b16 %v1336, %v1333
    %v2030 = vpack.c.b16 %v1340, %v1337
    %v2031 = vpack.c.b16 %v1341, %v1338
    %v2032 = vpack.c.b16 %v1342, %v1339
    %v2033 = vpack.c.b16 %v1346, %v1343
    %v2034 = vpack.c.b16 %v1347, %v1344
    %v2035 = vpack.c.b16 %v1348, %v1345
    %v2036 = vpack.c.b16 %v1352, %v1349
    %v2037 = vpack.c.b16 %v1353, %v1350
    %v2038 = vpack.c.b16 %v1354, %v1351
    %v2039 = vpack.c.b16 %v1358, %v1355
    %v2040 = vpack.c.b16 %v1359, %v1356
    %v2041 = vpack.c.b16 %v1360, %v1357
    %v2042 = vpack.c.b16 %v1364, %v1361
    %v2043 = vpack.c.b16 %v1365, %v1362
    %v2044 = vpack.c.b16 %v1366, %v1363
    %v2045 = vpack.c.b16 %v1370, %v1367
    %v2046 = vpack.c.b16 %v1371, %v1368
    %v2047 = vpack.c.b16 %v1372, %v1369
    %v2048 = vpack.c.b16 %v1376, %v1373
    %v2049 = vpack.c.b16 %v1377, %v1374
    %v2050 = vpack.c.b16 %v1378, %v1375
    %v2051 = vpack.c.b16 %v1382, %v1379
    %v2052 = vpack.c.b16 %v1383, %v1380
    %v2053 = vpack.c.b16 %v1384, %v1381
    %v2054 = vpack.c.b16 %v1388, %v1385
    %v2055 = vpack.c.b16 %v1389, %v1386
    %v2056 = vpack.c.b16 %v1390, %v1387
    %v2057 = vpack.c.b16 %v1394, %v1391
    %v2058 = vpack.c.b16 %v1395, %v1392
    %v2059 = vpack.c.b16 %v1396, %v1393
    %v2060 = vpack.c.b16 %v1400, %v1397
    %v2061 = vpack.c.b16 %v1401, %v1398
    %v2062 = vpack.c.b16 %v1402, %v1399
    %v2063 = vpack.c.b16 %v1406, %v1403
    %v2064 = vpack.c.b16 %v1407, %v1404
    %v2065 = vpack.c.b16 %v1408, %v1405
    %v2066 = vpack.c.b16 %v1412, %v1409
    %v2067 = vpack.c.b16 %v1413, %v1410
    %v2068 = vpack.c.b16 %v1414, %v1411
    %v2069 = vpack.c.b16 %v1418, %v1415
    %v2070 = vpack.c.b16 %v1419, %v1416
    %v2071 = vpack.c.b16 %v1420, %v1417
    %v2072 = vpack.c.b16 %v1424, %v1421
    %v2073 = vpack.c.b16 %v1425, %v1422
    %v2074 = vpack.c.b16 %v1426, %v1423
    %v2075 = vpack.c.b16 %v1430, %v1427
    %v2076 = vpack.c.b16 %v1431, %v1428
    %v2077 = vpack.c.b16 %v1432, %v1429
    %v2078 = vpack.c.b16 %v1436, %v1433
    %v2079 = vpack.c.b16 %v1437, %v1434
    %v2080 = vpack.c.b16 %v1438, %v1435
    %v2081 = vpack.c.b16 %v1442, %v1439
    %v2082 = vpack.c.b16 %v1443, %v1440
    %v2083 = vpack.c.b16 %v1444, %v1441
    %v2084 = vpack.c.b16 %v1448, %v1445
    %v2085 = vpack.c.b16 %v1449, %v1446
    %v2086 = vpack.c.b16 %v1450, %v1447
    %v2087 = vpack.c.b16 %v1454, %v1451
    %v2088 = vpack.c.b16 %v1455, %v1452
    %v2089 = vpack.c.b16 %v1456, %v1453
    %v2090 = vpack.c.b16 %v1460, %v1457
    %v2091 = vpack.c.b16 %v1461, %v1458
    %v2092 = vpack.c.b16 %v1462, %v1459
    %v2093 = vpack.c.b16 %v1466, %v1463
    %v2094 = vpack.c.b16 %v1467, %v1464
    %v2095 = vpack.c.b16 %v1468, %v1465
    %v2096 = vpack.c.b16 %v1472, %v1469
    %v2097 = vpack.c.b16 %v1473, %v1470
    %v2098 = vpack.c.b16 %v1474, %v1471
    %v2099 = vpack.c.b16 %v1478, %v1475
    %v2100 = vpack.c.b16 %v1479, %v1476
    %v2101 = vpack.c.b16 %v1480, %v1477
    %v2102 = vpack.c.b16 %v1484, %v1481
    %v2103 = vpack.c.b16 %v1485, %v1482
    %v2104 = vpack.c.b16 %v1486, %v1483
    %v2105 = vpack.c.b16 %v1490, %v1487
    %v2106 = vpack.c.b16 %v1491, %v1488
    %v2107 = vpack.c.b16 %v1492, %v1489
    %v2108 = vpack.c.b16 %v1496, %v1493
    %v2109 = vpack.c.b16 %v1497, %v1494
    %v2110 = vpack.c.b16 %v1498, %v1495
    %v2111 = vpack.c.b16 %v1502, %v1499
    %v2112 = vpack.c.b16 %v1503, %v1500
    %v2113 = vpack.c.b16 %v1504, %v1501
    %v2114 = vpack.c.b16 %v1508, %v1505
    %v2115 = vpack.c.b16 %v1509, %v1506
    %v2116 = vpack.c.b16 %v1510, %v1507
    %v2117 = vpack.c.b16 %v1514, %v1511
    %v2118 = vpack.c.b16 %v1515, %v1512
    %v2119 = vpack.c.b16 %v1516, %v1513
    %v2120 = vpack.c.b16 %v1520, %v1517
    %v2121 = vpack.c.b16 %v1521, %v1518
    %v2122 = vpack.c.b16 %v1522, %v1519
    %v2123 = vpack.c.b16 %v1526, %v1523
    %v2124 = vpack.c.b16 %v1527, %v1524
    %v2125 = vpack.c.b16 %v1528, %v1525
    %v2126 = vpack.c.b16 %v1532, %v1529
    %v2127 = vpack.c.b16 %v1533, %v1530
    %v2128 = vpack.c.b16 %v1534, %v1531
    %v2129 = vpack.c.b16 %v1538, %v1535
    %v2130 = vpack.c.b16 %v1539, %v1536
    %v2131 = vpack.c.b16 %v1540, %v1537
    %v2132 = vpack.c.b16 %v1544, %v1541
    %v2133 = vpack.c.b16 %v1545, %v1542
    %v2134 = vpack.c.b16 %v1546, %v1543
    %v2135 = vpack.c.b16 %v1550, %v1547
    %v2136 = vpack.c.b16 %v1551, %v1548
    %v2137 = vpack.c.b16 %v1552, %v1549
    %v2138 = vpack.c.b16 %v1556, %v1553
    %v2139 = vpack.c.b16 %v1557, %v1554
    %v2140 = vpack.c.b16 %v1558, %v1555
    %v2141 = vpack.c.b16 %v1562, %v1559
    %v2142 = vpack.c.b16 %v1563, %v1560
    %v2143 = vpack.c.b16 %v1564, %v1561
    %v2144 = vpack.c.b16 %v1568, %v1565
    %v2145 = vpack.c.b16 %v1569, %v1566
    %v2146 = vpack.c.b16 %v1570, %v1567
    %v2147 = vpack.c.b16 %v1574, %v1571
    %v2148 = vpack.c.b16 %v1575, %v1572
    %v2149 = vpack.c.b16 %v1576, %v1573
    %v2150 = vpack.c.b16 %v1580, %v1577
    %v2151 = vpack.c.b16 %v1581, %v1578
    %v2152 = vpack.c.b16 %v1582, %v1579
    %v2153 = vpack.c.b16 %v1586, %v1583
    %v2154 = vpack.c.b16 %v1587, %v1584
    %v2155 = vpack.c.b16 %v1588, %v1585
    %v2156 = vpack.c.b16 %v1592, %v1589
    %v2157 = vpack.c.b16 %v1593, %v1590
    %v2158 = vpack.c.b16 %v1594, %v1591
    %v2159 = vpack.c.b16 %v1598, %v1595
    %v2160 = vpack.c.b16 %v1599, %v1596
    %v2161 = vpack.c.b16 %v1600, %v1597
    %v2162 = vpack.c.b16 %v1604, %v1601
    %v2163 = vpack.c.b16 %v1605, %v1602
    %v2164 = vpack.c.b16 %v1606, %v1603
    %v2165 = vpack.c.b16 %v1610, %v1607
    %v2166 = vpack.c.b16 %v1611, %v1608
    %v2167 = vpack.c.b16 %v1612, %v1609
    %v2168 = vpack.c.b16 %v1616, %v1613
    %v2169 = vpack.c.b16 %v1617, %v1614
    %v2170 = vpack.c.b16 %v1618, %v1615
    %v2171 = vpack.c.b16 %v1622, %v1619
    %v2172 = vpack.c.b16 %v1623, %v1620
    %v2173 = vpack.c.b16 %v1624, %v1621
    %v2174 = vpack.c.b16 %v1628, %v1625
    %v2175 = vpack.c.b16 %v1629, %v1626
    %v2176 = vpack.c.b16 %v1630, %v1627
    %v2177 = vpack.c.b16 %v1634, %v1631
    %v2178 = vpack.c.b16 %v1635, %v1632
    %v2179 = vpack.c.b16 %v1636, %v1633
    %v2180 = vpack.c.b16 %v1640, %v1637
    %v2181 = vpack.c.b16 %v1641, %v1638
    %v2182 = vpack.c.b16 %v1642, %v1639
    %v2183 = vpack.c.b16 %v1646, %v1643
    %v2184 = vpack.c.b16 %v1647, %v1644
    %v2185 = vpack.c.b16 %v1648, %v1645
    %v2186 = vpack.c.b16 %v1652, %v1649
    %v2187 = vpack.c.b16 %v1653, %v1650
    %v2188 = vpack.c.b16 %v1654, %v1651
    %v2189 = vpack.c.b16 %v1658, %v1655
    %v2190 = vpack.c.b16 %v1659, %v1656
    %v2191 = vpack.c.b16 %v1660, %v1657
    %v2192 = vpack.c.b16 %v1664, %v1661
    %v2193 = vpack.c.b16 %v1665, %v1662
    %v2194 = vpack.c.b16 %v1666, %v1663
    %v2195 = vpack.c.b16 %v1670, %v1667
    %v2196 = vpack.c.b16 %v1671, %v1668
    %v2197 = vpack.c.b16 %v1672, %v1669
    %v2198 = vpack.c.b16 %v1676, %v1673
    %v2199 = vpack.c.b16 %v1677, %v1674
    %v2200 = vpack.c.b16 %v1678, %v1675
    %v2201 = vpack.c.b16 %v1682, %v1679
    %v2202 = vpack.c.b16 %v1683, %v1680
    %v2203 = vpack.c.b16 %v1684, %v1681
    %v2204 = vpack.c.b16 %v1688, %v1685
    %v2205 = vpack.c.b16 %v1689, %v1686
    %v2206 = vpack.c.b16 %v1690, %v1687
    %v2207 = vpack.c.b16 %v1694, %v1691
    %v2208 = vpack.c.b16 %v1695, %v1692
    %v2209 = vpack.c.b16 %v1696, %v1693
    %v2210 = vpack.c.b16 %v1700, %v1697
    %v2211 = vpack.c.b16 %v1701, %v1698
    %v2212 = vpack.c.b16 %v1702, %v1699
    %v2213 = vpack.c.b16 %v1706, %v1703
    %v2214 = vpack.c.b16 %v1707, %v1704
    %v2215 = vpack.c.b16 %v1708, %v1705
    %v2216 = vpack.c.b16 %v1712, %v1709
    %v2217 = vpack.c.b16 %v1713, %v1710
    %v2218 = vpack.c.b16 %v1714, %v1711
    %v2219 = vpack.c.b16 %v1718, %v1715
    %v2220 = vpack.c.b16 %v1719, %v1716
    %v2221 = vpack.c.b16 %v1720, %v1717
    %v2222 = vpack.c.b16 %v1724, %v1721
    %v2223 = vpack.c.b16 %v1725, %v1722
    %v2224 = vpack.c.b16 %v1726, %v1723
    %v2225 = vpack.c.b16 %v1730, %v1727
    %v2226 = vpack.c.b16 %v1731, %v1728
    %v2227 = vpack.c.b16 %v1732, %v1729
    %v2228 = vpack.c.b16 %v1736, %v1733
    %v2229 = vpack.c.b16 %v1737, %v1734
    %v2230 = vpack.c.b16 %v1738, %v1735
    %v2231 = vpack.c.b16 %v1742, %v1739
    %v2232 = vpack.c.b16 %v1743, %v1740
    %v2233 = vpack.c.b16 %v1744, %v1741
    %v2234 = vpack.c.b16 %v1748, %v1745
    %v2235 = vpack.c.b16 %v1749, %v1746
    %v2236 = vpack.c.b16 %v1750, %v1747
    %v2237 = vpack.c.b16 %v1754, %v1751
    %v2238 = vpack.c.b16 %v1755, %v1752
    %v2239 = vpack.c.b16 %v1756, %v1753
    %v2240 = vpack.c.b16 %v1760, %v1757
    %v2241 = vpack.c.b16 %v1761, %v1758
    %v2242 = vpack.c.b16 %v1762, %v1759
    %v2243 = vpack.c.b16 %v1766, %v1763
    %v2244 = vpack.c.b16 %v1767, %v1764
    %v2245 = vpack.c.b16 %v1768, %v1765
    %v2246 = vpack.c.b16 %v1772, %v1769
    %v2247 = vpack.c.b16 %v1773, %v1770
    %v2248 = vpack.c.b16 %v1774, %v1771
    %v2249 = vpack.c.b16 %v1778, %v1775
    %v2250 = vpack.c.b16 %v1779, %v1776
    %v2251 = vpack.c.b16 %v1780, %v1777
    %v2252 = vpack.c.b16 %v1784, %v1781
    %v2253 = vpack.c.b16 %v1785, %v1782
    %v2254 = vpack.c.b16 %v1786, %v1783
    %v2255 = vpack.c.b16 %v1790, %v1787
    %v2256 = vpack.c.b16 %v1791, %v1788
    %v2257 = vpack.c.b16 %v1792, %v1789
    %v2258 = vpack.c.b16 %v1796, %v1793
    %v2259 = vpack.c.b16 %v1797, %v1794
    %v2260 = vpack.c.b16 %v1798, %v1795
    %v2261 = vpack.c.b16 %v1802, %v1799
    %v2262 = vpack.c.b16 %v1803, %v1800
    %v2263 = vpack.c.b16 %v1804, %v1801
    %v2264 = vpack.c.b16 %v1808, %v1805
    %v2265 = vpack.c.b16 %v1809, %v1806
    %v2266 = vpack.c.b16 %v1810, %v1807
    %v2267 = vpack.c.b16 %v1814, %v1811
    %v2268 = vpack.c.b16 %v1815, %v1812
    %v2269 = vpack.c.b16 %v1816, %v1813
    %v2270 = vpack.c.b16 %v1820, %v1817
    %v2271 = vpack.c.b16 %v1821, %v1818
    %v2272 = vpack.c.b16 %v1822, %v1819
    %v2273 = vpack.c.b16 %v1826, %v1823
    %v2274 = vpack.c.b16 %v1827, %v1824
    %v2275 = vpack.c.b16 %v1828, %v1825
    %v2276 = vpack.c.b16 %v1832, %v1829
    %v2277 = vpack.c.b16 %v1833, %v1830
    %v2278 = vpack.c.b16 %v1834, %v1831
    %v2279 = vpack.c.b16 %v1838, %v1835
    %v2280 = vpack.c.b16 %v1839, %v1836
    %v2281 = vpack.c.b16 %v1840, %v1837
    %v2282 = vpack.c.b16 %v1844, %v1841
    %v2283 = vpack.c.b16 %v1845, %v1842
    %v2284 = vpack.c.b16 %v1846, %v1843
    %v2285 = vpack.c.b16 %v1850, %v1847
    %v2286 = vpack.c.b16 %v1851, %v1848
    %v2287 = vpack.c.b16 %v1852, %v1849
    %v2288 = vpack.c.b16 %v1856, %v1853
    %v2289 = vpack.c.b16 %v1857, %v1854
    %v2290 = vpack.c.b16 %v1858, %v1855
    %v2291 = vpack.c.b16 %v1862, %v1859
    %v2292 = vpack.c.b16 %v1863, %v1860
    %v2293 = vpack.c.b16 %v1864, %v1861
    %v2294 = vpack.c.b16 %v1868, %v1865
    %v2295 = vpack.c.b16 %v1869, %v1866
    %v2296 = vpack.c.b16 %v1870, %v1867
    %v2297 = vpack.c.b16 %v1874, %v1871
    %v2298 = vpack.c.b16 %v1875, %v1872
    %v2299 = vpack.c.b16 %v1876, %v1873
    %v2300 = vpack.c.b16 %v1880, %v1877
    %v2301 = vpack.c.b16 %v1881, %v1878
    %v2302 = vpack.c.b16 %v1882, %v1879
    %v2303 = vpack.c.b16 %v1886, %v1883
    %v2304 = vpack.c.b16 %v1887, %v1884
    %v2305 = vpack.c.b16 %v1888, %v1885
    %v2306 = vpack.c.b16 %v1892, %v1889
    %v2307 = vpack.c.b16 %v1893, %v1890
    %v2308 = vpack.c.b16 %v1894, %v1891
    %v2309 = vpack.c.b16 %v1898, %v1895
    %v2310 = vpack.c.b16 %v1899, %v1896
    %v2311 = vpack.c.b16 %v1900, %v1897
    %v2312 = vpack.c.b16 %v1904, %v1901
    %v2313 = vpack.c.b16 %v1905, %v1902
    %v2314 = vpack.c.b16 %v1906, %v1903
    %v2315 = vpack.c.b16 %v1910, %v1907
    %v2316 = vpack.c.b16 %v1911, %v1908
    %v2317 = vpack.c.b16 %v1912, %v1909
    %v2318 = vpack.c.b16 %v1916, %v1913
    %v2319 = vpack.c.b16 %v1917, %v1914
    %v2320 = vpack.c.b16 %v1918, %v1915
    %v2321 = vpack.c.b16 %v1922, %v1919
    %v2322 = vpack.c.b16 %v1923, %v1920
    %v2323 = vpack.c.b16 %v1924, %v1921
    %v2324 = vpack.c.b16 %v1928, %v1925
    %v2325 = vpack.c.b16 %v1929, %v1926
    %v2326 = vpack.c.b16 %v1930, %v1927
    %v2327 = vpack.c.b16 %v1934, %v1931
    %v2328 = vpack.c.b16 %v1935, %v1932
    %v2329 = vpack.c.b16 %v1936, %v1933
    %v2330 = vpack.c.b16 %v1940, %v1937
    %v2331 = vpack.c.b16 %v1941, %v1938
    %v2332 = vpack.c.b16 %v1942, %v1939
    %v2333 = vpack.c.b16 %v1946, %v1943
    %v2334 = vpack.c.b16 %v1947, %v1944
    %v2335 = vpack.c.b16 %v1948, %v1945
    %v2336 = vpack.c.b16 %v1952, %v1949
    %v2337 = vpack.c.b16 %v1953, %v1950
    %v2338 = vpack.c.b16 %v1954, %v1951
    %2723 = vmatprep.subr.bf16.mxu0 %v1956
    %2724 = vmatpush1.bf16.msra.mxu0 %v1955
    %2725 = vmatprep.subr.bf16.mxu0 %v1959
    %2726 = vmatpush1.bf16.msra.mxu0 %v1958
    %2727 = vmatprep.subr.bf16.mxu0 %v1962
    %2728 = vmatpush1.bf16.msra.mxu0 %v1961
    %2729 = vmatprep.subr.bf16.mxu0 %v1965
    %2730 = vmatpush1.bf16.msra.mxu0 %v1964
    %2731 = vmatprep.subr.bf16.mxu0 %v1968
    %2732 = vmatpush1.bf16.msra.mxu0 %v1967
    %2733 = vmatprep.subr.bf16.mxu0 %v1971
    %2734 = vmatpush1.bf16.msra.mxu0 %v1970
    %2735 = vmatprep.subr.bf16.mxu0 %v1974
    %2736 = vmatpush1.bf16.msra.mxu0 %v1973
    %2737 = vmatprep.subr.bf16.mxu0 %v1977
    %2738 = vmatpush1.bf16.msra.mxu0 %v1976
    %2739 = vmatprep.subr.bf16.mxu0 %v1980
    %2740 = vmatpush1.bf16.msra.mxu0 %v1979
    %2741 = vmatprep.subr.bf16.mxu0 %v1983
    %2742 = vmatpush1.bf16.msra.mxu0 %v1982
    %2743 = vmatprep.subr.bf16.mxu0 %v1986
    %2744 = vmatpush1.bf16.msra.mxu0 %v1985
    %2745 = vmatprep.subr.bf16.mxu0 %v1989
    %2746 = vmatpush1.bf16.msra.mxu0 %v1988
    %2747 = vmatprep.subr.bf16.mxu0 %v1992
    %2748 = vmatpush1.bf16.msra.mxu0 %v1991
    %2749 = vmatprep.subr.bf16.mxu0 %v1995
    %2750 = vmatpush1.bf16.msra.mxu0 %v1994
    %2751 = vmatprep.subr.bf16.mxu0 %v1998
    %2752 = vmatpush1.bf16.msra.mxu0 %v1997
    %2753 = vmatprep.subr.bf16.mxu0 %v2001
    %2754 = vmatpush1.bf16.msra.mxu0 %v2000
    %2755 = vmatprep.mubr.bf16.mxu0 %v598
    %2756 = vmatmul.mubr.bf16.gmra.mrb[0].mxu0 %v584
    %v2757 = vpop.f32.mrb[0].mxu0
    %v2758 = vadd.f32 %v547, %v2757
    %v2759 = vpop.f32.mrb[0].mxu0
    %v2760 = vadd.f32 %v551, %v2759
    %v2761 = vpop.f32.mrb[0].mxu0
    %v2762 = vpop.f32.mrb[0].mxu0
    %2763 = vdwg.mxu0
    %2764 = vmatprep.subr.bf16.mxu0 %v2004
    %2765 = vmatpush1.bf16.msra.mxu0 %v2003
    %2766 = vmatprep.subr.bf16.mxu0 %v2007
    %2767 = vmatpush1.bf16.msra.mxu0 %v2006
    %2768 = vmatprep.subr.bf16.mxu0 %v2010
    %2769 = vmatpush1.bf16.msra.mxu0 %v2009
    %2770 = vmatprep.subr.bf16.mxu0 %v2013
    %2771 = vmatpush1.bf16.msra.mxu0 %v2012
    %2772 = vmatprep.subr.bf16.mxu0 %v2016
    %2773 = vmatpush1.bf16.msra.mxu0 %v2015
    %2774 = vmatprep.subr.bf16.mxu0 %v2019
    %2775 = vmatpush1.bf16.msra.mxu0 %v2018
    %2776 = vmatprep.subr.bf16.mxu0 %v2022
    %2777 = vmatpush1.bf16.msra.mxu0 %v2021
    %2778 = vmatprep.subr.bf16.mxu0 %v2025
    %2779 = vmatpush1.bf16.msra.mxu0 %v2024
    %2780 = vmatprep.subr.bf16.mxu0 %v2028
    %2781 = vmatpush1.bf16.msra.mxu0 %v2027
    %2782 = vmatprep.subr.bf16.mxu0 %v2031
    %2783 = vmatpush1.bf16.msra.mxu0 %v2030
    %2784 = vmatprep.subr.bf16.mxu0 %v2034
    %2785 = vmatpush1.bf16.msra.mxu0 %v2033
    %2786 = vmatprep.subr.bf16.mxu0 %v2037
    %2787 = vmatpush1.bf16.msra.mxu0 %v2036
    %2788 = vmatprep.subr.bf16.mxu0 %v2040
    %2789 = vmatpush1.bf16.msra.mxu0 %v2039
    %2790 = vmatprep.subr.bf16.mxu0 %v2043
    %2791 = vmatpush1.bf16.msra.mxu0 %v2042
    %2792 = vmatprep.subr.bf16.mxu0 %v2046
    %2793 = vmatpush1.bf16.msra.mxu0 %v2045
    %2794 = vmatprep.subr.bf16.mxu0 %v2049
    %2795 = vmatpush1.bf16.msra.mxu0 %v2048
    %2796 = vmatprep.mubr.bf16.mxu0 %v608
    %2797 = vmatmul.mubr.bf16.gmra.mrb[0].mxu0 %v606
    %v2798 = vpop.f32.mrb[0].mxu0
    %v2799 = vadd.f32 %v2758, %v2798
    %v2800 = vpop.f32.mrb[0].mxu0
    %v2801 = vadd.f32 %v2760, %v2800
    %v2802 = vpop.f32.mrb[0].mxu0
    %v2803 = vpop.f32.mrb[0].mxu0
    %2804 = vdwg.mxu0
    %2805 = vmatprep.subr.bf16.mxu0 %v2052
    %2806 = vmatpush1.bf16.msra.mxu0 %v2051
    %2807 = vmatprep.subr.bf16.mxu0 %v2055
    %2808 = vmatpush1.bf16.msra.mxu0 %v2054
    %2809 = vmatprep.subr.bf16.mxu0 %v2058
    %2810 = vmatpush1.bf16.msra.mxu0 %v2057
    %2811 = vmatprep.subr.bf16.mxu0 %v2061
    %2812 = vmatpush1.bf16.msra.mxu0 %v2060
    %2813 = vmatprep.subr.bf16.mxu0 %v2064
    %2814 = vmatpush1.bf16.msra.mxu0 %v2063
    %2815 = vmatprep.subr.bf16.mxu0 %v2067
    %2816 = vmatpush1.bf16.msra.mxu0 %v2066
    %2817 = vmatprep.subr.bf16.mxu0 %v2070
    %2818 = vmatpush1.bf16.msra.mxu0 %v2069
    %2819 = vmatprep.subr.bf16.mxu0 %v2073
    %2820 = vmatpush1.bf16.msra.mxu0 %v2072
    %2821 = vmatprep.subr.bf16.mxu0 %v2076
    %2822 = vmatpush1.bf16.msra.mxu0 %v2075
    %2823 = vmatprep.subr.bf16.mxu0 %v2079
    %2824 = vmatpush1.bf16.msra.mxu0 %v2078
    %2825 = vmatprep.subr.bf16.mxu0 %v2082
    %2826 = vmatpush1.bf16.msra.mxu0 %v2081
    %2827 = vmatprep.subr.bf16.mxu0 %v2085
    %2828 = vmatpush1.bf16.msra.mxu0 %v2084
    %2829 = vmatprep.subr.bf16.mxu0 %v2088
    %2830 = vmatpush1.bf16.msra.mxu0 %v2087
    %2831 = vmatprep.subr.bf16.mxu0 %v2091
    %2832 = vmatpush1.bf16.msra.mxu0 %v2090
    %2833 = vmatprep.subr.bf16.mxu0 %v2094
    %2834 = vmatpush1.bf16.msra.mxu0 %v2093
    %2835 = vmatprep.subr.bf16.mxu0 %v2097
    %2836 = vmatpush1.bf16.msra.mxu0 %v2096
    %2837 = vmatprep.mubr.bf16.mxu0 %v605
    %2838 = vmatmul.mubr.bf16.gmra.mrb[0].mxu0 %v591
    %v2839 = vpop.f32.mrb[0].mxu0
    %v2840 = vadd.f32 %v2799, %v2839
    %v2841 = vpop.f32.mrb[0].mxu0
    %v2842 = vadd.f32 %v2801, %v2841
    %v2843 = vpop.f32.mrb[0].mxu0
    %v2844 = vpop.f32.mrb[0].mxu0
    %2845 = vdwg.mxu0
    %2846 = vmatprep.subr.bf16.mxu0 %v2100
    %2847 = vmatpush1.bf16.msra.mxu0 %v2099
    %2848 = vmatprep.subr.bf16.mxu0 %v2103
    %2849 = vmatpush1.bf16.msra.mxu0 %v2102
    %2850 = vmatprep.subr.bf16.mxu0 %v2106
    %2851 = vmatpush1.bf16.msra.mxu0 %v2105
    %2852 = vmatprep.subr.bf16.mxu0 %v2109
    %2853 = vmatpush1.bf16.msra.mxu0 %v2108
    %2854 = vmatprep.subr.bf16.mxu0 %v2112
    %2855 = vmatpush1.bf16.msra.mxu0 %v2111
    %2856 = vmatprep.subr.bf16.mxu0 %v2115
    %2857 = vmatpush1.bf16.msra.mxu0 %v2114
    %2858 = vmatprep.subr.bf16.mxu0 %v2118
    %2859 = vmatpush1.bf16.msra.mxu0 %v2117
    %2860 = vmatprep.subr.bf16.mxu0 %v2121
    %2861 = vmatpush1.bf16.msra.mxu0 %v2120
    %2862 = vmatprep.subr.bf16.mxu0 %v2124
    %2863 = vmatpush1.bf16.msra.mxu0 %v2123
    %2864 = vmatprep.subr.bf16.mxu0 %v2127
    %2865 = vmatpush1.bf16.msra.mxu0 %v2126
    %2866 = vmatprep.subr.bf16.mxu0 %v2130
    %2867 = vmatpush1.bf16.msra.mxu0 %v2129
    %2868 = vmatprep.subr.bf16.mxu0 %v2133
    %2869 = vmatpush1.bf16.msra.mxu0 %v2132
    %2870 = vmatprep.subr.bf16.mxu0 %v2136
    %2871 = vmatpush1.bf16.msra.mxu0 %v2135
    %2872 = vmatprep.subr.bf16.mxu0 %v2139
    %2873 = vmatpush1.bf16.msra.mxu0 %v2138
    %2874 = vmatprep.subr.bf16.mxu0 %v2142
    %2875 = vmatpush1.bf16.msra.mxu0 %v2141
    %2876 = vmatprep.subr.bf16.mxu0 %v2145
    %2877 = vmatpush1.bf16.msra.mxu0 %v2144
    %2878 = vmatprep.mubr.bf16.mxu0 %v609
    %2879 = vmatmul.mubr.bf16.gmra.mrb[0].mxu0 %v607
    %v2880 = vpop.f32.mrb[0].mxu0
    %v2881 = vadd.f32 %v2840, %v2880
    %v2882 = vpop.f32.mrb[0].mxu0
    %v2883 = vadd.f32 %v2842, %v2882
    %v2884 = vpop.f32.mrb[0].mxu0
    %v2885 = vpop.f32.mrb[0].mxu0
    %2886 = vdwg.mxu0
    %2887 = vmatprep.subr.bf16.mxu0 %v2148
    %2888 = vmatpush1.bf16.msra.mxu0 %v2147
    %2889 = vmatprep.subr.bf16.mxu0 %v2151
    %2890 = vmatpush1.bf16.msra.mxu0 %v2150
    %2891 = vmatprep.subr.bf16.mxu0 %v2154
    %2892 = vmatpush1.bf16.msra.mxu0 %v2153
    %2893 = vmatprep.subr.bf16.mxu0 %v2157
    %2894 = vmatpush1.bf16.msra.mxu0 %v2156
    %2895 = vmatprep.subr.bf16.mxu0 %v2160
    %2896 = vmatpush1.bf16.msra.mxu0 %v2159
    %2897 = vmatprep.subr.bf16.mxu0 %v2163
    %2898 = vmatpush1.bf16.msra.mxu0 %v2162
    %2899 = vmatprep.subr.bf16.mxu0 %v2166
    %2900 = vmatpush1.bf16.msra.mxu0 %v2165
    %2901 = vmatprep.subr.bf16.mxu0 %v2169
    %2902 = vmatpush1.bf16.msra.mxu0 %v2168
    %2903 = vmatprep.subr.bf16.mxu0 %v2172
    %2904 = vmatpush1.bf16.msra.mxu0 %v2171
    %2905 = vmatprep.subr.bf16.mxu0 %v2175
    %2906 = vmatpush1.bf16.msra.mxu0 %v2174
    %2907 = vmatprep.subr.bf16.mxu0 %v2178
    %2908 = vmatpush1.bf16.msra.mxu0 %v2177
    %2909 = vmatprep.subr.bf16.mxu0 %v2181
    %2910 = vmatpush1.bf16.msra.mxu0 %v2180
    %2911 = vmatprep.subr.bf16.mxu0 %v2184
    %2912 = vmatpush1.bf16.msra.mxu0 %v2183
    %2913 = vmatprep.subr.bf16.mxu0 %v2187
    %2914 = vmatpush1.bf16.msra.mxu0 %v2186
    %2915 = vmatprep.subr.bf16.mxu0 %v2190
    %2916 = vmatpush1.bf16.msra.mxu0 %v2189
    %2917 = vmatprep.subr.bf16.mxu0 %v2193
    %2918 = vmatpush1.bf16.msra.mxu0 %v2192
    %2919 = vmatprep.mubr.bf16.mxu0 %v647
    %2920 = vmatmul.mubr.bf16.gmra.mrb[0].mxu0 %v633
    %v2921 = vpop.f32.mrb[0].mxu0
    %v2922 = vadd.f32 %v2881, %v2921
    %v2923 = vpop.f32.mrb[0].mxu0
    %v2924 = vadd.f32 %v2883, %v2923
    %v2925 = vpop.f32.mrb[0].mxu0
    %v2926 = vpop.f32.mrb[0].mxu0
    %2927 = vdwg.mxu0
    %2928 = vmatprep.subr.bf16.mxu0 %v2196
    %2929 = vmatpush1.bf16.msra.mxu0 %v2195
    %2930 = vmatprep.subr.bf16.mxu0 %v2199
    %2931 = vmatpush1.bf16.msra.mxu0 %v2198
    %2932 = vmatprep.subr.bf16.mxu0 %v2202
    %2933 = vmatpush1.bf16.msra.mxu0 %v2201
    %2934 = vmatprep.subr.bf16.mxu0 %v2205
    %2935 = vmatpush1.bf16.msra.mxu0 %v2204
    %2936 = vmatprep.subr.bf16.mxu0 %v2208
    %2937 = vmatpush1.bf16.msra.mxu0 %v2207
    %2938 = vmatprep.subr.bf16.mxu0 %v2211
    %2939 = vmatpush1.bf16.msra.mxu0 %v2210
    %2940 = vmatprep.subr.bf16.mxu0 %v2214
    %2941 = vmatpush1.bf16.msra.mxu0 %v2213
    %2942 = vmatprep.subr.bf16.mxu0 %v2217
    %2943 = vmatpush1.bf16.msra.mxu0 %v2216
    %2944 = vmatprep.subr.bf16.mxu0 %v2220
    %2945 = vmatpush1.bf16.msra.mxu0 %v2219
    %2946 = vmatprep.subr.bf16.mxu0 %v2223
    %2947 = vmatpush1.bf16.msra.mxu0 %v2222
    %2948 = vmatprep.subr.bf16.mxu0 %v2226
    %2949 = vmatpush1.bf16.msra.mxu0 %v2225
    %2950 = vmatprep.subr.bf16.mxu0 %v2229
    %2951 = vmatpush1.bf16.msra.mxu0 %v2228
    %2952 = vmatprep.subr.bf16.mxu0 %v2232
    %2953 = vmatpush1.bf16.msra.mxu0 %v2231
    %2954 = vmatprep.subr.bf16.mxu0 %v2235
    %2955 = vmatpush1.bf16.msra.mxu0 %v2234
    %2956 = vmatprep.subr.bf16.mxu0 %v2238
    %2957 = vmatpush1.bf16.msra.mxu0 %v2237
    %2958 = vmatprep.subr.bf16.mxu0 %v2241
    %2959 = vmatpush1.bf16.msra.mxu0 %v2240
    %2960 = vmatprep.mubr.bf16.mxu0 %v657
    %2961 = vmatmul.mubr.bf16.gmra.mrb[0].mxu0 %v655
    %v2962 = vpop.f32.mrb[0].mxu0
    %v2963 = vadd.f32 %v2922, %v2962
    %v2964 = vpop.f32.mrb[0].mxu0
    %v2965 = vadd.f32 %v2924, %v2964
    %v2966 = vpop.f32.mrb[0].mxu0
    %v2967 = vpop.f32.mrb[0].mxu0
    %2968 = vdwg.mxu0
    %2969 = vmatprep.subr.bf16.mxu0 %v2244
    %2970 = vmatpush1.bf16.msra.mxu0 %v2243
    %2971 = vmatprep.subr.bf16.mxu0 %v2247
    %2972 = vmatpush1.bf16.msra.mxu0 %v2246
    %2973 = vmatprep.subr.bf16.mxu0 %v2250
    %2974 = vmatpush1.bf16.msra.mxu0 %v2249
    %2975 = vmatprep.subr.bf16.mxu0 %v2253
    %2976 = vmatpush1.bf16.msra.mxu0 %v2252
    %2977 = vmatprep.subr.bf16.mxu0 %v2256
    %2978 = vmatpush1.bf16.msra.mxu0 %v2255
    %2979 = vmatprep.subr.bf16.mxu0 %v2259
    %2980 = vmatpush1.bf16.msra.mxu0 %v2258
    %2981 = vmatprep.subr.bf16.mxu0 %v2262
    %2982 = vmatpush1.bf16.msra.mxu0 %v2261
    %2983 = vmatprep.subr.bf16.mxu0 %v2265
    %2984 = vmatpush1.bf16.msra.mxu0 %v2264
    %2985 = vmatprep.subr.bf16.mxu0 %v2268
    %2986 = vmatpush1.bf16.msra.mxu0 %v2267
    %2987 = vmatprep.subr.bf16.mxu0 %v2271
    %2988 = vmatpush1.bf16.msra.mxu0 %v2270
    %2989 = vmatprep.subr.bf16.mxu0 %v2274
    %2990 = vmatpush1.bf16.msra.mxu0 %v2273
    %2991 = vmatprep.subr.bf16.mxu0 %v2277
    %2992 = vmatpush1.bf16.msra.mxu0 %v2276
    %2993 = vmatprep.subr.bf16.mxu0 %v2280
    %2994 = vmatpush1.bf16.msra.mxu0 %v2279
    %2995 = vmatprep.subr.bf16.mxu0 %v2283
    %2996 = vmatpush1.bf16.msra.mxu0 %v2282
    %2997 = vmatprep.subr.bf16.mxu0 %v2286
    %2998 = vmatpush1.bf16.msra.mxu0 %v2285
    %2999 = vmatprep.subr.bf16.mxu0 %v2289
    %3000 = vmatpush1.bf16.msra.mxu0 %v2288
    %3001 = vmatprep.mubr.bf16.mxu0 %v654
    %3002 = vmatmul.mubr.bf16.gmra.mrb[0].mxu0 %v640
    %v3003 = vpop.f32.mrb[0].mxu0
    %v3004 = vadd.f32 %v2963, %v3003
    %v3005 = vpop.f32.mrb[0].mxu0
    %v3006 = vadd.f32 %v2965, %v3005
    %v3007 = vpop.f32.mrb[0].mxu0
    %v3008 = vpop.f32.mrb[0].mxu0
    %3009 = vdwg.mxu0
    %3010 = vmatprep.subr.bf16.mxu0 %v2292
    %3011 = vmatpush1.bf16.msra.mxu0 %v2291
    %3012 = vmatprep.subr.bf16.mxu0 %v2295
    %3013 = vmatpush1.bf16.msra.mxu0 %v2294
    %3014 = vmatprep.subr.bf16.mxu0 %v2298
    %3015 = vmatpush1.bf16.msra.mxu0 %v2297
    %3016 = vmatprep.subr.bf16.mxu0 %v2301
    %3017 = vmatpush1.bf16.msra.mxu0 %v2300
    %3018 = vmatprep.subr.bf16.mxu0 %v2304
    %3019 = vmatpush1.bf16.msra.mxu0 %v2303
    %3020 = vmatprep.subr.bf16.mxu0 %v2307
    %3021 = vmatpush1.bf16.msra.mxu0 %v2306
    %3022 = vmatprep.subr.bf16.mxu0 %v2310
    %3023 = vmatpush1.bf16.msra.mxu0 %v2309
    %3024 = vmatprep.subr.bf16.mxu0 %v2313
    %3025 = vmatpush1.bf16.msra.mxu0 %v2312
    %3026 = vmatprep.subr.bf16.mxu0 %v2316
    %3027 = vmatpush1.bf16.msra.mxu0 %v2315
    %3028 = vmatprep.subr.bf16.mxu0 %v2319
    %3029 = vmatpush1.bf16.msra.mxu0 %v2318
    %3030 = vmatprep.subr.bf16.mxu0 %v2322
    %3031 = vmatpush1.bf16.msra.mxu0 %v2321
    %3032 = vmatprep.subr.bf16.mxu0 %v2325
    %3033 = vmatpush1.bf16.msra.mxu0 %v2324
    %3034 = vmatprep.subr.bf16.mxu0 %v2328
    %3035 = vmatpush1.bf16.msra.mxu0 %v2327
    %3036 = vmatprep.subr.bf16.mxu0 %v2331
    %3037 = vmatpush1.bf16.msra.mxu0 %v2330
    %3038 = vmatprep.subr.bf16.mxu0 %v2334
    %3039 = vmatpush1.bf16.msra.mxu0 %v2333
    %3040 = vmatprep.subr.bf16.mxu0 %v2337
    %3041 = vmatpush1.bf16.msra.mxu0 %v2336
    %3042 = vmatprep.mubr.bf16.mxu0 %v658
    %3043 = vmatmul.mubr.bf16.gmra.mrb[0].mxu0 %v656
    %v3044 = vpop.f32.mrb[0].mxu0
    %v3045 = vadd.f32 %v3004, %v3044
    %v3046 = vpop.f32.mrb[0].mxu0
    %v3047 = vadd.f32 %v3006, %v3046
    %v3048 = vpop.f32.mrb[0].mxu0
    %v3049 = vpop.f32.mrb[0].mxu0
    %3050 = vdwg.mxu0
    %3051 = vmatprep.subr.bf16.mxu0 0
    %3052 = vmatpush1.bf16.msra.mxu0 %v1957
    %3053 = vmatprep.subr.bf16.mxu0 0
    %3054 = vmatpush1.bf16.msra.mxu0 %v1960
    %3055 = vmatprep.subr.bf16.mxu0 0
    %3056 = vmatpush1.bf16.msra.mxu0 %v1963
    %3057 = vmatprep.subr.bf16.mxu0 0
    %3058 = vmatpush1.bf16.msra.mxu0 %v1966
    %3059 = vmatprep.subr.bf16.mxu0 0
    %3060 = vmatpush1.bf16.msra.mxu0 %v1969
    %3061 = vmatprep.subr.bf16.mxu0 0
    %3062 = vmatpush1.bf16.msra.mxu0 %v1972
    %3063 = vmatprep.subr.bf16.mxu0 0
    %3064 = vmatpush1.bf16.msra.mxu0 %v1975
    %3065 = vmatprep.subr.bf16.mxu0 0
    %3066 = vmatpush1.bf16.msra.mxu0 %v1978
    %3067 = vmatprep.subr.bf16.mxu0 0
    %3068 = vmatpush1.bf16.msra.mxu0 %v1981
    %3069 = vmatprep.subr.bf16.mxu0 0
    %3070 = vmatpush1.bf16.msra.mxu0 %v1984
    %3071 = vmatprep.subr.bf16.mxu0 0
    %3072 = vmatpush1.bf16.msra.mxu0 %v1987
    %3073 = vmatprep.subr.bf16.mxu0 0
    %3074 = vmatpush1.bf16.msra.mxu0 %v1990
    %3075 = vmatprep.subr.bf16.mxu0 0
    %3076 = vmatpush1.bf16.msra.mxu0 %v1993
    %3077 = vmatprep.subr.bf16.mxu0 0
    %3078 = vmatpush1.bf16.msra.mxu0 %v1996
    %3079 = vmatprep.subr.bf16.mxu0 0
    %3080 = vmatpush1.bf16.msra.mxu0 %v1999
    %3081 = vmatprep.subr.bf16.mxu0 0
    %3082 = vmatpush1.bf16.msra.mxu0 %v2002
    %3083 = vmatprep.mubr.bf16.mxu0 %v598
    %3084 = vmatmul.mubr.bf16.gmra.mrb[0].mxu0 %v584
    %v3085 = vpop.f32.mrb[0].mxu0
    %v3086 = vadd.f32 %v555, %v3085
    %v3087 = vpop.f32.mrb[0].mxu0
    %v3088 = vpop.f32.mrb[0].mxu0
    %v3089 = vpop.f32.mrb[0].mxu0
    %3090 = vdwg.mxu0
    %3091 = vmatprep.subr.bf16.mxu0 0
    %3092 = vmatpush1.bf16.msra.mxu0 %v2005
    %3093 = vmatprep.subr.bf16.mxu0 0
    %3094 = vmatpush1.bf16.msra.mxu0 %v2008
    %3095 = vmatprep.subr.bf16.mxu0 0
    %3096 = vmatpush1.bf16.msra.mxu0 %v2011
    %3097 = vmatprep.subr.bf16.mxu0 0
    %3098 = vmatpush1.bf16.msra.mxu0 %v2014
    %3099 = vmatprep.subr.bf16.mxu0 0
    %3100 = vmatpush1.bf16.msra.mxu0 %v2017
    %3101 = vmatprep.subr.bf16.mxu0 0
    %3102 = vmatpush1.bf16.msra.mxu0 %v2020
    %3103 = vmatprep.subr.bf16.mxu0 0
    %3104 = vmatpush1.bf16.msra.mxu0 %v2023
    %3105 = vmatprep.subr.bf16.mxu0 0
    %3106 = vmatpush1.bf16.msra.mxu0 %v2026
    %3107 = vmatprep.subr.bf16.mxu0 0
    %3108 = vmatpush1.bf16.msra.mxu0 %v2029
    %3109 = vmatprep.subr.bf16.mxu0 0
    %3110 = vmatpush1.bf16.msra.mxu0 %v2032
    %3111 = vmatprep.subr.bf16.mxu0 0
    %3112 = vmatpush1.bf16.msra.mxu0 %v2035
    %3113 = vmatprep.subr.bf16.mxu0 0
    %3114 = vmatpush1.bf16.msra.mxu0 %v2038
    %3115 = vmatprep.subr.bf16.mxu0 0
    %3116 = vmatpush1.bf16.msra.mxu0 %v2041
    %3117 = vmatprep.subr.bf16.mxu0 0
    %3118 = vmatpush1.bf16.msra.mxu0 %v2044
    %3119 = vmatprep.subr.bf16.mxu0 0
    %3120 = vmatpush1.bf16.msra.mxu0 %v2047
    %3121 = vmatprep.subr.bf16.mxu0 0
    %3122 = vmatpush1.bf16.msra.mxu0 %v2050
    %3123 = vmatprep.mubr.bf16.mxu0 %v608
    %3124 = vmatmul.mubr.bf16.gmra.mrb[0].mxu0 %v606
    %v3125 = vpop.f32.mrb[0].mxu0
    %v3126 = vadd.f32 %v3086, %v3125
    %v3127 = vpop.f32.mrb[0].mxu0
    %v3128 = vpop.f32.mrb[0].mxu0
    %v3129 = vpop.f32.mrb[0].mxu0
    %3130 = vdwg.mxu0
    %3131 = vmatprep.subr.bf16.mxu0 0
    %3132 = vmatpush1.bf16.msra.mxu0 %v2053
    %3133 = vmatprep.subr.bf16.mxu0 0
    %3134 = vmatpush1.bf16.msra.mxu0 %v2056
    %3135 = vmatprep.subr.bf16.mxu0 0
    %3136 = vmatpush1.bf16.msra.mxu0 %v2059
    %3137 = vmatprep.subr.bf16.mxu0 0
    %3138 = vmatpush1.bf16.msra.mxu0 %v2062
    %3139 = vmatprep.subr.bf16.mxu0 0
    %3140 = vmatpush1.bf16.msra.mxu0 %v2065
    %3141 = vmatprep.subr.bf16.mxu0 0
    %3142 = vmatpush1.bf16.msra.mxu0 %v2068
    %3143 = vmatprep.subr.bf16.mxu0 0
    %3144 = vmatpush1.bf16.msra.mxu0 %v2071
    %3145 = vmatprep.subr.bf16.mxu0 0
    %3146 = vmatpush1.bf16.msra.mxu0 %v2074
    %3147 = vmatprep.subr.bf16.mxu0 0
    %3148 = vmatpush1.bf16.msra.mxu0 %v2077
    %3149 = vmatprep.subr.bf16.mxu0 0
    %3150 = vmatpush1.bf16.msra.mxu0 %v2080
    %3151 = vmatprep.subr.bf16.mxu0 0
    %3152 = vmatpush1.bf16.msra.mxu0 %v2083
    %3153 = vmatprep.subr.bf16.mxu0 0
    %3154 = vmatpush1.bf16.msra.mxu0 %v2086
    %3155 = vmatprep.subr.bf16.mxu0 0
    %3156 = vmatpush1.bf16.msra.mxu0 %v2089
    %3157 = vmatprep.subr.bf16.mxu0 0
    %3158 = vmatpush1.bf16.msra.mxu0 %v2092
    %3159 = vmatprep.subr.bf16.mxu0 0
    %3160 = vmatpush1.bf16.msra.mxu0 %v2095
    %3161 = vmatprep.subr.bf16.mxu0 0
    %3162 = vmatpush1.bf16.msra.mxu0 %v2098
    %3163 = vmatprep.mubr.bf16.mxu0 %v605
    %3164 = vmatmul.mubr.bf16.gmra.mrb[0].mxu0 %v591
    %v3165 = vpop.f32.mrb[0].mxu0
    %v3166 = vadd.f32 %v3126, %v3165
    %v3167 = vpop.f32.mrb[0].mxu0
    %v3168 = vpop.f32.mrb[0].mxu0
    %v3169 = vpop.f32.mrb[0].mxu0
    %3170 = vdwg.mxu0
    %3171 = vmatprep.subr.bf16.mxu0 0
    %3172 = vmatpush1.bf16.msra.mxu0 %v2101
    %3173 = vmatprep.subr.bf16.mxu0 0
    %3174 = vmatpush1.bf16.msra.mxu0 %v2104
    %3175 = vmatprep.subr.bf16.mxu0 0
    %3176 = vmatpush1.bf16.msra.mxu0 %v2107
    %3177 = vmatprep.subr.bf16.mxu0 0
    %3178 = vmatpush1.bf16.msra.mxu0 %v2110
    %3179 = vmatprep.subr.bf16.mxu0 0
    %3180 = vmatpush1.bf16.msra.mxu0 %v2113
    %3181 = vmatprep.subr.bf16.mxu0 0
    %3182 = vmatpush1.bf16.msra.mxu0 %v2116
    %3183 = vmatprep.subr.bf16.mxu0 0
    %3184 = vmatpush1.bf16.msra.mxu0 %v2119
    %3185 = vmatprep.subr.bf16.mxu0 0
    %3186 = vmatpush1.bf16.msra.mxu0 %v2122
    %3187 = vmatprep.subr.bf16.mxu0 0
    %3188 = vmatpush1.bf16.msra.mxu0 %v2125
    %3189 = vmatprep.subr.bf16.mxu0 0
    %3190 = vmatpush1.bf16.msra.mxu0 %v2128
    %3191 = vmatprep.subr.bf16.mxu0 0
    %3192 = vmatpush1.bf16.msra.mxu0 %v2131
    %3193 = vmatprep.subr.bf16.mxu0 0
    %3194 = vmatpush1.bf16.msra.mxu0 %v2134
    %3195 = vmatprep.subr.bf16.mxu0 0
    %3196 = vmatpush1.bf16.msra.mxu0 %v2137
    %3197 = vmatprep.subr.bf16.mxu0 0
    %3198 = vmatpush1.bf16.msra.mxu0 %v2140
    %3199 = vmatprep.subr.bf16.mxu0 0
    %3200 = vmatpush1.bf16.msra.mxu0 %v2143
    %3201 = vmatprep.subr.bf16.mxu0 0
    %3202 = vmatpush1.bf16.msra.mxu0 %v2146
    %3203 = vmatprep.mubr.bf16.mxu0 %v609
    %3204 = vmatmul.mubr.bf16.gmra.mrb[0].mxu0 %v607
    %v3205 = vpop.f32.mrb[0].mxu0
    %v3206 = vadd.f32 %v3166, %v3205
    %v3207 = vpop.f32.mrb[0].mxu0
    %v3208 = vpop.f32.mrb[0].mxu0
    %v3209 = vpop.f32.mrb[0].mxu0
    %3210 = vdwg.mxu0
    %3211 = vmatprep.subr.bf16.mxu0 0
    %3212 = vmatpush1.bf16.msra.mxu0 %v2149
    %3213 = vmatprep.subr.bf16.mxu0 0
    %3214 = vmatpush1.bf16.msra.mxu0 %v2152
    %3215 = vmatprep.subr.bf16.mxu0 0
    %3216 = vmatpush1.bf16.msra.mxu0 %v2155
    %3217 = vmatprep.subr.bf16.mxu0 0
    %3218 = vmatpush1.bf16.msra.mxu0 %v2158
    %3219 = vmatprep.subr.bf16.mxu0 0
    %3220 = vmatpush1.bf16.msra.mxu0 %v2161
    %3221 = vmatprep.subr.bf16.mxu0 0
    %3222 = vmatpush1.bf16.msra.mxu0 %v2164
    %3223 = vmatprep.subr.bf16.mxu0 0
    %3224 = vmatpush1.bf16.msra.mxu0 %v2167
    %3225 = vmatprep.subr.bf16.mxu0 0
    %3226 = vmatpush1.bf16.msra.mxu0 %v2170
    %3227 = vmatprep.subr.bf16.mxu0 0
    %3228 = vmatpush1.bf16.msra.mxu0 %v2173
    %3229 = vmatprep.subr.bf16.mxu0 0
    %3230 = vmatpush1.bf16.msra.mxu0 %v2176
    %3231 = vmatprep.subr.bf16.mxu0 0
    %3232 = vmatpush1.bf16.msra.mxu0 %v2179
    %3233 = vmatprep.subr.bf16.mxu0 0
    %3234 = vmatpush1.bf16.msra.mxu0 %v2182
    %3235 = vmatprep.subr.bf16.mxu0 0
    %3236 = vmatpush1.bf16.msra.mxu0 %v2185
    %3237 = vmatprep.subr.bf16.mxu0 0
    %3238 = vmatpush1.bf16.msra.mxu0 %v2188
    %3239 = vmatprep.subr.bf16.mxu0 0
    %3240 = vmatpush1.bf16.msra.mxu0 %v2191
    %3241 = vmatprep.subr.bf16.mxu0 0
    %3242 = vmatpush1.bf16.msra.mxu0 %v2194
    %3243 = vmatprep.mubr.bf16.mxu0 %v647
    %3244 = vmatmul.mubr.bf16.gmra.mrb[0].mxu0 %v633
    %v3245 = vpop.f32.mrb[0].mxu0
    %v3246 = vadd.f32 %v3206, %v3245
    %v3247 = vpop.f32.mrb[0].mxu0
    %v3248 = vpop.f32.mrb[0].mxu0
    %v3249 = vpop.f32.mrb[0].mxu0
    %3250 = vdwg.mxu0
    %3251 = vmatprep.subr.bf16.mxu0 0
    %3252 = vmatpush1.bf16.msra.mxu0 %v2197
    %3253 = vmatprep.subr.bf16.mxu0 0
    %3254 = vmatpush1.bf16.msra.mxu0 %v2200
    %3255 = vmatprep.subr.bf16.mxu0 0
    %3256 = vmatpush1.bf16.msra.mxu0 %v2203
    %3257 = vmatprep.subr.bf16.mxu0 0
    %3258 = vmatpush1.bf16.msra.mxu0 %v2206
    %3259 = vmatprep.subr.bf16.mxu0 0
    %3260 = vmatpush1.bf16.msra.mxu0 %v2209
    %3261 = vmatprep.subr.bf16.mxu0 0
    %3262 = vmatpush1.bf16.msra.mxu0 %v2212
    %3263 = vmatprep.subr.bf16.mxu0 0
    %3264 = vmatpush1.bf16.msra.mxu0 %v2215
    %3265 = vmatprep.subr.bf16.mxu0 0
    %3266 = vmatpush1.bf16.msra.mxu0 %v2218
    %3267 = vmatprep.subr.bf16.mxu0 0
    %3268 = vmatpush1.bf16.msra.mxu0 %v2221
    %3269 = vmatprep.subr.bf16.mxu0 0
    %3270 = vmatpush1.bf16.msra.mxu0 %v2224
    %3271 = vmatprep.subr.bf16.mxu0 0
    %3272 = vmatpush1.bf16.msra.mxu0 %v2227
    %3273 = vmatprep.subr.bf16.mxu0 0
    %3274 = vmatpush1.bf16.msra.mxu0 %v2230
    %3275 = vmatprep.subr.bf16.mxu0 0
    %3276 = vmatpush1.bf16.msra.mxu0 %v2233
    %3277 = vmatprep.subr.bf16.mxu0 0
    %3278 = vmatpush1.bf16.msra.mxu0 %v2236
    %3279 = vmatprep.subr.bf16.mxu0 0
    %3280 = vmatpush1.bf16.msra.mxu0 %v2239
    %3281 = vmatprep.subr.bf16.mxu0 0
    %3282 = vmatpush1.bf16.msra.mxu0 %v2242
    %3283 = vmatprep.mubr.bf16.mxu0 %v657
    %3284 = vmatmul.mubr.bf16.gmra.mrb[0].mxu0 %v655
    %v3285 = vpop.f32.mrb[0].mxu0
    %v3286 = vadd.f32 %v3246, %v3285
    %v3287 = vpop.f32.mrb[0].mxu0
    %v3288 = vpop.f32.mrb[0].mxu0
    %v3289 = vpop.f32.mrb[0].mxu0
    %3290 = vdwg.mxu0
    %3291 = vmatprep.subr.bf16.mxu0 0
    %3292 = vmatpush1.bf16.msra.mxu0 %v2245
    %3293 = vmatprep.subr.bf16.mxu0 0
    %3294 = vmatpush1.bf16.msra.mxu0 %v2248
    %3295 = vmatprep.subr.bf16.mxu0 0
    %3296 = vmatpush1.bf16.msra.mxu0 %v2251
    %3297 = vmatprep.subr.bf16.mxu0 0
    %3298 = vmatpush1.bf16.msra.mxu0 %v2254
    %3299 = vmatprep.subr.bf16.mxu0 0
    %3300 = vmatpush1.bf16.msra.mxu0 %v2257
    %3301 = vmatprep.subr.bf16.mxu0 0
    %3302 = vmatpush1.bf16.msra.mxu0 %v2260
    %3303 = vmatprep.subr.bf16.mxu0 0
    %3304 = vmatpush1.bf16.msra.mxu0 %v2263
    %3305 = vmatprep.subr.bf16.mxu0 0
    %3306 = vmatpush1.bf16.msra.mxu0 %v2266
    %3307 = vmatprep.subr.bf16.mxu0 0
    %3308 = vmatpush1.bf16.msra.mxu0 %v2269
    %3309 = vmatprep.subr.bf16.mxu0 0
    %3310 = vmatpush1.bf16.msra.mxu0 %v2272
    %3311 = vmatprep.subr.bf16.mxu0 0
    %3312 = vmatpush1.bf16.msra.mxu0 %v2275
    %3313 = vmatprep.subr.bf16.mxu0 0
    %3314 = vmatpush1.bf16.msra.mxu0 %v2278
    %3315 = vmatprep.subr.bf16.mxu0 0
    %3316 = vmatpush1.bf16.msra.mxu0 %v2281
    %3317 = vmatprep.subr.bf16.mxu0 0
    %3318 = vmatpush1.bf16.msra.mxu0 %v2284
    %3319 = vmatprep.subr.bf16.mxu0 0
    %3320 = vmatpush1.bf16.msra.mxu0 %v2287
    %3321 = vmatprep.subr.bf16.mxu0 0
    %3322 = vmatpush1.bf16.msra.mxu0 %v2290
    %3323 = vmatprep.mubr.bf16.mxu0 %v654
    %3324 = vmatmul.mubr.bf16.gmra.mrb[0].mxu0 %v640
    %v3325 = vpop.f32.mrb[0].mxu0
    %v3326 = vadd.f32 %v3286, %v3325
    %v3327 = vpop.f32.mrb[0].mxu0
    %v3328 = vpop.f32.mrb[0].mxu0
    %v3329 = vpop.f32.mrb[0].mxu0
    %3330 = vdwg.mxu0
    %3331 = vmatprep.subr.bf16.mxu0 0
    %3332 = vmatpush1.bf16.msra.mxu0 %v2293
    %3333 = vmatprep.subr.bf16.mxu0 0
    %3334 = vmatpush1.bf16.msra.mxu0 %v2296
    %3335 = vmatprep.subr.bf16.mxu0 0
    %3336 = vmatpush1.bf16.msra.mxu0 %v2299
    %3337 = vmatprep.subr.bf16.mxu0 0
    %3338 = vmatpush1.bf16.msra.mxu0 %v2302
    %3339 = vmatprep.subr.bf16.mxu0 0
    %3340 = vmatpush1.bf16.msra.mxu0 %v2305
    %3341 = vmatprep.subr.bf16.mxu0 0
    %3342 = vmatpush1.bf16.msra.mxu0 %v2308
    %3343 = vmatprep.subr.bf16.mxu0 0
    %3344 = vmatpush1.bf16.msra.mxu0 %v2311
    %3345 = vmatprep.subr.bf16.mxu0 0
    %3346 = vmatpush1.bf16.msra.mxu0 %v2314
    %3347 = vmatprep.subr.bf16.mxu0 0
    %3348 = vmatpush1.bf16.msra.mxu0 %v2317
    %3349 = vmatprep.subr.bf16.mxu0 0
    %3350 = vmatpush1.bf16.msra.mxu0 %v2320
    %3351 = vmatprep.subr.bf16.mxu0 0
    %3352 = vmatpush1.bf16.msra.mxu0 %v2323
    %3353 = vmatprep.subr.bf16.mxu0 0
    %3354 = vmatpush1.bf16.msra.mxu0 %v2326
    %3355 = vmatprep.subr.bf16.mxu0 0
    %3356 = vmatpush1.bf16.msra.mxu0 %v2329
    %3357 = vmatprep.subr.bf16.mxu0 0
    %3358 = vmatpush1.bf16.msra.mxu0 %v2332
    %3359 = vmatprep.subr.bf16.mxu0 0
    %3360 = vmatpush1.bf16.msra.mxu0 %v2335
    %3361 = vmatprep.subr.bf16.mxu0 0
    %3362 = vmatpush1.bf16.msra.mxu0 %v2338
    %3363 = vmatprep.mubr.bf16.mxu0 %v658
    %3364 = vmatmul.mubr.bf16.gmra.mrb[0].mxu0 %v656
    %v3365 = vpop.f32.mrb[0].mxu0
    %v3366 = vadd.f32 %v3326, %v3365
    %v3367 = vpop.f32.mrb[0].mxu0
    %v3368 = vpop.f32.mrb[0].mxu0
    %v3369 = vpop.f32.mrb[0].mxu0
    %3370 = vdwg.mxu0
    %v3371 = vmax.f32 %v3045, 0.0
    %v3372 = vmax.f32 %v3047, 0.0
    %v3373 = vmax.f32 %v3366, 0.0
    %v3374 = vpack.c.bf16 %v3371, %v3371
    %v3375 = vpack.c.bf16 %v3372, %v3372
    %v3376 = vpack.c.bf16 %v3373, %v3373
    %v3377 = vld [vmem:[%s3] sm:$0xff]
    %v3378 = vld [vmem:[%s3 + $0x8] sm:$0xff]
    %v3379 = vld [vmem:[%s3 + $0x10] sm:$0xff]
    %v3380 = vld [vmem:[%s3 + $0x18] sm:$0xff]
    %v3381 = vld [vmem:[%s3 + $0x20] sm:$0xff]
    %v3382 = vld [vmem:[%s3 + $0x28] sm:$0xff]
    %v3383 = vld [vmem:[%s3 + $0x30] sm:$0xff]
    %v3384 = vld [vmem:[%s3 + $0x38] sm:$0xff]
    %v3385 = vld [vmem:[%s3 + $0x40] sm:$0xff]
    %v3386 = vld [vmem:[%s3 + $0x48] sm:$0xff]
    %v3387 = vld [vmem:[%s3 + $0x50] sm:$0xff]
    %v3388 = vld [vmem:[%s3 + $0x58] sm:$0xff]
    %v3389 = vld [vmem:[%s3 + $0x60] sm:$0xff]
    %v3390 = vld [vmem:[%s3 + $0x68] sm:$0xff]
    %v3391 = vld [vmem:[%s3 + $0x70] sm:$0xff]
    %v3392 = vld [vmem:[%s3 + $0x78] sm:$0xff]
    %v3393 = vld [vmem:[%s3 + $0x80] sm:$0xff]
    %v3394 = vld [vmem:[%s3 + $0x88] sm:$0xff]
    %v3395 = vld [vmem:[%s3 + $0x90] sm:$0xff]
    %v3396 = vld [vmem:[%s3 + $0x98] sm:$0xff]
    %v3397 = vld [vmem:[%s3 + $0xa0] sm:$0xff]
    %v3398 = vld [vmem:[%s3 + $0xa8] sm:$0xff]
    %v3399 = vld [vmem:[%s3 + $0xb0] sm:$0xff]
    %v3400 = vld [vmem:[%s3 + $0xb8] sm:$0xff]
    %v3401 = vld [vmem:[%s3 + $0xc0] sm:$0xff]
    %v3402 = vld [vmem:[%s3 + $0xc8] sm:$0xff]
    %v3403 = vld [vmem:[%s3 + $0xd0] sm:$0xff]
    %v3404 = vld [vmem:[%s3 + $0xd8] sm:$0xff]
    %v3405 = vld [vmem:[%s3 + $0xe0] sm:$0xff]
    %v3406 = vld [vmem:[%s3 + $0xe8] sm:$0xff]
    %v3407 = vld [vmem:[%s3 + $0xf0] sm:$0xff]
    %v3408 = vld [vmem:[%s3 + $0xf8] sm:$0xff]
    %v3409 = vld [vmem:[%s3 + $0x100] sm:$0xff]
    %v3410 = vld [vmem:[%s3 + $0x108] sm:$0xff]
    %v3411 = vld [vmem:[%s3 + $0x110] sm:$0xff]
    %v3412 = vld [vmem:[%s3 + $0x118] sm:$0xff]
    %v3413 = vld [vmem:[%s3 + $0x120] sm:$0xff]
    %v3414 = vld [vmem:[%s3 + $0x128] sm:$0xff]
    %v3415 = vld [vmem:[%s3 + $0x130] sm:$0xff]
    %v3416 = vld [vmem:[%s3 + $0x138] sm:$0xff]
    %v3417 = vld [vmem:[%s3 + $0x140] sm:$0xff]
    %v3418 = vld [vmem:[%s3 + $0x148] sm:$0xff]
    %v3419 = vld [vmem:[%s3 + $0x150] sm:$0xff]
    %v3420 = vld [vmem:[%s3 + $0x158] sm:$0xff]
    %v3421 = vld [vmem:[%s3 + $0x160] sm:$0xff]
    %v3422 = vld [vmem:[%s4] sm:$0x3]
    %v3424 = vlaneseq
    %v3425 = vshrl.u32 %v3424, 7
    %v3426 = vsub.s32 0, %v3425
    %v3427 = vrot.slane %v3422, %v3426
    %v3428 = vlaneseq
    %v3429 = vshrl.u32 %v3428, 7
    %v3430 = vsub.s32 1, %v3429
    %v3431 = vrot.slane %v3422, %v3430
    %v3479 = vunpack.c.l.b16 %v3377
    %v3480 = vunpack.c.h.b16 %v3377
    %v3481 = vunpack.c.l.b16 %v3378
    %v3482 = vunpack.c.h.b16 %v3378
    %v3483 = vunpack.c.l.b16 %v3379
    %v3484 = vunpack.c.h.b16 %v3379
    %v3485 = vunpack.c.l.b16 %v3380
    %v3486 = vunpack.c.h.b16 %v3380
    %v3487 = vunpack.c.l.b16 %v3381
    %v3488 = vunpack.c.h.b16 %v3381
    %v3489 = vunpack.c.l.b16 %v3382
    %v3490 = vunpack.c.h.b16 %v3382
    %v3491 = vunpack.c.l.b16 %v3383
    %v3492 = vunpack.c.h.b16 %v3383
    %v3493 = vunpack.c.l.b16 %v3384
    %v3494 = vunpack.c.h.b16 %v3384
    %v3495 = vunpack.c.l.b16 %v3385
    %v3496 = vunpack.c.h.b16 %v3385
    %v3497 = vunpack.c.l.b16 %v3386
    %v3498 = vunpack.c.h.b16 %v3386
    %v3499 = vunpack.c.l.b16 %v3387
    %v3500 = vunpack.c.h.b16 %v3387
    %v3501 = vunpack.c.l.b16 %v3388
    %v3502 = vunpack.c.h.b16 %v3388
    %v3503 = vunpack.c.l.b16 %v3389
    %v3504 = vunpack.c.h.b16 %v3389
    %v3505 = vunpack.c.l.b16 %v3390
    %v3506 = vunpack.c.h.b16 %v3390
    %v3507 = vunpack.c.l.b16 %v3391
    %v3508 = vunpack.c.h.b16 %v3391
    %v3509 = vunpack.c.l.b16 %v3392
    %v3510 = vunpack.c.h.b16 %v3392
    %v3511 = vunpack.c.l.b16 %v3393
    %v3512 = vunpack.c.h.b16 %v3393
    %v3513 = vunpack.c.l.b16 %v3394
    %v3514 = vunpack.c.h.b16 %v3394
    %v3515 = vunpack.c.l.b16 %v3395
    %v3516 = vunpack.c.h.b16 %v3395
    %v3517 = vunpack.c.l.b16 %v3396
    %v3518 = vunpack.c.h.b16 %v3396
    %v3519 = vunpack.c.l.b16 %v3397
    %v3520 = vunpack.c.h.b16 %v3397
    %v3521 = vunpack.c.l.b16 %v3398
    %v3522 = vunpack.c.h.b16 %v3398
    %v3523 = vunpack.c.l.b16 %v3399
    %v3524 = vunpack.c.h.b16 %v3399
    %v3525 = vunpack.c.l.b16 %v3400
    %v3526 = vunpack.c.h.b16 %v3400
    %v3527 = vunpack.c.l.b16 %v3401
    %v3528 = vunpack.c.h.b16 %v3401
    %v3529 = vunpack.c.l.b16 %v3402
    %v3530 = vunpack.c.h.b16 %v3402
    %v3531 = vunpack.c.l.b16 %v3403
    %v3532 = vunpack.c.h.b16 %v3403
    %v3533 = vunpack.c.l.b16 %v3404
    %v3534 = vunpack.c.h.b16 %v3404
    %v3535 = vunpack.c.l.b16 %v3405
    %v3536 = vunpack.c.h.b16 %v3405
    %v3537 = vunpack.c.l.b16 %v3406
    %v3538 = vunpack.c.h.b16 %v3406
    %v3539 = vunpack.c.l.b16 %v3407
    %v3540 = vunpack.c.h.b16 %v3407
    %v3541 = vunpack.c.l.b16 %v3408
    %v3542 = vunpack.c.h.b16 %v3408
    %v3543 = vunpack.c.l.b16 %v3409
    %v3544 = vunpack.c.h.b16 %v3409
    %v3545 = vunpack.c.l.b16 %v3410
    %v3546 = vunpack.c.h.b16 %v3410
    %v3547 = vunpack.c.l.b16 %v3411
    %v3548 = vunpack.c.h.b16 %v3411
    %v3549 = vunpack.c.l.b16 %v3412
    %v3550 = vunpack.c.h.b16 %v3412
    %v3551 = vunpack.c.l.b16 %v3413
    %v3552 = vunpack.c.h.b16 %v3413
    %v3553 = vunpack.c.l.b16 %v3414
    %v3554 = vunpack.c.h.b16 %v3414
    %v3555 = vunpack.c.l.b16 %v3415
    %v3556 = vunpack.c.h.b16 %v3415
    %v3557 = vunpack.c.l.b16 %v3416
    %v3558 = vunpack.c.h.b16 %v3416
    %v3559 = vunpack.c.l.b16 %v3417
    %v3560 = vunpack.c.h.b16 %v3417
    %v3561 = vunpack.c.l.b16 %v3418
    %v3562 = vunpack.c.h.b16 %v3418
    %v3563 = vunpack.c.l.b16 %v3419
    %v3564 = vunpack.c.h.b16 %v3419
    %v3565 = vunpack.c.l.b16 %v3420
    %v3566 = vunpack.c.h.b16 %v3420
    %v3567 = vunpack.c.l.b16 %v3421
    %v3568 = vunpack.c.h.b16 %v3421
    %v3569 = vpack.c.b16 %v3481, %v3479
    %v3570 = vpack.c.b16 %v3482, %v3480
    %v3571 = vpack.c.b16 %v3485, %v3483
    %v3572 = vpack.c.b16 %v3486, %v3484
    %v3573 = vpack.c.b16 %v3489, %v3487
    %v3574 = vpack.c.b16 %v3490, %v3488
    %v3575 = vpack.c.b16 %v3493, %v3491
    %v3576 = vpack.c.b16 %v3494, %v3492
    %v3577 = vpack.c.b16 %v3497, %v3495
    %v3578 = vpack.c.b16 %v3498, %v3496
    %v3579 = vpack.c.b16 %v3501, %v3499
    %v3580 = vpack.c.b16 %v3502, %v3500
    %v3581 = vpack.c.b16 %v3505, %v3503
    %v3582 = vpack.c.b16 %v3506, %v3504
    %v3583 = vpack.c.b16 %v3509, %v3507
    %v3584 = vpack.c.b16 %v3510, %v3508
    %v3585 = vpack.c.b16 %v3513, %v3511
    %v3586 = vpack.c.b16 %v3514, %v3512
    %v3587 = vpack.c.b16 %v3517, %v3515
    %v3588 = vpack.c.b16 %v3518, %v3516
    %v3589 = vpack.c.b16 %v3521, %v3519
    %v3590 = vpack.c.b16 %v3522, %v3520
    %v3591 = vpack.c.b16 %v3525, %v3523
    %v3592 = vpack.c.b16 %v3526, %v3524
    %v3593 = vpack.c.b16 %v3529, %v3527
    %v3594 = vpack.c.b16 %v3530, %v3528
    %v3595 = vpack.c.b16 %v3533, %v3531
    %v3596 = vpack.c.b16 %v3534, %v3532
    %v3597 = vpack.c.b16 %v3537, %v3535
    %v3598 = vpack.c.b16 %v3538, %v3536
    %v3599 = vpack.c.b16 %v3541, %v3539
    %v3600 = vpack.c.b16 %v3542, %v3540
    %v3601 = vpack.c.b16 %v3545, %v3543
    %v3602 = vpack.c.b16 %v3546, %v3544
    %v3603 = vpack.c.b16 %v3549, %v3547
    %v3604 = vpack.c.b16 %v3550, %v3548
    %v3605 = vpack.c.b16 %v3553, %v3551
    %v3606 = vpack.c.b16 %v3554, %v3552
    %v3607 = vpack.c.b16 %v3557, %v3555
    %v3608 = vpack.c.b16 %v3558, %v3556
    %v3609 = vpack.c.b16 %v3561, %v3559
    %v3610 = vpack.c.b16 %v3562, %v3560
    %v3611 = vpack.c.b16 %v3565, %v3563
    %v3612 = vpack.c.b16 %v3566, %v3564
    %v3613 = vpack.c.b16 %v3567, %v3567
    %v3614 = vpack.c.b16 %v3568, %v3568
    %vm3659 = vcmask 850944
    %v3661 = vsel %vm3659, %v3376, 0
    %vm3663 = vcmask 1043456
    %v3665 = vsel %vm3663, %v3613, 0
    %v3668 = vsel %vm3663, %v3614, 0
    %3670 = vmatprep.subr.bf16.mxu0 %v3570
    %3671 = vmatpush1.bf16.msra.mxu0 %v3569
    %3672 = vmatprep.subr.bf16.mxu0 %v3572
    %3673 = vmatpush1.bf16.msra.mxu0 %v3571
    %3674 = vmatprep.subr.bf16.mxu0 %v3574
    %3675 = vmatpush1.bf16.msra.mxu0 %v3573
    %3676 = vmatprep.subr.bf16.mxu0 %v3576
    %3677 = vmatpush1.bf16.msra.mxu0 %v3575
    %3678 = vmatprep.subr.bf16.mxu0 %v3578
    %3679 = vmatpush1.bf16.msra.mxu0 %v3577
    %3680 = vmatprep.subr.bf16.mxu0 %v3580
    %3681 = vmatpush1.bf16.msra.mxu0 %v3579
    %3682 = vmatprep.subr.bf16.mxu0 %v3582
    %3683 = vmatpush1.bf16.msra.mxu0 %v3581
    %3684 = vmatprep.subr.bf16.mxu0 %v3584
    %3685 = vmatpush1.bf16.msra.mxu0 %v3583
    %3686 = vmatprep.subr.bf16.mxu0 %v3586
    %3687 = vmatpush1.bf16.msra.mxu0 %v3585
    %3688 = vmatprep.subr.bf16.mxu0 %v3588
    %3689 = vmatpush1.bf16.msra.mxu0 %v3587
    %3690 = vmatprep.subr.bf16.mxu0 %v3590
    %3691 = vmatpush1.bf16.msra.mxu0 %v3589
    %3692 = vmatprep.subr.bf16.mxu0 %v3592
    %3693 = vmatpush1.bf16.msra.mxu0 %v3591
    %3694 = vmatprep.subr.bf16.mxu0 %v3594
    %3695 = vmatpush1.bf16.msra.mxu0 %v3593
    %3696 = vmatprep.subr.bf16.mxu0 %v3596
    %3697 = vmatpush1.bf16.msra.mxu0 %v3595
    %3698 = vmatprep.subr.bf16.mxu0 %v3598
    %3699 = vmatpush1.bf16.msra.mxu0 %v3597
    %3700 = vmatprep.subr.bf16.mxu0 %v3600
    %3701 = vmatpush1.bf16.msra.mxu0 %v3599
    %3702 = vmatprep.mubr.bf16.mxu0 %v3375
    %3703 = vmatmul.mubr.bf16.gmra.mrb[0].mxu0 %v3374
    %v3704 = vpop.f32.mrb[0].mxu0
    %v3705 = vadd.f32 %v3427, %v3704
    %v3706 = vpop.f32.mrb[0].mxu0
    %v3707 = vadd.f32 %v3431, %v3706
    %v3708 = vpop.f32.mrb[0].mxu0
    %v3709 = vpop.f32.mrb[0].mxu0
    %3710 = vdwg.mxu0
    %3711 = vmatprep.subr.bf16.mxu0 %v3602
    %3712 = vmatpush1.bf16.msra.mxu0 %v3601
    %3713 = vmatprep.subr.bf16.mxu0 %v3604
    %3714 = vmatpush1.bf16.msra.mxu0 %v3603
    %3715 = vmatprep.subr.bf16.mxu0 %v3606
    %3716 = vmatpush1.bf16.msra.mxu0 %v3605
    %3717 = vmatprep.subr.bf16.mxu0 %v3608
    %3718 = vmatpush1.bf16.msra.mxu0 %v3607
    %3719 = vmatprep.subr.bf16.mxu0 %v3610
    %3720 = vmatpush1.bf16.msra.mxu0 %v3609
    %3721 = vmatprep.subr.bf16.mxu0 %v3612
    %3722 = vmatpush1.bf16.msra.mxu0 %v3611
    %3723 = vmatprep.subr.bf16.mxu0 %v3668
    %3724 = vmatpush1.bf16.msra.mxu0 %v3665
    %3725 = vmatprep.subr.bf16.mxu0 0
    %3726 = vmatpush1.bf16.msra.mxu0 0
    %3727 = vmatprep.subr.bf16.mxu0 0
    %3728 = vmatpush1.bf16.msra.mxu0 0
    %3729 = vmatprep.subr.bf16.mxu0 0
    %3730 = vmatpush1.bf16.msra.mxu0 0
    %3731 = vmatprep.subr.bf16.mxu0 0
    %3732 = vmatpush1.bf16.msra.mxu0 0
    %3733 = vmatprep.subr.bf16.mxu0 0
    %3734 = vmatpush1.bf16.msra.mxu0 0
    %3735 = vmatprep.subr.bf16.mxu0 0
    %3736 = vmatpush1.bf16.msra.mxu0 0
    %3737 = vmatprep.subr.bf16.mxu0 0
    %3738 = vmatpush1.bf16.msra.mxu0 0
    %3739 = vmatprep.subr.bf16.mxu0 0
    %3740 = vmatpush1.bf16.msra.mxu0 0
    %3741 = vmatprep.subr.bf16.mxu0 0
    %3742 = vmatpush1.bf16.msra.mxu0 0
    %3743 = vmatprep.mubr.bf16.mxu0 0
    %3744 = vmatmul.mubr.bf16.gmra.mrb[0].mxu0 %v3661
    %v3745 = vpop.f32.mrb[0].mxu0
    %v3746 = vadd.f32 %v3705, %v3745
    %v3747 = vpop.f32.mrb[0].mxu0
    %v3748 = vadd.f32 %v3707, %v3747
    %v3749 = vpop.f32.mrb[0].mxu0
    %v3750 = vpop.f32.mrb[0].mxu0
    %3751 = vdwg.mxu0
    %v3752 = vpack.c.bf16 %v3746, %v3746
    %v3753 = vpack.c.bf16 %v3748, %v3748
    %v3754 = vld [vmem:[%s5] sm:$0xf]
    %v3755 = vld [vmem:[%s5 + $0x4] sm:$0xf]
    %v3756 = vld [vmem:[%s5 + $0x8] sm:$0xf]
    %v3757 = vld [vmem:[%s5 + $0xc] sm:$0xf]
    %v3758 = vld [vmem:[%s5 + $0x10] sm:$0xf]
    %v3759 = vld [vmem:[%s5 + $0x14] sm:$0xf]
    %v3760 = vld [vmem:[%s5 + $0x18] sm:$0xf]
    %v3761 = vld [vmem:[%s5 + $0x1c] sm:$0xf]
    %v3762 = vld [vmem:[%s5 + $0x20] sm:$0xf]
    %v3763 = vld [vmem:[%s5 + $0x24] sm:$0xf]
    %v3764 = vld [vmem:[%s5 + $0x28] sm:$0xf]
    %v3765 = vld [vmem:[%s5 + $0x2c] sm:$0xf]
    %v3766 = vld [vmem:[%s5 + $0x30] sm:$0xf]
    %v3767 = vld [vmem:[%s5 + $0x34] sm:$0xf]
    %v3768 = vld [vmem:[%s5 + $0x38] sm:$0xf]
    %v3769 = vld [vmem:[%s5 + $0x3c] sm:$0xf]
    %v3770 = vld [vmem:[%s5 + $0x40] sm:$0xf]
    %v3771 = vld [vmem:[%s5 + $0x44] sm:$0xf]
    %v3772 = vld [vmem:[%s5 + $0x48] sm:$0xf]
    %v3773 = vld [vmem:[%s5 + $0x4c] sm:$0xf]
    %v3774 = vld [vmem:[%s5 + $0x50] sm:$0xf]
    %v3775 = vld [vmem:[%s5 + $0x54] sm:$0xf]
    %v3776 = vld [vmem:[%s5 + $0x58] sm:$0x3]
    %v3777 = vld [vmem:[%s6] sm:$0x1]
    %v3779 = vlaneseq
    %v3780 = vshrl.u32 %v3779, 7
    %v3781 = vsub.s32 0, %v3780
    %v3782 = vrot.slane %v3777, %v3781
    %v3807 = vunpack.c.l.b16 %v3754
    %v3808 = vunpack.c.l.b16 %v3755
    %v3809 = vunpack.c.l.b16 %v3756
    %v3810 = vunpack.c.l.b16 %v3757
    %v3811 = vunpack.c.l.b16 %v3758
    %v3812 = vunpack.c.l.b16 %v3759
    %v3813 = vunpack.c.l.b16 %v3760
    %v3814 = vunpack.c.l.b16 %v3761
    %v3815 = vunpack.c.l.b16 %v3762
    %v3816 = vunpack.c.l.b16 %v3763
    %v3817 = vunpack.c.l.b16 %v3764
    %v3818 = vunpack.c.l.b16 %v3765
    %v3819 = vunpack.c.l.b16 %v3766
    %v3820 = vunpack.c.l.b16 %v3767
    %v3821 = vunpack.c.l.b16 %v3768
    %v3822 = vunpack.c.l.b16 %v3769
    %v3823 = vunpack.c.l.b16 %v3770
    %v3824 = vunpack.c.l.b16 %v3771
    %v3825 = vunpack.c.l.b16 %v3772
    %v3826 = vunpack.c.l.b16 %v3773
    %v3827 = vunpack.c.l.b16 %v3774
    %v3828 = vunpack.c.l.b16 %v3775
    %v3829 = vunpack.c.l.b16 %v3776
    %v3830 = vpack.c.b16 %v3808, %v3807
    %v3831 = vpack.c.b16 %v3810, %v3809
    %v3832 = vpack.c.b16 %v3812, %v3811
    %v3833 = vpack.c.b16 %v3814, %v3813
    %v3834 = vpack.c.b16 %v3816, %v3815
    %v3835 = vpack.c.b16 %v3818, %v3817
    %v3836 = vpack.c.b16 %v3820, %v3819
    %v3837 = vpack.c.b16 %v3822, %v3821
    %v3838 = vpack.c.b16 %v3824, %v3823
    %v3839 = vpack.c.b16 %v3826, %v3825
    %v3840 = vpack.c.b16 %v3828, %v3827
    %v3841 = vpack.c.b16 %v3829, %v3829
    %vm3853 = vcmask 424960
    %v3855 = vsel %vm3853, %v3753, 0
    %vm3857 = vcmask 1041408
    %v3859 = vsel %vm3857, %v3841, 0
    %3861 = vmatprep.subr.bf16.mxu0 0
    %3862 = vmatpush1.bf16.msra.mxu0 %v3830
    %3863 = vmatprep.subr.bf16.mxu0 0
    %3864 = vmatpush1.bf16.msra.mxu0 %v3831
    %3865 = vmatprep.subr.bf16.mxu0 0
    %3866 = vmatpush1.bf16.msra.mxu0 %v3832
    %3867 = vmatprep.subr.bf16.mxu0 0
    %3868 = vmatpush1.bf16.msra.mxu0 %v3833
    %3869 = vmatprep.subr.bf16.mxu0 0
    %3870 = vmatpush1.bf16.msra.mxu0 %v3834
    %3871 = vmatprep.subr.bf16.mxu0 0
    %3872 = vmatpush1.bf16.msra.mxu0 %v3835
    %3873 = vmatprep.subr.bf16.mxu0 0
    %3874 = vmatpush1.bf16.msra.mxu0 %v3836
    %3875 = vmatprep.subr.bf16.mxu0 0
    %3876 = vmatpush1.bf16.msra.mxu0 %v3837
    %3877 = vmatprep.subr.bf16.mxu0 0
    %3878 = vmatpush1.bf16.msra.mxu0 %v3838
    %3879 = vmatprep.subr.bf16.mxu0 0
    %3880 = vmatpush1.bf16.msra.mxu0 %v3839
    %3881 = vmatprep.subr.bf16.mxu0 0
    %3882 = vmatpush1.bf16.msra.mxu0 %v3840
    %3883 = vmatprep.subr.bf16.mxu0 0
    %3884 = vmatpush1.bf16.msra.mxu0 %v3859
    %3885 = vmatprep.subr.bf16.mxu0 0
    %3886 = vmatpush1.bf16.msra.mxu0 0
    %3887 = vmatprep.subr.bf16.mxu0 0
    %3888 = vmatpush1.bf16.msra.mxu0 0
    %3889 = vmatprep.subr.bf16.mxu0 0
    %3890 = vmatpush1.bf16.msra.mxu0 0
    %3891 = vmatprep.subr.bf16.mxu0 0
    %3892 = vmatpush1.bf16.msra.mxu0 0
    %3893 = vmatprep.mubr.bf16.mxu0 %v3855
    %3894 = vmatmul.mubr.bf16.gmra.mrb[0].mxu0 %v3752
    %v3895 = vpop.f32.mrb[0].mxu0
    %v3896 = vadd.f32 %v3782, %v3895
    %v3897 = vpop.f32.mrb[0].mxu0
    %v3898 = vpop.f32.mrb[0].mxu0
    %v3899 = vpop.f32.mrb[0].mxu0
    %3900 = vdwg.mxu0
    %vm3901 = vcmask 74752
    %v3902 = vsel %vm3901, %v3896, -inf
    %3903 = vmax.xlane.f32.xlu0 %v3902
    %v3904 = vpop.xlane.xlu0 %3903
    %v3905 = vsub.f32 %v3896, %v3904
    %v3906 = vmul.f32 %v3905, 1.442695
    %v3907 = vpow.pop %v3906
    %v3908 = vsel %vm3901, %v3907, 0.0
    %3909 = vadd.xlane.f32.xlu0 %v3908
    %v3910 = vpop.xlane.xlu0 %3909
    %v3911 = vlog2.pop %v3910
    %v3912 = vmul.f32 %v3911, 0.6931472
    %v3913 = vsub.f32 %v3905, %v3912
    %3914 = vst.msk [vmem:[#allocation2] sm:$0x3] %vm3901, %v3913
    // Predicated region
    $region30: #{net_forward.5} parent=1 // pred_check
      _
    $region31: #{net_forward.5} parent=1 // pred_check_branch
      %3916 = sbr.rel (0) target = $region33
    $region32: #{net_forward.5} parent=1 // pred_region
      %s3918 = ssub.s32 32, 32
      %3919 = vsyncadd [#allocation3], %s3918
      %s3921 = sshll.u32 [#allocation2], 4
      %s3922 = int_to_ptr.vmem [resolvable:$true] %s3921
      %3924 = dma.vmem_to_hbm [thread:$0]  %s3922, 32, %s7, [#allocation3]
    $region33: #{net_forward.5} parent=1 // pred_fallthru
      _
    // Predicated region
    $region34: #{net_forward.5} parent=1 // pred_check
      _
    $region35: #{net_forward.5} parent=1 // pred_check_branch
      %3926 = sbr.rel (0) target = $region37
    $region36: #{net_forward.5} parent=1 // pred_region
      %3927 = dma.done [#allocation3], 32
    $region37: #{net_forward.5} parent=1 // pred_fallthru
      _
    %3928 = vsyncpa [#allocation3], 1

</llo_original>
